<compile_context>
chip_gen: v7x
topology: tpu7x:2x2x1
jax: 0.10.0
libtpu: 0.0.40
codegen_flags: <defaults>
</compile_context>

<pallas_src>
import functools

import jax
import jax.numpy as jnp
from jax.experimental import pallas as pl
from jax.experimental.pallas import tpu as pltpu


def _pick_q_tile(S):
    if S <= 256:
        return S
    for t in (256, 512, 128, 64, 32, 16, 8):
        if S % t == 0:
            return t
    return S


def _pick_kv_tile(S):
    if S <= 512:
        return S
    for t in (512, 256, 128, 64):
        if S % t == 0:
            return t
    return S


def _pick_ff_chunk(d_ff):
    if d_ff <= 1024:
        return d_ff
    for c in (1024, 512, 256, 128):
        if d_ff % c == 0:
            return c
    return d_ff


def encoder_kernel(x_q_ref, x_kv_ref, bias_ref,
                   wq_ref, bq_ref, wk_ref, bk_ref, wv_ref, bv_ref, wo_ref, bo_ref,
                   g1_ref, be1_ref,
                   w1_ref, b1_ref, w2_ref, b2_ref,
                   g2_ref, be2_ref,
                   o_ref,
                   qh_s, kh_s, vh_s, attn_s,
                   *, n_heads, kv_tile, ff_chunk):
    f32 = jnp.float32
    bf16 = jnp.bfloat16

    tq = x_q_ref.shape[1]
    D = x_q_ref.shape[2]
    S = x_kv_ref.shape[1]
    hd = D // n_heads
    scale = 1.0 / (hd ** 0.5)

    # ---- K/V projection + head split: ONCE per batch element (first q-tile).
    # kh_s / vh_s persist in scratch across the q grid axis ("arbitrary"), so
    # the 2*S*D^2 FLOPs and the full-S head-split stores are not repeated per
    # query tile.
    @pl.when(pl.program_id(1) == 0)
    def _():
        x_kv = x_kv_ref[0]                                      # (S, D) bf16
        k = jnp.dot(x_kv, wk_ref[...], preferred_element_type=f32) + bk_ref[...]
        v = jnp.dot(x_kv, wv_ref[...], preferred_element_type=f32) + bv_ref[...]
        # TODO(synk): replace per-head lane slices with a single pltpu.einshape
        # grouped-dim relayout when available (saves vst slots on v5e).
        for h in range(n_heads):
            lo = h * hd
            kh_s[h] = k[:, lo:lo + hd].astype(bf16)
            vh_s[h] = v[:, lo:lo + hd].astype(bf16)

    # ---- per-query-tile work ----
    x_q = x_q_ref[0]                                            # (tq, D)
    x_q32 = x_q.astype(f32)
    x_q_bf = x_q.astype(bf16)

    q = jnp.dot(x_q_bf, wq_ref[...], preferred_element_type=f32) + bq_ref[...]
    q = q * scale                                               # fold 1/sqrt(hd) into q
    for h in range(n_heads):
        qh_s[h] = q[:, h * hd:(h + 1) * hd].astype(bf16)

    n_kv = S // kv_tile
    if n_kv == 1:
        # single-pass softmax (S small enough to hold scores directly)
        s = jnp.einsum('hqd,hkd->hqk', qh_s[...], kh_s[...],
                       preferred_element_type=f32)
        s = s + bias_ref[0].astype(f32)[None, :, :]             # (H, tq, S)
        m = jnp.max(s, axis=-1, keepdims=True)
        p = jnp.exp(s - m)
        l = jnp.sum(p, axis=-1, keepdims=True)
        o_h = jnp.einsum('hqk,hkd->hqd', p.astype(bf16), vh_s[...],
                         preferred_element_type=f32)
        o_h = o_h * pl.reciprocal(l, approx=True)
    else:
        # Flash-style online softmax over KV tiles: live softmax state is
        # bounded by (H, tq, kv_tile) instead of (H, tq, S).
        def body(c, carry):
            m_i, l_i, acc = carry
            c0 = pl.multiple_of(c * kv_tile, kv_tile)
            k_c = kh_s[:, pl.ds(c0, kv_tile), :]
            v_c = vh_s[:, pl.ds(c0, kv_tile), :]
            b_c = bias_ref[0, :, pl.ds(c0, kv_tile)].astype(f32)
            s = jnp.einsum('hqd,hkd->hqk', qh_s[...], k_c,
                           preferred_element_type=f32) + b_c[None, :, :]
            m_new = jnp.maximum(m_i, jnp.max(s, axis=-1, keepdims=True))
            alpha = jnp.exp(m_i - m_new)
            p = jnp.exp(s - m_new)
            l_new = alpha * l_i + jnp.sum(p, axis=-1, keepdims=True)
            acc_new = alpha * acc + jnp.einsum('hqk,hkd->hqd', p.astype(bf16),
                                               v_c, preferred_element_type=f32)
            return m_new, l_new, acc_new

        carry0 = (jnp.full((n_heads, tq, 1), -jnp.inf, f32),
                  jnp.zeros((n_heads, tq, 1), f32),
                  jnp.zeros((n_heads, tq, hd), f32))
        _, l_f, acc_f = jax.lax.fori_loop(0, n_kv, body, carry0)
        o_h = acc_f * pl.reciprocal(l_f, approx=True)

    # merge heads back to (tq, D), then one dense Wo matmul
    for h in range(n_heads):
        attn_s[:, h * hd:(h + 1) * hd] = o_h[h].astype(bf16)
    attn_out = jnp.dot(attn_s[...], wo_ref[...],
                       preferred_element_type=f32) + bo_ref[...]

    # --- residual + LayerNorm 1 (dropout = identity in eval mode) ---
    # TODO(synk): training-mode dropout would need pltpu.prng_seed/prng_random_bits.
    h1 = x_q32 + attn_out
    mu1 = jnp.mean(h1, axis=-1, keepdims=True)
    var1 = jnp.mean((h1 - mu1) ** 2, axis=-1, keepdims=True)
    h1 = (h1 - mu1) * jax.lax.rsqrt(var1 + 1e-5) * g1_ref[...] + be1_ref[...]

    # --- position-wise feed-forward (bf16 matmuls, chunked over d_ff) ---
    h1_bf = h1.astype(bf16)
    d_ff = w1_ref.shape[-1]
    n_chunks = d_ff // ff_chunk
    if n_chunks == 1:
        f = jnp.dot(h1_bf, w1_ref[...], preferred_element_type=f32) + b1_ref[...]
        f = jnp.maximum(f, 0.0).astype(bf16)
        ff = jnp.dot(f, w2_ref[...], preferred_element_type=f32)
    else:
        # TODO(synk): for very large d_ff on v7x, stream W1/W2 chunks from HBM
        # (extra grid axis or separate pallas_call) instead of VMEM-resident weights.
        def ff_body(c, acc):
            c0 = pl.multiple_of(c * ff_chunk, ff_chunk)
            w1c = w1_ref[:, pl.ds(c0, ff_chunk)]
            b1c = b1_ref[:, pl.ds(c0, ff_chunk)]
            w2c = w2_ref[pl.ds(c0, ff_chunk), :]
            fc = jnp.dot(h1_bf, w1c, preferred_element_type=f32) + b1c
            fc = jnp.maximum(fc, 0.0).astype(bf16)
            return acc + jnp.dot(fc, w2c, preferred_element_type=f32)
        ff = jax.lax.fori_loop(0, n_chunks, ff_body, jnp.zeros((tq, D), f32))
    ff = ff + b2_ref[...]

    # --- residual + LayerNorm 2 ---
    h2 = h1 + ff
    mu2 = jnp.mean(h2, axis=-1, keepdims=True)
    var2 = jnp.mean((h2 - mu2) ** 2, axis=-1, keepdims=True)
    h2 = (h2 - mu2) * jax.lax.rsqrt(var2 + 1e-5) * g2_ref[...] + be2_ref[...]

    o_ref[0] = h2.astype(o_ref.dtype)


def encoder_forward(x, mask, params, *, n_heads, q_tile=None):
    B, S, D = x.shape
    d_ff = params["w1"].shape[1]
    assert D % n_heads == 0, "d_model must be divisible by n_heads"
    hd = D // n_heads

    tq = q_tile if q_tile is not None else _pick_q_tile(S)
    kv_tile = _pick_kv_tile(S)
    ff_chunk = _pick_ff_chunk(d_ff)
    assert S % tq == 0 and S % kv_tile == 0 and d_ff % ff_chunk == 0

    bf16 = jnp.bfloat16
    # bf16 weights: native MXU path + half the weight VMEM/HBM footprint.
    wq, wk, wv, wo = (params[k].astype(bf16) for k in ("wq", "wk", "wv", "wo"))
    w1 = params["w1"].astype(bf16)
    w2 = params["w2"].astype(bf16)
    # K/V path only ever consumed as bf16 -> pre-cast once in the wrapper.
    x_kv = x.astype(bf16)
    # Additive mask bias precomputed once (no in-kernel compare/select), bf16 DMA.
    bias = jnp.where(mask > 0, 0.0, -1e9).astype(bf16)

    def const_spec(shape, single_buffer):
        imap = lambda b, q, n=len(shape): (0,) * n
        if single_buffer:
            # constant-index blocks: one buffer is enough (no re-fetch ever).
            return pl.BlockSpec(shape, imap, pipeline_mode=pl.Buffered(1))
        return pl.BlockSpec(shape, imap)

    def build_in_specs(single_buffer):
        cs = lambda shape: const_spec(shape, single_buffer)
        return [
            pl.BlockSpec((1, tq, D), lambda b, q: (b, q, 0)),   # x (query tile / residual)
            pl.BlockSpec((1, S, D), lambda b, q: (b, 0, 0)),    # x (full seq, bf16, K/V)
            pl.BlockSpec((1, tq, S), lambda b, q: (b, q, 0)),   # additive mask bias
            cs((D, D)), cs((1, D)),                             # Wq, bq
            cs((D, D)), cs((1, D)),                             # Wk, bk
            cs((D, D)), cs((1, D)),                             # Wv, bv
            cs((D, D)), cs((1, D)),                             # Wo, bo
            cs((1, D)), cs((1, D)),                             # ln1 gamma, beta
            cs((D, d_ff)), cs((1, d_ff)),                       # W1, b1
            cs((d_ff, D)), cs((1, D)),                          # W2, b2
            cs((1, D)), cs((1, D)),                             # ln2 gamma, beta
        ]

    out_spec = pl.BlockSpec((1, tq, D), lambda b, q: (b, q, 0))

    scratch_shapes = [
        pltpu.VMEM((n_heads, tq, hd), bf16),   # q heads (per q-tile)
        pltpu.VMEM((n_heads, S, hd), bf16),    # cached K heads (per batch element)
        pltpu.VMEM((n_heads, S, hd), bf16),    # cached V heads (per batch element)
        pltpu.VMEM((tq, D), bf16),             # merged attention output
    ]

    # --- generation-aware scoped-VMEM budget (includes softmax temporaries) ---
    try:
        vmem_cap = pltpu.get_tpu_info().vmem_capacity_bytes
    except Exception:
        vmem_cap = 64 << 20                    # conservative (v7x-sized) fallback
    xb = x.dtype.itemsize
    act_bytes = 2 * (2 * tq * D * xb)                  # x_q block + out block (x2 buf)
    act_bytes += 2 * (S * D * 2 + tq * S * 2)          # bf16 x_kv + bias (x2 buf)
    weight_bytes = (4 * D * D + 2 * D * d_ff) * 2      # bf16 weights (single buffer)
    weight_bytes += (9 * D + d_ff) * 4                 # fp32 biases + LN params
    scratch_bytes = (2 * n_heads * S * hd + n_heads * tq * hd + tq * D) * 2
    temp_bytes = (3 * n_heads * tq * kv_tile           # s, p, bias slice (fp32)
                  + 2 * n_heads * tq * hd              # attention accumulators
                  + 2 * tq * ff_chunk + 4 * tq * D) * 4
    need = act_bytes + weight_bytes + scratch_bytes + temp_bytes
    vmem_limit = int(max(32 << 20, min(int(0.85 * vmem_cap), int(1.25 * need))))

    kernel = functools.partial(encoder_kernel, n_heads=n_heads,
                               kv_tile=kv_tile, ff_chunk=ff_chunk)
    operands = (x, x_kv, bias,
                wq, params["bq"], wk, params["bk"], wv, params["bv"], wo, params["bo"],
                params["g1"], params["be1"],
                w1, params["b1"], w2, params["b2"],
                params["g2"], params["be2"])

    def call(single_buffer_weights):
        return pl.pallas_call(
            kernel,
            out_shape=jax.ShapeDtypeStruct((B, S, D), x.dtype),
            grid=(B, S // tq),
            in_specs=build_in_specs(single_buffer_weights),
            out_specs=out_spec,
            scratch_shapes=scratch_shapes,
            compiler_params=pltpu.CompilerParams(
                # q axis must be "arbitrary": K/V heads are cached in scratch at
                # q == 0 and reused by later q-tiles of the same batch element.
                # TODO(synk): for B < num_cores on v7x, precompute K/V in a
                # separate pallas_call so both axes can stay "parallel".
                dimension_semantics=("parallel", "arbitrary"),
                vmem_limit_bytes=vmem_limit),
        )(*operands)

    try:
        return call(True)
    except Exception:
        # Fallback for toolchains that reject single-buffered (Buffered(1)) inputs.
        return call(False)


def encoder_reference(x, mask, params, *, n_heads):
    """Pure-JAX fp32 reference mirroring the PyTorch Encoder forward (eval mode)."""
    B, S, D = x.shape
    hd = D // n_heads
    scale = 1.0 / jnp.sqrt(jnp.float32(hd))

    def ln(v, g, b):
        mu = jnp.mean(v, axis=-1, keepdims=True)
        var = jnp.mean((v - mu) ** 2, axis=-1, keepdims=True)
        return (v - mu) * jax.lax.rsqrt(var + 1e-5) * g + b

    q = x @ params["wq"] + params["bq"]
    k = x @ params["wk"] + params["bk"]
    v = x @ params["wv"] + params["bv"]
    q = q.reshape(B, S, n_heads, hd).transpose(0, 2, 1, 3)
    k = k.reshape(B, S, n_heads, hd).transpose(0, 2, 1, 3)
    v = v.reshape(B, S, n_heads, hd).transpose(0, 2, 1, 3)
    scores = jnp.einsum("bhqd,bhkd->bhqk", q, k) * scale
    scores = jnp.where(mask[:, None, :, :] > 0, scores, -1e9)
    p = jax.nn.softmax(scores, axis=-1)
    attn = jnp.einsum("bhqk,bhkd->bhqd", p, v).transpose(0, 2, 1, 3).reshape(B, S, D)
    attn_out = attn @ params["wo"] + params["bo"]
    h1 = ln(x + attn_out, params["g1"], params["be1"])
    ff = jnp.maximum(h1 @ params["w1"] + params["b1"], 0.0) @ params["w2"] + params["b2"]
    return ln(h1 + ff, params["g2"], params["be2"])


def init_params(key, d_model, d_ff):
    ks = jax.random.split(key, 6)
    s = 0.02
    return {
        "wq": s * jax.random.normal(ks[0], (d_model, d_model), jnp.float32),
        "bq": jnp.zeros((1, d_model), jnp.float32),
        "wk": s * jax.random.normal(ks[1], (d_model, d_model), jnp.float32),
        "bk": jnp.zeros((1, d_model), jnp.float32),
        "wv": s * jax.random.normal(ks[2], (d_model, d_model), jnp.float32),
        "bv": jnp.zeros((1, d_model), jnp.float32),
        "wo": s * jax.random.normal(ks[3], (d_model, d_model), jnp.float32),
        "bo": jnp.zeros((1, d_model), jnp.float32),
        "g1": jnp.ones((1, d_model), jnp.float32),
        "be1": jnp.zeros((1, d_model), jnp.float32),
        "w1": s * jax.random.normal(ks[4], (d_model, d_ff), jnp.float32),
        "b1": jnp.zeros((1, d_ff), jnp.float32),
        "w2": s * jax.random.normal(ks[5], (d_ff, d_model), jnp.float32),
        "b2": jnp.zeros((1, d_model), jnp.float32),
        "g2": jnp.ones((1, d_model), jnp.float32),
        "be2": jnp.zeros((1, d_model), jnp.float32),
    }


if __name__ == "__main__":
    B, S, D, H, DFF = 2, 16, 32, 4, 64
    key = jax.random.PRNGKey(0)
    kx, kp = jax.random.split(key)

    x = jax.random.normal(kx, (B, S, D), jnp.float32)
    # mask: 1 = attend. Batch 0: causal mask (q-dependent, exercises per-q-tile
    # bias blocks). Batch 1: last two key positions masked out.
    mask = jnp.ones((B, S, S), jnp.float32)
    mask = mask.at[0].set(jnp.tril(jnp.ones((S, S), jnp.float32)))
    mask = mask.at[1, :, -2:].set(0.0)

    params = init_params(kp, D, DFF)

    # q_tile=8 < S forces multiple query tiles per batch element, exercising the
    # once-per-batch K/V caching path (pl.when on program_id(1) == 0).
    out = encoder_forward(x, mask, params, n_heads=H, q_tile=8)
    out = jax.block_until_ready(out)

    ref = encoder_reference(x, mask, params, n_heads=H)
    assert out.shape == (B, S, D)
    # bf16 matmul operands + approx reciprocal -> slightly looser tolerance.
    assert jnp.allclose(out, ref, atol=2e-2, rtol=2e-2), "mismatch vs JAX reference"

    print("KERNEL_OK")
</pallas_src>

<mosaic_0001>
module attributes {stable_mosaic.version = 11 : i64} {
  func.func @encoder_kernel(%arg0: i32, %arg1: i32, %arg2: memref<1x8x32xf32, #tpu.memory_space<vmem>>, %arg3: memref<1x16x32xbf16, #tpu.memory_space<vmem>>, %arg4: memref<1x8x16xbf16, #tpu.memory_space<vmem>>, %arg5: memref<32x32xbf16, #tpu.memory_space<vmem>>, %arg6: memref<1x32xf32, #tpu.memory_space<vmem>>, %arg7: memref<32x32xbf16, #tpu.memory_space<vmem>>, %arg8: memref<1x32xf32, #tpu.memory_space<vmem>>, %arg9: memref<32x32xbf16, #tpu.memory_space<vmem>>, %arg10: memref<1x32xf32, #tpu.memory_space<vmem>>, %arg11: memref<32x32xbf16, #tpu.memory_space<vmem>>, %arg12: memref<1x32xf32, #tpu.memory_space<vmem>>, %arg13: memref<1x32xf32, #tpu.memory_space<vmem>>, %arg14: memref<1x32xf32, #tpu.memory_space<vmem>>, %arg15: memref<32x64xbf16, #tpu.memory_space<vmem>>, %arg16: memref<1x64xf32, #tpu.memory_space<vmem>>, %arg17: memref<64x32xbf16, #tpu.memory_space<vmem>>, %arg18: memref<1x32xf32, #tpu.memory_space<vmem>>, %arg19: memref<1x32xf32, #tpu.memory_space<vmem>>, %arg20: memref<1x32xf32, #tpu.memory_space<vmem>>, %arg21: memref<1x8x32xf32, #tpu.memory_space<vmem>>, %arg22: memref<4x8x8xbf16, #tpu.memory_space<vmem>>, %arg23: memref<4x16x8xbf16, #tpu.memory_space<vmem>>, %arg24: memref<4x16x8xbf16, #tpu.memory_space<vmem>>, %arg25: memref<8x32xbf16, #tpu.memory_space<vmem>>) attributes {dimension_semantics = [#tpu.dimension_semantics<parallel>, #tpu.dimension_semantics<arbitrary>], iteration_bounds = array<i64: 2, 2>, scalar_prefetch = 0 : i64, scratch_operands = 4 : i64, tpu.core_type = #tpu.core_type<tc>, window_params = [{transform_indices = @transform_0, window_bounds = array<i64: 1, 8, 32>}, {transform_indices = @transform_1, window_bounds = array<i64: 1, 16, 32>}, {transform_indices = @transform_2, window_bounds = array<i64: 1, 8, 16>}, {pipeline_mode = #tpu.pipeline_mode<synchronous>, transform_indices = @transform_3, window_bounds = array<i64: 32, 32>}, {pipeline_mode = #tpu.pipeline_mode<synchronous>, transform_indices = @transform_4, window_bounds = array<i64: 1, 32>}, {pipeline_mode = #tpu.pipeline_mode<synchronous>, transform_indices = @transform_5, window_bounds = array<i64: 32, 32>}, {pipeline_mode = #tpu.pipeline_mode<synchronous>, transform_indices = @transform_6, window_bounds = array<i64: 1, 32>}, {pipeline_mode = #tpu.pipeline_mode<synchronous>, transform_indices = @transform_7, window_bounds = array<i64: 32, 32>}, {pipeline_mode = #tpu.pipeline_mode<synchronous>, transform_indices = @transform_8, window_bounds = array<i64: 1, 32>}, {pipeline_mode = #tpu.pipeline_mode<synchronous>, transform_indices = @transform_9, window_bounds = array<i64: 32, 32>}, {pipeline_mode = #tpu.pipeline_mode<synchronous>, transform_indices = @transform_10, window_bounds = array<i64: 1, 32>}, {pipeline_mode = #tpu.pipeline_mode<synchronous>, transform_indices = @transform_11, window_bounds = array<i64: 1, 32>}, {pipeline_mode = #tpu.pipeline_mode<synchronous>, transform_indices = @transform_12, window_bounds = array<i64: 1, 32>}, {pipeline_mode = #tpu.pipeline_mode<synchronous>, transform_indices = @transform_13, window_bounds = array<i64: 32, 64>}, {pipeline_mode = #tpu.pipeline_mode<synchronous>, transform_indices = @transform_14, window_bounds = array<i64: 1, 64>}, {pipeline_mode = #tpu.pipeline_mode<synchronous>, transform_indices = @transform_15, window_bounds = array<i64: 64, 32>}, {pipeline_mode = #tpu.pipeline_mode<synchronous>, transform_indices = @transform_16, window_bounds = array<i64: 1, 32>}, {pipeline_mode = #tpu.pipeline_mode<synchronous>, transform_indices = @transform_17, window_bounds = array<i64: 1, 32>}, {pipeline_mode = #tpu.pipeline_mode<synchronous>, transform_indices = @transform_18, window_bounds = array<i64: 1, 32>}, {transform_indices = @transform_19, window_bounds = array<i64: 1, 8, 32>}]} {
    %c0_i32 = arith.constant 0 : i32
    %0 = arith.cmpi eq, %arg1, %c0_i32 : i32
    %1 = arith.extui %0 : i1 to i32
    %c0_i32_0 = arith.constant 0 : i32
    %2 = arith.cmpi ne, %1, %c0_i32_0 : i32
    scf.if %2 {
      %c0_77 = arith.constant 0 : index
      %c0_78 = arith.constant 0 : index
      %c0_79 = arith.constant 0 : index
      %144 = vector.load %arg3[%c0_77, %c0_78, %c0_79] : memref<1x16x32xbf16, #tpu.memory_space<vmem>>, vector<1x16x32xbf16>
      %145 = vector.shape_cast %144 : vector<1x16x32xbf16> to vector<16x32xbf16>
      %c0_80 = arith.constant 0 : index
      %c0_81 = arith.constant 0 : index
      %146 = vector.load %arg7[%c0_80, %c0_81] : memref<32x32xbf16, #tpu.memory_space<vmem>>, vector<32x32xbf16>
      %cst_82 = arith.constant dense<0.000000e+00> : vector<16x32xf32>
      %147 = tpu.matmul %145, %146, %cst_82 {dimension_numbers = #tpu.dot_dimension_numbers<[1], [0], [0], [1], [0, 0, 1, 1], [], []>} : vector<16x32xbf16>, vector<32x32xbf16>, vector<16x32xf32> -> vector<16x32xf32>
      %c0_83 = arith.constant 0 : index
      %c0_84 = arith.constant 0 : index
      %148 = vector.load %arg8[%c0_83, %c0_84] : memref<1x32xf32, #tpu.memory_space<vmem>>, vector<1x32xf32>
      %149 = vector.broadcast %148 : vector<1x32xf32> to vector<16x32xf32>
      %150 = arith.addf %147, %149 : vector<16x32xf32>
      %c0_85 = arith.constant 0 : index
      %c0_86 = arith.constant 0 : index
      %151 = vector.load %arg9[%c0_85, %c0_86] : memref<32x32xbf16, #tpu.memory_space<vmem>>, vector<32x32xbf16>
      %cst_87 = arith.constant dense<0.000000e+00> : vector<16x32xf32>
      %152 = tpu.matmul %145, %151, %cst_87 {dimension_numbers = #tpu.dot_dimension_numbers<[1], [0], [0], [1], [0, 0, 1, 1], [], []>} : vector<16x32xbf16>, vector<32x32xbf16>, vector<16x32xf32> -> vector<16x32xf32>
      %c0_88 = arith.constant 0 : index
      %c0_89 = arith.constant 0 : index
      %153 = vector.load %arg10[%c0_88, %c0_89] : memref<1x32xf32, #tpu.memory_space<vmem>>, vector<1x32xf32>
      %154 = vector.broadcast %153 : vector<1x32xf32> to vector<16x32xf32>
      %155 = arith.addf %152, %154 : vector<16x32xf32>
      %156 = vector.extract_strided_slice %150 {offsets = [0, 0], sizes = [16, 8], strides = [1, 1]} : vector<16x32xf32> to vector<16x8xf32>
      %157 = arith.truncf %156 : vector<16x8xf32> to vector<16x8xbf16>
      %c0_90 = arith.constant 0 : index
      %c0_91 = arith.constant 0 : index
      %c0_92 = arith.constant 0 : index
      %158 = vector.load %arg23[%c0_90, %c0_91, %c0_92] : memref<4x16x8xbf16, #tpu.memory_space<vmem>>, vector<1x16x8xbf16>
      %159 = vector.shape_cast %158 : vector<1x16x8xbf16> to vector<16x8xbf16>
      %160 = vector.shape_cast %157 : vector<16x8xbf16> to vector<1x16x8xbf16>
      tpu.vector_store %arg23[%c0_90, %c0_91, %c0_92], %160 {strides = array<i32>} : memref<4x16x8xbf16, #tpu.memory_space<vmem>>, vector<1x16x8xbf16>,
      %161 = vector.extract_strided_slice %155 {offsets = [0, 0], sizes = [16, 8], strides = [1, 1]} : vector<16x32xf32> to vector<16x8xf32>
      %162 = arith.truncf %161 : vector<16x8xf32> to vector<16x8xbf16>
      %c0_93 = arith.constant 0 : index
      %c0_94 = arith.constant 0 : index
      %c0_95 = arith.constant 0 : index
      %163 = vector.load %arg24[%c0_93, %c0_94, %c0_95] : memref<4x16x8xbf16, #tpu.memory_space<vmem>>, vector<1x16x8xbf16>
      %164 = vector.shape_cast %163 : vector<1x16x8xbf16> to vector<16x8xbf16>
      %165 = vector.shape_cast %162 : vector<16x8xbf16> to vector<1x16x8xbf16>
      tpu.vector_store %arg24[%c0_93, %c0_94, %c0_95], %165 {strides = array<i32>} : memref<4x16x8xbf16, #tpu.memory_space<vmem>>, vector<1x16x8xbf16>,
      %166 = vector.extract_strided_slice %150 {offsets = [0, 8], sizes = [16, 8], strides = [1, 1]} : vector<16x32xf32> to vector<16x8xf32>
      %167 = arith.truncf %166 : vector<16x8xf32> to vector<16x8xbf16>
      %c1_96 = arith.constant 1 : index
      %c0_97 = arith.constant 0 : index
      %c0_98 = arith.constant 0 : index
      %168 = vector.load %arg23[%c1_96, %c0_97, %c0_98] : memref<4x16x8xbf16, #tpu.memory_space<vmem>>, vector<1x16x8xbf16>
      %169 = vector.shape_cast %168 : vector<1x16x8xbf16> to vector<16x8xbf16>
      %170 = vector.shape_cast %167 : vector<16x8xbf16> to vector<1x16x8xbf16>
      tpu.vector_store %arg23[%c1_96, %c0_97, %c0_98], %170 {strides = array<i32>} : memref<4x16x8xbf16, #tpu.memory_space<vmem>>, vector<1x16x8xbf16>,
      %171 = vector.extract_strided_slice %155 {offsets = [0, 8], sizes = [16, 8], strides = [1, 1]} : vector<16x32xf32> to vector<16x8xf32>
      %172 = arith.truncf %171 : vector<16x8xf32> to vector<16x8xbf16>
      %c1_99 = arith.constant 1 : index
      %c0_100 = arith.constant 0 : index
      %c0_101 = arith.constant 0 : index
      %173 = vector.load %arg24[%c1_99, %c0_100, %c0_101] : memref<4x16x8xbf16, #tpu.memory_space<vmem>>, vector<1x16x8xbf16>
      %174 = vector.shape_cast %173 : vector<1x16x8xbf16> to vector<16x8xbf16>
      %175 = vector.shape_cast %172 : vector<16x8xbf16> to vector<1x16x8xbf16>
      tpu.vector_store %arg24[%c1_99, %c0_100, %c0_101], %175 {strides = array<i32>} : memref<4x16x8xbf16, #tpu.memory_space<vmem>>, vector<1x16x8xbf16>,
      %176 = vector.extract_strided_slice %150 {offsets = [0, 16], sizes = [16, 8], strides = [1, 1]} : vector<16x32xf32> to vector<16x8xf32>
      %177 = arith.truncf %176 : vector<16x8xf32> to vector<16x8xbf16>
      %c2_102 = arith.constant 2 : index
      %c0_103 = arith.constant 0 : index
      %c0_104 = arith.constant 0 : index
      %178 = vector.load %arg23[%c2_102, %c0_103, %c0_104] : memref<4x16x8xbf16, #tpu.memory_space<vmem>>, vector<1x16x8xbf16>
      %179 = vector.shape_cast %178 : vector<1x16x8xbf16> to vector<16x8xbf16>
      %180 = vector.shape_cast %177 : vector<16x8xbf16> to vector<1x16x8xbf16>
      tpu.vector_store %arg23[%c2_102, %c0_103, %c0_104], %180 {strides = array<i32>} : memref<4x16x8xbf16, #tpu.memory_space<vmem>>, vector<1x16x8xbf16>,
      %181 = vector.extract_strided_slice %155 {offsets = [0, 16], sizes = [16, 8], strides = [1, 1]} : vector<16x32xf32> to vector<16x8xf32>
      %182 = arith.truncf %181 : vector<16x8xf32> to vector<16x8xbf16>
      %c2_105 = arith.constant 2 : index
      %c0_106 = arith.constant 0 : index
      %c0_107 = arith.constant 0 : index
      %183 = vector.load %arg24[%c2_105, %c0_106, %c0_107] : memref<4x16x8xbf16, #tpu.memory_space<vmem>>, vector<1x16x8xbf16>
      %184 = vector.shape_cast %183 : vector<1x16x8xbf16> to vector<16x8xbf16>
      %185 = vector.shape_cast %182 : vector<16x8xbf16> to vector<1x16x8xbf16>
      tpu.vector_store %arg24[%c2_105, %c0_106, %c0_107], %185 {strides = array<i32>} : memref<4x16x8xbf16, #tpu.memory_space<vmem>>, vector<1x16x8xbf16>,
      %186 = vector.extract_strided_slice %150 {offsets = [0, 24], sizes = [16, 8], strides = [1, 1]} : vector<16x32xf32> to vector<16x8xf32>
      %187 = arith.truncf %186 : vector<16x8xf32> to vector<16x8xbf16>
      %c3_108 = arith.constant 3 : index
      %c0_109 = arith.constant 0 : index
      %c0_110 = arith.constant 0 : index
      %188 = vector.load %arg23[%c3_108, %c0_109, %c0_110] : memref<4x16x8xbf16, #tpu.memory_space<vmem>>, vector<1x16x8xbf16>
      %189 = vector.shape_cast %188 : vector<1x16x8xbf16> to vector<16x8xbf16>
      %190 = vector.shape_cast %187 : vector<16x8xbf16> to vector<1x16x8xbf16>
      tpu.vector_store %arg23[%c3_108, %c0_109, %c0_110], %190 {strides = array<i32>} : memref<4x16x8xbf16, #tpu.memory_space<vmem>>, vector<1x16x8xbf16>,
      %191 = vector.extract_strided_slice %155 {offsets = [0, 24], sizes = [16, 8], strides = [1, 1]} : vector<16x32xf32> to vector<16x8xf32>
      %192 = arith.truncf %191 : vector<16x8xf32> to vector<16x8xbf16>
      %c3_111 = arith.constant 3 : index
      %c0_112 = arith.constant 0 : index
      %c0_113 = arith.constant 0 : index
      %193 = vector.load %arg24[%c3_111, %c0_112, %c0_113] : memref<4x16x8xbf16, #tpu.memory_space<vmem>>, vector<1x16x8xbf16>
      %194 = vector.shape_cast %193 : vector<1x16x8xbf16> to vector<16x8xbf16>
      %195 = vector.shape_cast %192 : vector<16x8xbf16> to vector<1x16x8xbf16>
      tpu.vector_store %arg24[%c3_111, %c0_112, %c0_113], %195 {strides = array<i32>} : memref<4x16x8xbf16, #tpu.memory_space<vmem>>, vector<1x16x8xbf16>,
    } else {
    }
    %c0 = arith.constant 0 : index
    %c0_1 = arith.constant 0 : index
    %c0_2 = arith.constant 0 : index
    %3 = vector.load %arg2[%c0, %c0_1, %c0_2] : memref<1x8x32xf32, #tpu.memory_space<vmem>>, vector<1x8x32xf32>
    %4 = vector.shape_cast %3 : vector<1x8x32xf32> to vector<8x32xf32>
    %5 = arith.truncf %4 : vector<8x32xf32> to vector<8x32xbf16>
    %c0_3 = arith.constant 0 : index
    %c0_4 = arith.constant 0 : index
    %6 = vector.load %arg5[%c0_3, %c0_4] : memref<32x32xbf16, #tpu.memory_space<vmem>>, vector<32x32xbf16>
    %cst = arith.constant dense<0.000000e+00> : vector<8x32xf32>
    %7 = tpu.matmul %5, %6, %cst {dimension_numbers = #tpu.dot_dimension_numbers<[1], [0], [0], [1], [0, 0, 1, 1], [], []>} : vector<8x32xbf16>, vector<32x32xbf16>, vector<8x32xf32> -> vector<8x32xf32>
    %c0_5 = arith.constant 0 : index
    %c0_6 = arith.constant 0 : index
    %8 = vector.load %arg6[%c0_5, %c0_6] : memref<1x32xf32, #tpu.memory_space<vmem>>, vector<1x32xf32>
    %9 = vector.broadcast %8 : vector<1x32xf32> to vector<8x32xf32>
    %10 = arith.addf %7, %9 : vector<8x32xf32>
    %cst_7 = arith.constant 0.353553385 : f32
    %11 = vector.broadcast %cst_7 : f32 to vector<8x32xf32>
    %12 = arith.mulf %10, %11 : vector<8x32xf32>
    %13 = vector.extract_strided_slice %12 {offsets = [0, 0], sizes = [8, 8], strides = [1, 1]} : vector<8x32xf32> to vector<8x8xf32>
    %14 = arith.truncf %13 : vector<8x8xf32> to vector<8x8xbf16>
    %c0_8 = arith.constant 0 : index
    %c0_9 = arith.constant 0 : index
    %c0_10 = arith.constant 0 : index
    %15 = vector.load %arg22[%c0_8, %c0_9, %c0_10] : memref<4x8x8xbf16, #tpu.memory_space<vmem>>, vector<1x8x8xbf16>
    %16 = vector.shape_cast %15 : vector<1x8x8xbf16> to vector<8x8xbf16>
    %17 = vector.shape_cast %14 : vector<8x8xbf16> to vector<1x8x8xbf16>
    tpu.vector_store %arg22[%c0_8, %c0_9, %c0_10], %17 {strides = array<i32>} : memref<4x8x8xbf16, #tpu.memory_space<vmem>>, vector<1x8x8xbf16>,
    %18 = vector.extract_strided_slice %12 {offsets = [0, 8], sizes = [8, 8], strides = [1, 1]} : vector<8x32xf32> to vector<8x8xf32>
    %19 = arith.truncf %18 : vector<8x8xf32> to vector<8x8xbf16>
    %c1 = arith.constant 1 : index
    %c0_11 = arith.constant 0 : index
    %c0_12 = arith.constant 0 : index
    %20 = vector.load %arg22[%c1, %c0_11, %c0_12] : memref<4x8x8xbf16, #tpu.memory_space<vmem>>, vector<1x8x8xbf16>
    %21 = vector.shape_cast %20 : vector<1x8x8xbf16> to vector<8x8xbf16>
    %22 = vector.shape_cast %19 : vector<8x8xbf16> to vector<1x8x8xbf16>
    tpu.vector_store %arg22[%c1, %c0_11, %c0_12], %22 {strides = array<i32>} : memref<4x8x8xbf16, #tpu.memory_space<vmem>>, vector<1x8x8xbf16>,
    %23 = vector.extract_strided_slice %12 {offsets = [0, 16], sizes = [8, 8], strides = [1, 1]} : vector<8x32xf32> to vector<8x8xf32>
    %24 = arith.truncf %23 : vector<8x8xf32> to vector<8x8xbf16>
    %c2 = arith.constant 2 : index
    %c0_13 = arith.constant 0 : index
    %c0_14 = arith.constant 0 : index
    %25 = vector.load %arg22[%c2, %c0_13, %c0_14] : memref<4x8x8xbf16, #tpu.memory_space<vmem>>, vector<1x8x8xbf16>
    %26 = vector.shape_cast %25 : vector<1x8x8xbf16> to vector<8x8xbf16>
    %27 = vector.shape_cast %24 : vector<8x8xbf16> to vector<1x8x8xbf16>
    tpu.vector_store %arg22[%c2, %c0_13, %c0_14], %27 {strides = array<i32>} : memref<4x8x8xbf16, #tpu.memory_space<vmem>>, vector<1x8x8xbf16>,
    %28 = vector.extract_strided_slice %12 {offsets = [0, 24], sizes = [8, 8], strides = [1, 1]} : vector<8x32xf32> to vector<8x8xf32>
    %29 = arith.truncf %28 : vector<8x8xf32> to vector<8x8xbf16>
    %c3 = arith.constant 3 : index
    %c0_15 = arith.constant 0 : index
    %c0_16 = arith.constant 0 : index
    %30 = vector.load %arg22[%c3, %c0_15, %c0_16] : memref<4x8x8xbf16, #tpu.memory_space<vmem>>, vector<1x8x8xbf16>
    %31 = vector.shape_cast %30 : vector<1x8x8xbf16> to vector<8x8xbf16>
    %32 = vector.shape_cast %29 : vector<8x8xbf16> to vector<1x8x8xbf16>
    tpu.vector_store %arg22[%c3, %c0_15, %c0_16], %32 {strides = array<i32>} : memref<4x8x8xbf16, #tpu.memory_space<vmem>>, vector<1x8x8xbf16>,
    %c0_17 = arith.constant 0 : index
    %c0_18 = arith.constant 0 : index
    %c0_19 = arith.constant 0 : index
    %33 = vector.load %arg22[%c0_17, %c0_18, %c0_19] : memref<4x8x8xbf16, #tpu.memory_space<vmem>>, vector<4x8x8xbf16>
    %c0_20 = arith.constant 0 : index
    %c0_21 = arith.constant 0 : index
    %c0_22 = arith.constant 0 : index
    %34 = vector.load %arg23[%c0_20, %c0_21, %c0_22] : memref<4x16x8xbf16, #tpu.memory_space<vmem>>, vector<4x16x8xbf16>
    "tpu.trace_start"() <{level = 10 : i32, message = "hqd,hkd->hqk"}> : () -> ()
    %cst_23 = arith.constant dense<0.000000e+00> : vector<4x8x16xf32>
    %35 = tpu.matmul %33, %34, %cst_23 {dimension_numbers = #tpu.dot_dimension_numbers<[2], [2], [1], [1], [0, 0, 0, 1, 1, 1], [0], [0]>} : vector<4x8x8xbf16>, vector<4x16x8xbf16>, vector<4x8x16xf32> -> vector<4x8x16xf32>
    "tpu.trace_stop"() : () -> ()
    %c0_24 = arith.constant 0 : index
    %c0_25 = arith.constant 0 : index
    %c0_26 = arith.constant 0 : index
    %36 = vector.load %arg4[%c0_24, %c0_25, %c0_26] : memref<1x8x16xbf16, #tpu.memory_space<vmem>>, vector<1x8x16xbf16>
    %37 = vector.shape_cast %36 : vector<1x8x16xbf16> to vector<8x16xbf16>
    %38 = arith.extf %37 : vector<8x16xbf16> to vector<8x16xf32>
    %39 = vector.shape_cast %38 : vector<8x16xf32> to vector<1x8x16xf32>
    %40 = vector.broadcast %39 : vector<1x8x16xf32> to vector<4x8x16xf32>
    %41 = arith.addf %35, %40 : vector<4x8x16xf32>
    %cst_27 = arith.constant dense<0xFF800000> : vector<4x8xf32>
    %42 = vector.multi_reduction <maximumf>, %41, %cst_27 [2] : vector<4x8x16xf32> to vector<4x8xf32>
    %43 = vector.shape_cast %42 : vector<4x8xf32> to vector<4x8x1xf32>
    %44 = vector.broadcast %43 : vector<4x8x1xf32> to vector<4x8x16xf32>
    %45 = arith.subf %41, %44 : vector<4x8x16xf32>
    %46 = math.exp %45 : vector<4x8x16xf32>
    %cst_28 = arith.constant dense<0.000000e+00> : vector<4x8xf32>
    %47 = vector.multi_reduction <add>, %46, %cst_28 [2] : vector<4x8x16xf32> to vector<4x8xf32>
    %48 = vector.shape_cast %47 : vector<4x8xf32> to vector<4x8x1xf32>
    %49 = arith.truncf %46 : vector<4x8x16xf32> to vector<4x8x16xbf16>
    %c0_29 = arith.constant 0 : index
    %c0_30 = arith.constant 0 : index
    %c0_31 = arith.constant 0 : index
    %50 = vector.load %arg24[%c0_29, %c0_30, %c0_31] : memref<4x16x8xbf16, #tpu.memory_space<vmem>>, vector<4x16x8xbf16>
    "tpu.trace_start"() <{level = 10 : i32, message = "hqk,hkd->hqd"}> : () -> ()
    %cst_32 = arith.constant dense<0.000000e+00> : vector<4x8x8xf32>
    %51 = tpu.matmul %49, %50, %cst_32 {dimension_numbers = #tpu.dot_dimension_numbers<[2], [1], [1], [2], [0, 0, 0, 1, 1, 2], [0], [0]>} : vector<4x8x16xbf16>, vector<4x16x8xbf16>, vector<4x8x8xf32> -> vector<4x8x8xf32>
    "tpu.trace_stop"() : () -> ()
    %52 = tpu.reciprocal %48 {approx = true} : vector<4x8x1xf32> -> vector<4x8x1xf32>
    %53 = vector.broadcast %52 : vector<4x8x1xf32> to vector<4x8x8xf32>
    %54 = arith.mulf %51, %53 : vector<4x8x8xf32>
    %55 = vector.extract_strided_slice %54 {offsets = [0, 0, 0], sizes = [1, 8, 8], strides = [1, 1, 1]} : vector<4x8x8xf32> to vector<1x8x8xf32>
    %56 = vector.shape_cast %55 : vector<1x8x8xf32> to vector<8x8xf32>
    %57 = arith.truncf %56 : vector<8x8xf32> to vector<8x8xbf16>
    %c0_33 = arith.constant 0 : index
    %c0_34 = arith.constant 0 : index
    %58 = vector.load %arg25[%c0_33, %c0_34] : memref<8x32xbf16, #tpu.memory_space<vmem>>, vector<8x8xbf16>
    tpu.vector_store %arg25[%c0_33, %c0_34], %57 {strides = array<i32>} : memref<8x32xbf16, #tpu.memory_space<vmem>>, vector<8x8xbf16>,
    %59 = vector.extract_strided_slice %54 {offsets = [1, 0, 0], sizes = [1, 8, 8], strides = [1, 1, 1]} : vector<4x8x8xf32> to vector<1x8x8xf32>
    %60 = vector.shape_cast %59 : vector<1x8x8xf32> to vector<8x8xf32>
    %61 = arith.truncf %60 : vector<8x8xf32> to vector<8x8xbf16>
    %c0_35 = arith.constant 0 : index
    %c8 = arith.constant 8 : index
    %62 = vector.load %arg25[%c0_35, %c8] : memref<8x32xbf16, #tpu.memory_space<vmem>>, vector<8x8xbf16>
    tpu.vector_store %arg25[%c0_35, %c8], %61 {strides = array<i32>} : memref<8x32xbf16, #tpu.memory_space<vmem>>, vector<8x8xbf16>,
    %63 = vector.extract_strided_slice %54 {offsets = [2, 0, 0], sizes = [1, 8, 8], strides = [1, 1, 1]} : vector<4x8x8xf32> to vector<1x8x8xf32>
    %64 = vector.shape_cast %63 : vector<1x8x8xf32> to vector<8x8xf32>
    %65 = arith.truncf %64 : vector<8x8xf32> to vector<8x8xbf16>
    %c0_36 = arith.constant 0 : index
    %c16 = arith.constant 16 : index
    %66 = vector.load %arg25[%c0_36, %c16] : memref<8x32xbf16, #tpu.memory_space<vmem>>, vector<8x8xbf16>
    tpu.vector_store %arg25[%c0_36, %c16], %65 {strides = array<i32>} : memref<8x32xbf16, #tpu.memory_space<vmem>>, vector<8x8xbf16>,
    %67 = vector.extract_strided_slice %54 {offsets = [3, 0, 0], sizes = [1, 8, 8], strides = [1, 1, 1]} : vector<4x8x8xf32> to vector<1x8x8xf32>
    %68 = vector.shape_cast %67 : vector<1x8x8xf32> to vector<8x8xf32>
    %69 = arith.truncf %68 : vector<8x8xf32> to vector<8x8xbf16>
    %c0_37 = arith.constant 0 : index
    %c24 = arith.constant 24 : index
    %70 = vector.load %arg25[%c0_37, %c24] : memref<8x32xbf16, #tpu.memory_space<vmem>>, vector<8x8xbf16>
    tpu.vector_store %arg25[%c0_37, %c24], %69 {strides = array<i32>} : memref<8x32xbf16, #tpu.memory_space<vmem>>, vector<8x8xbf16>,
    %c0_38 = arith.constant 0 : index
    %c0_39 = arith.constant 0 : index
    %71 = vector.load %arg25[%c0_38, %c0_39] : memref<8x32xbf16, #tpu.memory_space<vmem>>, vector<8x32xbf16>
    %c0_40 = arith.constant 0 : index
    %c0_41 = arith.constant 0 : index
    %72 = vector.load %arg11[%c0_40, %c0_41] : memref<32x32xbf16, #tpu.memory_space<vmem>>, vector<32x32xbf16>
    %cst_42 = arith.constant dense<0.000000e+00> : vector<8x32xf32>
    %73 = tpu.matmul %71, %72, %cst_42 {dimension_numbers = #tpu.dot_dimension_numbers<[1], [0], [0], [1], [0, 0, 1, 1], [], []>} : vector<8x32xbf16>, vector<32x32xbf16>, vector<8x32xf32> -> vector<8x32xf32>
    %c0_43 = arith.constant 0 : index
    %c0_44 = arith.constant 0 : index
    %74 = vector.load %arg12[%c0_43, %c0_44] : memref<1x32xf32, #tpu.memory_space<vmem>>, vector<1x32xf32>
    %75 = vector.broadcast %74 : vector<1x32xf32> to vector<8x32xf32>
    %76 = arith.addf %73, %75 : vector<8x32xf32>
    %77 = arith.addf %4, %76 : vector<8x32xf32>
    %cst_45 = arith.constant dense<0.000000e+00> : vector<8xf32>
    %78 = vector.multi_reduction <add>, %77, %cst_45 [1] : vector<8x32xf32> to vector<8xf32>
    %79 = vector.shape_cast %78 : vector<8xf32> to vector<8x1xf32>
    %cst_46 = arith.constant 3.200000e+01 : f32
    %80 = vector.broadcast %cst_46 : f32 to vector<8x1xf32>
    %81 = arith.divf %79, %80 : vector<8x1xf32>
    %82 = vector.broadcast %81 : vector<8x1xf32> to vector<8x32xf32>
    %83 = arith.subf %77, %82 : vector<8x32xf32>
    %84 = arith.mulf %83, %83 : vector<8x32xf32>
    %cst_47 = arith.constant dense<0.000000e+00> : vector<8xf32>
    %85 = vector.multi_reduction <add>, %84, %cst_47 [1] : vector<8x32xf32> to vector<8xf32>
    %86 = vector.shape_cast %85 : vector<8xf32> to vector<8x1xf32>
    %cst_48 = arith.constant 3.200000e+01 : f32
    %87 = vector.broadcast %cst_48 : f32 to vector<8x1xf32>
    %88 = arith.divf %86, %87 : vector<8x1xf32>
    %89 = vector.broadcast %81 : vector<8x1xf32> to vector<8x32xf32>
    %90 = arith.subf %77, %89 : vector<8x32xf32>
    %cst_49 = arith.constant 9.99999974E-6 : f32
    %91 = vector.broadcast %cst_49 : f32 to vector<8x1xf32>
    %92 = arith.addf %88, %91 : vector<8x1xf32>
    %93 = math.rsqrt %92 : vector<8x1xf32>
    %94 = vector.broadcast %93 : vector<8x1xf32> to vector<8x32xf32>
    %95 = arith.mulf %90, %94 : vector<8x32xf32>
    %c0_50 = arith.constant 0 : index
    %c0_51 = arith.constant 0 : index
    %96 = vector.load %arg13[%c0_50, %c0_51] : memref<1x32xf32, #tpu.memory_space<vmem>>, vector<1x32xf32>
    %97 = vector.broadcast %96 : vector<1x32xf32> to vector<8x32xf32>
    %98 = arith.mulf %95, %97 : vector<8x32xf32>
    %c0_52 = arith.constant 0 : index
    %c0_53 = arith.constant 0 : index
    %99 = vector.load %arg14[%c0_52, %c0_53] : memref<1x32xf32, #tpu.memory_space<vmem>>, vector<1x32xf32>
    %100 = vector.broadcast %99 : vector<1x32xf32> to vector<8x32xf32>
    %101 = arith.addf %98, %100 : vector<8x32xf32>
    %102 = arith.truncf %101 : vector<8x32xf32> to vector<8x32xbf16>
    %c0_54 = arith.constant 0 : index
    %c0_55 = arith.constant 0 : index
    %103 = vector.load %arg15[%c0_54, %c0_55] : memref<32x64xbf16, #tpu.memory_space<vmem>>, vector<32x64xbf16>
    %cst_56 = arith.constant dense<0.000000e+00> : vector<8x64xf32>
    %104 = tpu.matmul %102, %103, %cst_56 {dimension_numbers = #tpu.dot_dimension_numbers<[1], [0], [0], [1], [0, 0, 1, 1], [], []>} : vector<8x32xbf16>, vector<32x64xbf16>, vector<8x64xf32> -> vector<8x64xf32>
    %c0_57 = arith.constant 0 : index
    %c0_58 = arith.constant 0 : index
    %105 = vector.load %arg16[%c0_57, %c0_58] : memref<1x64xf32, #tpu.memory_space<vmem>>, vector<1x64xf32>
    %106 = vector.broadcast %105 : vector<1x64xf32> to vector<8x64xf32>
    %107 = arith.addf %104, %106 : vector<8x64xf32>
    %cst_59 = arith.constant 0.000000e+00 : f32
    %108 = vector.broadcast %cst_59 : f32 to vector<8x64xf32>
    %109 = arith.maximumf %107, %108 : vector<8x64xf32>
    %110 = arith.truncf %109 : vector<8x64xf32> to vector<8x64xbf16>
    %c0_60 = arith.constant 0 : index
    %c0_61 = arith.constant 0 : index
    %111 = vector.load %arg17[%c0_60, %c0_61] : memref<64x32xbf16, #tpu.memory_space<vmem>>, vector<64x32xbf16>
    %cst_62 = arith.constant dense<0.000000e+00> : vector<8x32xf32>
    %112 = tpu.matmul %110, %111, %cst_62 {dimension_numbers = #tpu.dot_dimension_numbers<[1], [0], [0], [1], [0, 0, 1, 1], [], []>} : vector<8x64xbf16>, vector<64x32xbf16>, vector<8x32xf32> -> vector<8x32xf32>
    %c0_63 = arith.constant 0 : index
    %c0_64 = arith.constant 0 : index
    %113 = vector.load %arg18[%c0_63, %c0_64] : memref<1x32xf32, #tpu.memory_space<vmem>>, vector<1x32xf32>
    %114 = vector.broadcast %113 : vector<1x32xf32> to vector<8x32xf32>
    %115 = arith.addf %112, %114 : vector<8x32xf32>
    %116 = arith.addf %101, %115 : vector<8x32xf32>
    %cst_65 = arith.constant dense<0.000000e+00> : vector<8xf32>
    %117 = vector.multi_reduction <add>, %116, %cst_65 [1] : vector<8x32xf32> to vector<8xf32>
    %118 = vector.shape_cast %117 : vector<8xf32> to vector<8x1xf32>
    %cst_66 = arith.constant 3.200000e+01 : f32
    %119 = vector.broadcast %cst_66 : f32 to vector<8x1xf32>
    %120 = arith.divf %118, %119 : vector<8x1xf32>
    %121 = vector.broadcast %120 : vector<8x1xf32> to vector<8x32xf32>
    %122 = arith.subf %116, %121 : vector<8x32xf32>
    %123 = arith.mulf %122, %122 : vector<8x32xf32>
    %cst_67 = arith.constant dense<0.000000e+00> : vector<8xf32>
    %124 = vector.multi_reduction <add>, %123, %cst_67 [1] : vector<8x32xf32> to vector<8xf32>
    %125 = vector.shape_cast %124 : vector<8xf32> to vector<8x1xf32>
    %cst_68 = arith.constant 3.200000e+01 : f32
    %126 = vector.broadcast %cst_68 : f32 to vector<8x1xf32>
    %127 = arith.divf %125, %126 : vector<8x1xf32>
    %128 = vector.broadcast %120 : vector<8x1xf32> to vector<8x32xf32>
    %129 = arith.subf %116, %128 : vector<8x32xf32>
    %cst_69 = arith.constant 9.99999974E-6 : f32
    %130 = vector.broadcast %cst_69 : f32 to vector<8x1xf32>
    %131 = arith.addf %127, %130 : vector<8x1xf32>
    %132 = math.rsqrt %131 : vector<8x1xf32>
    %133 = vector.broadcast %132 : vector<8x1xf32> to vector<8x32xf32>
    %134 = arith.mulf %129, %133 : vector<8x32xf32>
    %c0_70 = arith.constant 0 : index
    %c0_71 = arith.constant 0 : index
    %135 = vector.load %arg19[%c0_70, %c0_71] : memref<1x32xf32, #tpu.memory_space<vmem>>, vector<1x32xf32>
    %136 = vector.broadcast %135 : vector<1x32xf32> to vector<8x32xf32>
    %137 = arith.mulf %134, %136 : vector<8x32xf32>
    %c0_72 = arith.constant 0 : index
    %c0_73 = arith.constant 0 : index
    %138 = vector.load %arg20[%c0_72, %c0_73] : memref<1x32xf32, #tpu.memory_space<vmem>>, vector<1x32xf32>
    %139 = vector.broadcast %138 : vector<1x32xf32> to vector<8x32xf32>
    %140 = arith.addf %137, %139 : vector<8x32xf32>
    %c0_74 = arith.constant 0 : index
    %c0_75 = arith.constant 0 : index
    %c0_76 = arith.constant 0 : index
    %141 = vector.load %arg21[%c0_74, %c0_75, %c0_76] : memref<1x8x32xf32, #tpu.memory_space<vmem>>, vector<1x8x32xf32>
    %142 = vector.shape_cast %141 : vector<1x8x32xf32> to vector<8x32xf32>
    %143 = vector.shape_cast %140 : vector<8x32xf32> to vector<1x8x32xf32>
    tpu.vector_store %arg21[%c0_74, %c0_75, %c0_76], %143 {strides = array<i32>} : memref<1x8x32xf32, #tpu.memory_space<vmem>>, vector<1x8x32xf32>,
    return
  }
  func.func @transform_0(%arg0: i32, %arg1: i32) -> (i32, i32, i32) {
    %c0_i32 = arith.constant 0 : i32
    %c0_i32_0 = arith.constant 0 : i32
    return %arg0, %arg1, %c0_i32 : i32, i32, i32
  }
  func.func @transform_1(%arg0: i32, %arg1: i32) -> (i32, i32, i32) {
    %c0_i32 = arith.constant 0 : i32
    %c0_i32_0 = arith.constant 0 : i32
    %c0_i32_1 = arith.constant 0 : i32
    return %arg0, %c0_i32, %c0_i32_0 : i32, i32, i32
  }
  func.func @transform_2(%arg0: i32, %arg1: i32) -> (i32, i32, i32) {
    %c0_i32 = arith.constant 0 : i32
    %c0_i32_0 = arith.constant 0 : i32
    return %arg0, %arg1, %c0_i32 : i32, i32, i32
  }
  func.func @transform_3(%arg0: i32, %arg1: i32) -> (i32, i32) {
    %c0_i32 = arith.constant 0 : i32
    %c0_i32_0 = arith.constant 0 : i32
    %c0_i32_1 = arith.constant 0 : i32
    return %c0_i32, %c0_i32_0 : i32, i32
  }
  func.func @transform_4(%arg0: i32, %arg1: i32) -> (i32, i32) {
    %c0_i32 = arith.constant 0 : i32
    %c0_i32_0 = arith.constant 0 : i32
    %c0_i32_1 = arith.constant 0 : i32
    return %c0_i32, %c0_i32_0 : i32, i32
  }
  func.func @transform_5(%arg0: i32, %arg1: i32) -> (i32, i32) {
    %c0_i32 = arith.constant 0 : i32
    %c0_i32_0 = arith.constant 0 : i32
    %c0_i32_1 = arith.constant 0 : i32
    return %c0_i32, %c0_i32_0 : i32, i32
  }
  func.func @transform_6(%arg0: i32, %arg1: i32) -> (i32, i32) {
    %c0_i32 = arith.constant 0 : i32
    %c0_i32_0 = arith.constant 0 : i32
    %c0_i32_1 = arith.constant 0 : i32
    return %c0_i32, %c0_i32_0 : i32, i32
  }
  func.func @transform_7(%arg0: i32, %arg1: i32) -> (i32, i32) {
    %c0_i32 = arith.constant 0 : i32
    %c0_i32_0 = arith.constant 0 : i32
    %c0_i32_1 = arith.constant 0 : i32
    return %c0_i32, %c0_i32_0 : i32, i32
  }
  func.func @transform_8(%arg0: i32, %arg1: i32) -> (i32, i32) {
    %c0_i32 = arith.constant 0 : i32
    %c0_i32_0 = arith.constant 0 : i32
    %c0_i32_1 = arith.constant 0 : i32
    return %c0_i32, %c0_i32_0 : i32, i32
  }
  func.func @transform_9(%arg0: i32, %arg1: i32) -> (i32, i32) {
    %c0_i32 = arith.constant 0 : i32
    %c0_i32_0 = arith.constant 0 : i32
    %c0_i32_1 = arith.constant 0 : i32
    return %c0_i32, %c0_i32_0 : i32, i32
  }
  func.func @transform_10(%arg0: i32, %arg1: i32) -> (i32, i32) {
    %c0_i32 = arith.constant 0 : i32
    %c0_i32_0 = arith.constant 0 : i32
    %c0_i32_1 = arith.constant 0 : i32
    return %c0_i32, %c0_i32_0 : i32, i32
  }
  func.func @transform_11(%arg0: i32, %arg1: i32) -> (i32, i32) {
    %c0_i32 = arith.constant 0 : i32
    %c0_i32_0 = arith.constant 0 : i32
    %c0_i32_1 = arith.constant 0 : i32
    return %c0_i32, %c0_i32_0 : i32, i32
  }
  func.func @transform_12(%arg0: i32, %arg1: i32) -> (i32, i32) {
    %c0_i32 = arith.constant 0 : i32
    %c0_i32_0 = arith.constant 0 : i32
    %c0_i32_1 = arith.constant 0 : i32
    return %c0_i32, %c0_i32_0 : i32, i32
  }
  func.func @transform_13(%arg0: i32, %arg1: i32) -> (i32, i32) {
    %c0_i32 = arith.constant 0 : i32
    %c0_i32_0 = arith.constant 0 : i32
    %c0_i32_1 = arith.constant 0 : i32
    return %c0_i32, %c0_i32_0 : i32, i32
  }
  func.func @transform_14(%arg0: i32, %arg1: i32) -> (i32, i32) {
    %c0_i32 = arith.constant 0 : i32
    %c0_i32_0 = arith.constant 0 : i32
    %c0_i32_1 = arith.constant 0 : i32
    return %c0_i32, %c0_i32_0 : i32, i32
  }
  func.func @transform_15(%arg0: i32, %arg1: i32) -> (i32, i32) {
    %c0_i32 = arith.constant 0 : i32
    %c0_i32_0 = arith.constant 0 : i32
    %c0_i32_1 = arith.constant 0 : i32
    return %c0_i32, %c0_i32_0 : i32, i32
  }
  func.func @transform_16(%arg0: i32, %arg1: i32) -> (i32, i32) {
    %c0_i32 = arith.constant 0 : i32
    %c0_i32_0 = arith.constant 0 : i32
    %c0_i32_1 = arith.constant 0 : i32
    return %c0_i32, %c0_i32_0 : i32, i32
  }
  func.func @transform_17(%arg0: i32, %arg1: i32) -> (i32, i32) {
    %c0_i32 = arith.constant 0 : i32
    %c0_i32_0 = arith.constant 0 : i32
    %c0_i32_1 = arith.constant 0 : i32
    return %c0_i32, %c0_i32_0 : i32, i32
  }
  func.func @transform_18(%arg0: i32, %arg1: i32) -> (i32, i32) {
    %c0_i32 = arith.constant 0 : i32
    %c0_i32_0 = arith.constant 0 : i32
    %c0_i32_1 = arith.constant 0 : i32
    return %c0_i32, %c0_i32_0 : i32, i32
  }
  func.func @transform_19(%arg0: i32, %arg1: i32) -> (i32, i32, i32) {
    %c0_i32 = arith.constant 0 : i32
    %c0_i32_0 = arith.constant 0 : i32
    return %arg0, %arg1, %c0_i32 : i32, i32, i32
  }
}

module attributes {stable_mosaic.version = 11 : i64} {
  func.func @encoder_kernel(%arg0: i32, %arg1: i32, %arg2: memref<1x8x32xf32, #tpu.memory_space<vmem>>, %arg3: memref<1x16x32xbf16, #tpu.memory_space<vmem>>, %arg4: memref<1x8x16xbf16, #tpu.memory_space<vmem>>, %arg5: memref<32x32xbf16, #tpu.memory_space<vmem>>, %arg6: memref<1x32xf32, #tpu.memory_space<vmem>>, %arg7: memref<32x32xbf16, #tpu.memory_space<vmem>>, %arg8: memref<1x32xf32, #tpu.memory_space<vmem>>, %arg9: memref<32x32xbf16, #tpu.memory_space<vmem>>, %arg10: memref<1x32xf32, #tpu.memory_space<vmem>>, %arg11: memref<32x32xbf16, #tpu.memory_space<vmem>>, %arg12: memref<1x32xf32, #tpu.memory_space<vmem>>, %arg13: memref<1x32xf32, #tpu.memory_space<vmem>>, %arg14: memref<1x32xf32, #tpu.memory_space<vmem>>, %arg15: memref<32x64xbf16, #tpu.memory_space<vmem>>, %arg16: memref<1x64xf32, #tpu.memory_space<vmem>>, %arg17: memref<64x32xbf16, #tpu.memory_space<vmem>>, %arg18: memref<1x32xf32, #tpu.memory_space<vmem>>, %arg19: memref<1x32xf32, #tpu.memory_space<vmem>>, %arg20: memref<1x32xf32, #tpu.memory_space<vmem>>, %arg21: memref<1x8x32xf32, #tpu.memory_space<vmem>>, %arg22: memref<4x8x8xbf16, #tpu.memory_space<vmem>>, %arg23: memref<4x16x8xbf16, #tpu.memory_space<vmem>>, %arg24: memref<4x16x8xbf16, #tpu.memory_space<vmem>>, %arg25: memref<8x32xbf16, #tpu.memory_space<vmem>>) attributes {dimension_semantics = [#tpu.dimension_semantics<parallel>, #tpu.dimension_semantics<arbitrary>], iteration_bounds = array<i64: 2, 2>, scalar_prefetch = 0 : i64, scratch_operands = 4 : i64, tpu.core_type = #tpu.core_type<tc>, window_params = [{transform_indices = @transform_0, window_bounds = array<i64: 1, 8, 32>}, {transform_indices = @transform_1, window_bounds = array<i64: 1, 16, 32>}, {transform_indices = @transform_2, window_bounds = array<i64: 1, 8, 16>}, {pipeline_mode = #tpu.pipeline_mode<synchronous>, transform_indices = @transform_3, window_bounds = array<i64: 32, 32>}, {pipeline_mode = #tpu.pipeline_mode<synchronous>, transform_indices = @transform_4, window_bounds = array<i64: 1, 32>}, {pipeline_mode = #tpu.pipeline_mode<synchronous>, transform_indices = @transform_5, window_bounds = array<i64: 32, 32>}, {pipeline_mode = #tpu.pipeline_mode<synchronous>, transform_indices = @transform_6, window_bounds = array<i64: 1, 32>}, {pipeline_mode = #tpu.pipeline_mode<synchronous>, transform_indices = @transform_7, window_bounds = array<i64: 32, 32>}, {pipeline_mode = #tpu.pipeline_mode<synchronous>, transform_indices = @transform_8, window_bounds = array<i64: 1, 32>}, {pipeline_mode = #tpu.pipeline_mode<synchronous>, transform_indices = @transform_9, window_bounds = array<i64: 32, 32>}, {pipeline_mode = #tpu.pipeline_mode<synchronous>, transform_indices = @transform_10, window_bounds = array<i64: 1, 32>}, {pipeline_mode = #tpu.pipeline_mode<synchronous>, transform_indices = @transform_11, window_bounds = array<i64: 1, 32>}, {pipeline_mode = #tpu.pipeline_mode<synchronous>, transform_indices = @transform_12, window_bounds = array<i64: 1, 32>}, {pipeline_mode = #tpu.pipeline_mode<synchronous>, transform_indices = @transform_13, window_bounds = array<i64: 32, 64>}, {pipeline_mode = #tpu.pipeline_mode<synchronous>, transform_indices = @transform_14, window_bounds = array<i64: 1, 64>}, {pipeline_mode = #tpu.pipeline_mode<synchronous>, transform_indices = @transform_15, window_bounds = array<i64: 64, 32>}, {pipeline_mode = #tpu.pipeline_mode<synchronous>, transform_indices = @transform_16, window_bounds = array<i64: 1, 32>}, {pipeline_mode = #tpu.pipeline_mode<synchronous>, transform_indices = @transform_17, window_bounds = array<i64: 1, 32>}, {pipeline_mode = #tpu.pipeline_mode<synchronous>, transform_indices = @transform_18, window_bounds = array<i64: 1, 32>}, {transform_indices = @transform_19, window_bounds = array<i64: 1, 8, 32>}]} {
    %c0_i32 = arith.constant 0 : i32
    %0 = arith.cmpi eq, %arg1, %c0_i32 : i32
    %1 = arith.extui %0 : i1 to i32
    %c0_i32_0 = arith.constant 0 : i32
    %2 = arith.cmpi ne, %1, %c0_i32_0 : i32
    scf.if %2 {
      %c0_77 = arith.constant 0 : index
      %c0_78 = arith.constant 0 : index
      %c0_79 = arith.constant 0 : index
      %144 = vector.load %arg3[%c0_77, %c0_78, %c0_79] : memref<1x16x32xbf16, #tpu.memory_space<vmem>>, vector<1x16x32xbf16>
      %145 = vector.shape_cast %144 : vector<1x16x32xbf16> to vector<16x32xbf16>
      %c0_80 = arith.constant 0 : index
      %c0_81 = arith.constant 0 : index
      %146 = vector.load %arg7[%c0_80, %c0_81] : memref<32x32xbf16, #tpu.memory_space<vmem>>, vector<32x32xbf16>
      %cst_82 = arith.constant dense<0.000000e+00> : vector<16x32xf32>
      %147 = tpu.matmul %145, %146, %cst_82 {dimension_numbers = #tpu.dot_dimension_numbers<[1], [0], [0], [1], [0, 0, 1, 1], [], []>} : vector<16x32xbf16>, vector<32x32xbf16>, vector<16x32xf32> -> vector<16x32xf32>
      %c0_83 = arith.constant 0 : index
      %c0_84 = arith.constant 0 : index
      %148 = vector.load %arg8[%c0_83, %c0_84] : memref<1x32xf32, #tpu.memory_space<vmem>>, vector<1x32xf32>
      %149 = vector.broadcast %148 : vector<1x32xf32> to vector<16x32xf32>
      %150 = arith.addf %147, %149 : vector<16x32xf32>
      %c0_85 = arith.constant 0 : index
      %c0_86 = arith.constant 0 : index
      %151 = vector.load %arg9[%c0_85, %c0_86] : memref<32x32xbf16, #tpu.memory_space<vmem>>, vector<32x32xbf16>
      %cst_87 = arith.constant dense<0.000000e+00> : vector<16x32xf32>
      %152 = tpu.matmul %145, %151, %cst_87 {dimension_numbers = #tpu.dot_dimension_numbers<[1], [0], [0], [1], [0, 0, 1, 1], [], []>} : vector<16x32xbf16>, vector<32x32xbf16>, vector<16x32xf32> -> vector<16x32xf32>
      %c0_88 = arith.constant 0 : index
      %c0_89 = arith.constant 0 : index
      %153 = vector.load %arg10[%c0_88, %c0_89] : memref<1x32xf32, #tpu.memory_space<vmem>>, vector<1x32xf32>
      %154 = vector.broadcast %153 : vector<1x32xf32> to vector<16x32xf32>
      %155 = arith.addf %152, %154 : vector<16x32xf32>
      %156 = vector.extract_strided_slice %150 {offsets = [0, 0], sizes = [16, 8], strides = [1, 1]} : vector<16x32xf32> to vector<16x8xf32>
      %157 = arith.truncf %156 : vector<16x8xf32> to vector<16x8xbf16>
      %c0_90 = arith.constant 0 : index
      %c0_91 = arith.constant 0 : index
      %c0_92 = arith.constant 0 : index
      %158 = vector.load %arg23[%c0_90, %c0_91, %c0_92] : memref<4x16x8xbf16, #tpu.memory_space<vmem>>, vector<1x16x8xbf16>
      %159 = vector.shape_cast %158 : vector<1x16x8xbf16> to vector<16x8xbf16>
      %160 = vector.shape_cast %157 : vector<16x8xbf16> to vector<1x16x8xbf16>
      tpu.vector_store %arg23[%c0_90, %c0_91, %c0_92], %160 {strides = array<i32>} : memref<4x16x8xbf16, #tpu.memory_space<vmem>>, vector<1x16x8xbf16>,
      %161 = vector.extract_strided_slice %155 {offsets = [0, 0], sizes = [16, 8], strides = [1, 1]} : vector<16x32xf32> to vector<16x8xf32>
      %162 = arith.truncf %161 : vector<16x8xf32> to vector<16x8xbf16>
      %c0_93 = arith.constant 0 : index
      %c0_94 = arith.constant 0 : index
      %c0_95 = arith.constant 0 : index
      %163 = vector.load %arg24[%c0_93, %c0_94, %c0_95] : memref<4x16x8xbf16, #tpu.memory_space<vmem>>, vector<1x16x8xbf16>
      %164 = vector.shape_cast %163 : vector<1x16x8xbf16> to vector<16x8xbf16>
      %165 = vector.shape_cast %162 : vector<16x8xbf16> to vector<1x16x8xbf16>
      tpu.vector_store %arg24[%c0_93, %c0_94, %c0_95], %165 {strides = array<i32>} : memref<4x16x8xbf16, #tpu.memory_space<vmem>>, vector<1x16x8xbf16>,
      %166 = vector.extract_strided_slice %150 {offsets = [0, 8], sizes = [16, 8], strides = [1, 1]} : vector<16x32xf32> to vector<16x8xf32>
      %167 = arith.truncf %166 : vector<16x8xf32> to vector<16x8xbf16>
      %c1_96 = arith.constant 1 : index
      %c0_97 = arith.constant 0 : index
      %c0_98 = arith.constant 0 : index
      %168 = vector.load %arg23[%c1_96, %c0_97, %c0_98] : memref<4x16x8xbf16, #tpu.memory_space<vmem>>, vector<1x16x8xbf16>
      %169 = vector.shape_cast %168 : vector<1x16x8xbf16> to vector<16x8xbf16>
      %170 = vector.shape_cast %167 : vector<16x8xbf16> to vector<1x16x8xbf16>
      tpu.vector_store %arg23[%c1_96, %c0_97, %c0_98], %170 {strides = array<i32>} : memref<4x16x8xbf16, #tpu.memory_space<vmem>>, vector<1x16x8xbf16>,
      %171 = vector.extract_strided_slice %155 {offsets = [0, 8], sizes = [16, 8], strides = [1, 1]} : vector<16x32xf32> to vector<16x8xf32>
      %172 = arith.truncf %171 : vector<16x8xf32> to vector<16x8xbf16>
      %c1_99 = arith.constant 1 : index
      %c0_100 = arith.constant 0 : index
      %c0_101 = arith.constant 0 : index
      %173 = vector.load %arg24[%c1_99, %c0_100, %c0_101] : memref<4x16x8xbf16, #tpu.memory_space<vmem>>, vector<1x16x8xbf16>
      %174 = vector.shape_cast %173 : vector<1x16x8xbf16> to vector<16x8xbf16>
      %175 = vector.shape_cast %172 : vector<16x8xbf16> to vector<1x16x8xbf16>
      tpu.vector_store %arg24[%c1_99, %c0_100, %c0_101], %175 {strides = array<i32>} : memref<4x16x8xbf16, #tpu.memory_space<vmem>>, vector<1x16x8xbf16>,
      %176 = vector.extract_strided_slice %150 {offsets = [0, 16], sizes = [16, 8], strides = [1, 1]} : vector<16x32xf32> to vector<16x8xf32>
      %177 = arith.truncf %176 : vector<16x8xf32> to vector<16x8xbf16>
      %c2_102 = arith.constant 2 : index
      %c0_103 = arith.constant 0 : index
      %c0_104 = arith.constant 0 : index
      %178 = vector.load %arg23[%c2_102, %c0_103, %c0_104] : memref<4x16x8xbf16, #tpu.memory_space<vmem>>, vector<1x16x8xbf16>
      %179 = vector.shape_cast %178 : vector<1x16x8xbf16> to vector<16x8xbf16>
      %180 = vector.shape_cast %177 : vector<16x8xbf16> to vector<1x16x8xbf16>
      tpu.vector_store %arg23[%c2_102, %c0_103, %c0_104], %180 {strides = array<i32>} : memref<4x16x8xbf16, #tpu.memory_space<vmem>>, vector<1x16x8xbf16>,
      %181 = vector.extract_strided_slice %155 {offsets = [0, 16], sizes = [16, 8], strides = [1, 1]} : vector<16x32xf32> to vector<16x8xf32>
      %182 = arith.truncf %181 : vector<16x8xf32> to vector<16x8xbf16>
      %c2_105 = arith.constant 2 : index
      %c0_106 = arith.constant 0 : index
      %c0_107 = arith.constant 0 : index
      %183 = vector.load %arg24[%c2_105, %c0_106, %c0_107] : memref<4x16x8xbf16, #tpu.memory_space<vmem>>, vector<1x16x8xbf16>
      %184 = vector.shape_cast %183 : vector<1x16x8xbf16> to vector<16x8xbf16>
      %185 = vector.shape_cast %182 : vector<16x8xbf16> to vector<1x16x8xbf16>
      tpu.vector_store %arg24[%c2_105, %c0_106, %c0_107], %185 {strides = array<i32>} : memref<4x16x8xbf16, #tpu.memory_space<vmem>>, vector<1x16x8xbf16>,
      %186 = vector.extract_strided_slice %150 {offsets = [0, 24], sizes = [16, 8], strides = [1, 1]} : vector<16x32xf32> to vector<16x8xf32>
      %187 = arith.truncf %186 : vector<16x8xf32> to vector<16x8xbf16>
      %c3_108 = arith.constant 3 : index
      %c0_109 = arith.constant 0 : index
      %c0_110 = arith.constant 0 : index
      %188 = vector.load %arg23[%c3_108, %c0_109, %c0_110] : memref<4x16x8xbf16, #tpu.memory_space<vmem>>, vector<1x16x8xbf16>
      %189 = vector.shape_cast %188 : vector<1x16x8xbf16> to vector<16x8xbf16>
      %190 = vector.shape_cast %187 : vector<16x8xbf16> to vector<1x16x8xbf16>
      tpu.vector_store %arg23[%c3_108, %c0_109, %c0_110], %190 {strides = array<i32>} : memref<4x16x8xbf16, #tpu.memory_space<vmem>>, vector<1x16x8xbf16>,
      %191 = vector.extract_strided_slice %155 {offsets = [0, 24], sizes = [16, 8], strides = [1, 1]} : vector<16x32xf32> to vector<16x8xf32>
      %192 = arith.truncf %191 : vector<16x8xf32> to vector<16x8xbf16>
      %c3_111 = arith.constant 3 : index
      %c0_112 = arith.constant 0 : index
      %c0_113 = arith.constant 0 : index
      %193 = vector.load %arg24[%c3_111, %c0_112, %c0_113] : memref<4x16x8xbf16, #tpu.memory_space<vmem>>, vector<1x16x8xbf16>
      %194 = vector.shape_cast %193 : vector<1x16x8xbf16> to vector<16x8xbf16>
      %195 = vector.shape_cast %192 : vector<16x8xbf16> to vector<1x16x8xbf16>
      tpu.vector_store %arg24[%c3_111, %c0_112, %c0_113], %195 {strides = array<i32>} : memref<4x16x8xbf16, #tpu.memory_space<vmem>>, vector<1x16x8xbf16>,
    } else {
    }
    %c0 = arith.constant 0 : index
    %c0_1 = arith.constant 0 : index
    %c0_2 = arith.constant 0 : index
    %3 = vector.load %arg2[%c0, %c0_1, %c0_2] : memref<1x8x32xf32, #tpu.memory_space<vmem>>, vector<1x8x32xf32>
    %4 = vector.shape_cast %3 : vector<1x8x32xf32> to vector<8x32xf32>
    %5 = arith.truncf %4 : vector<8x32xf32> to vector<8x32xbf16>
    %c0_3 = arith.constant 0 : index
    %c0_4 = arith.constant 0 : index
    %6 = vector.load %arg5[%c0_3, %c0_4] : memref<32x32xbf16, #tpu.memory_space<vmem>>, vector<32x32xbf16>
    %cst = arith.constant dense<0.000000e+00> : vector<8x32xf32>
    %7 = tpu.matmul %5, %6, %cst {dimension_numbers = #tpu.dot_dimension_numbers<[1], [0], [0], [1], [0, 0, 1, 1], [], []>} : vector<8x32xbf16>, vector<32x32xbf16>, vector<8x32xf32> -> vector<8x32xf32>
    %c0_5 = arith.constant 0 : index
    %c0_6 = arith.constant 0 : index
    %8 = vector.load %arg6[%c0_5, %c0_6] : memref<1x32xf32, #tpu.memory_space<vmem>>, vector<1x32xf32>
    %9 = vector.broadcast %8 : vector<1x32xf32> to vector<8x32xf32>
    %10 = arith.addf %7, %9 : vector<8x32xf32>
    %cst_7 = arith.constant 0.353553385 : f32
    %11 = vector.broadcast %cst_7 : f32 to vector<8x32xf32>
    %12 = arith.mulf %10, %11 : vector<8x32xf32>
    %13 = vector.extract_strided_slice %12 {offsets = [0, 0], sizes = [8, 8], strides = [1, 1]} : vector<8x32xf32> to vector<8x8xf32>
    %14 = arith.truncf %13 : vector<8x8xf32> to vector<8x8xbf16>
    %c0_8 = arith.constant 0 : index
    %c0_9 = arith.constant 0 : index
    %c0_10 = arith.constant 0 : index
    %15 = vector.load %arg22[%c0_8, %c0_9, %c0_10] : memref<4x8x8xbf16, #tpu.memory_space<vmem>>, vector<1x8x8xbf16>
    %16 = vector.shape_cast %15 : vector<1x8x8xbf16> to vector<8x8xbf16>
    %17 = vector.shape_cast %14 : vector<8x8xbf16> to vector<1x8x8xbf16>
    tpu.vector_store %arg22[%c0_8, %c0_9, %c0_10], %17 {strides = array<i32>} : memref<4x8x8xbf16, #tpu.memory_space<vmem>>, vector<1x8x8xbf16>,
    %18 = vector.extract_strided_slice %12 {offsets = [0, 8], sizes = [8, 8], strides = [1, 1]} : vector<8x32xf32> to vector<8x8xf32>
    %19 = arith.truncf %18 : vector<8x8xf32> to vector<8x8xbf16>
    %c1 = arith.constant 1 : index
    %c0_11 = arith.constant 0 : index
    %c0_12 = arith.constant 0 : index
    %20 = vector.load %arg22[%c1, %c0_11, %c0_12] : memref<4x8x8xbf16, #tpu.memory_space<vmem>>, vector<1x8x8xbf16>
    %21 = vector.shape_cast %20 : vector<1x8x8xbf16> to vector<8x8xbf16>
    %22 = vector.shape_cast %19 : vector<8x8xbf16> to vector<1x8x8xbf16>
    tpu.vector_store %arg22[%c1, %c0_11, %c0_12], %22 {strides = array<i32>} : memref<4x8x8xbf16, #tpu.memory_space<vmem>>, vector<1x8x8xbf16>,
    %23 = vector.extract_strided_slice %12 {offsets = [0, 16], sizes = [8, 8], strides = [1, 1]} : vector<8x32xf32> to vector<8x8xf32>
    %24 = arith.truncf %23 : vector<8x8xf32> to vector<8x8xbf16>
    %c2 = arith.constant 2 : index
    %c0_13 = arith.constant 0 : index
    %c0_14 = arith.constant 0 : index
    %25 = vector.load %arg22[%c2, %c0_13, %c0_14] : memref<4x8x8xbf16, #tpu.memory_space<vmem>>, vector<1x8x8xbf16>
    %26 = vector.shape_cast %25 : vector<1x8x8xbf16> to vector<8x8xbf16>
    %27 = vector.shape_cast %24 : vector<8x8xbf16> to vector<1x8x8xbf16>
    tpu.vector_store %arg22[%c2, %c0_13, %c0_14], %27 {strides = array<i32>} : memref<4x8x8xbf16, #tpu.memory_space<vmem>>, vector<1x8x8xbf16>,
    %28 = vector.extract_strided_slice %12 {offsets = [0, 24], sizes = [8, 8], strides = [1, 1]} : vector<8x32xf32> to vector<8x8xf32>
    %29 = arith.truncf %28 : vector<8x8xf32> to vector<8x8xbf16>
    %c3 = arith.constant 3 : index
    %c0_15 = arith.constant 0 : index
    %c0_16 = arith.constant 0 : index
    %30 = vector.load %arg22[%c3, %c0_15, %c0_16] : memref<4x8x8xbf16, #tpu.memory_space<vmem>>, vector<1x8x8xbf16>
    %31 = vector.shape_cast %30 : vector<1x8x8xbf16> to vector<8x8xbf16>
    %32 = vector.shape_cast %29 : vector<8x8xbf16> to vector<1x8x8xbf16>
    tpu.vector_store %arg22[%c3, %c0_15, %c0_16], %32 {strides = array<i32>} : memref<4x8x8xbf16, #tpu.memory_space<vmem>>, vector<1x8x8xbf16>,
    %c0_17 = arith.constant 0 : index
    %c0_18 = arith.constant 0 : index
    %c0_19 = arith.constant 0 : index
    %33 = vector.load %arg22[%c0_17, %c0_18, %c0_19] : memref<4x8x8xbf16, #tpu.memory_space<vmem>>, vector<4x8x8xbf16>
    %c0_20 = arith.constant 0 : index
    %c0_21 = arith.constant 0 : index
    %c0_22 = arith.constant 0 : index
    %34 = vector.load %arg23[%c0_20, %c0_21, %c0_22] : memref<4x16x8xbf16, #tpu.memory_space<vmem>>, vector<4x16x8xbf16>
    "tpu.trace_start"() <{level = 10 : i32, message = "hqd,hkd->hqk"}> : () -> ()
    %cst_23 = arith.constant dense<0.000000e+00> : vector<4x8x16xf32>
    %35 = tpu.matmul %33, %34, %cst_23 {dimension_numbers = #tpu.dot_dimension_numbers<[2], [2], [1], [1], [0, 0, 0, 1, 1, 1], [0], [0]>} : vector<4x8x8xbf16>, vector<4x16x8xbf16>, vector<4x8x16xf32> -> vector<4x8x16xf32>
    "tpu.trace_stop"() : () -> ()
    %c0_24 = arith.constant 0 : index
    %c0_25 = arith.constant 0 : index
    %c0_26 = arith.constant 0 : index
    %36 = vector.load %arg4[%c0_24, %c0_25, %c0_26] : memref<1x8x16xbf16, #tpu.memory_space<vmem>>, vector<1x8x16xbf16>
    %37 = vector.shape_cast %36 : vector<1x8x16xbf16> to vector<8x16xbf16>
    %38 = arith.extf %37 : vector<8x16xbf16> to vector<8x16xf32>
    %39 = vector.shape_cast %38 : vector<8x16xf32> to vector<1x8x16xf32>
    %40 = vector.broadcast %39 : vector<1x8x16xf32> to vector<4x8x16xf32>
    %41 = arith.addf %35, %40 : vector<4x8x16xf32>
    %cst_27 = arith.constant dense<0xFF800000> : vector<4x8xf32>
    %42 = vector.multi_reduction <maximumf>, %41, %cst_27 [2] : vector<4x8x16xf32> to vector<4x8xf32>
    %43 = vector.shape_cast %42 : vector<4x8xf32> to vector<4x8x1xf32>
    %44 = vector.broadcast %43 : vector<4x8x1xf32> to vector<4x8x16xf32>
    %45 = arith.subf %41, %44 : vector<4x8x16xf32>
    %46 = math.exp %45 : vector<4x8x16xf32>
    %cst_28 = arith.constant dense<0.000000e+00> : vector<4x8xf32>
    %47 = vector.multi_reduction <add>, %46, %cst_28 [2] : vector<4x8x16xf32> to vector<4x8xf32>
    %48 = vector.shape_cast %47 : vector<4x8xf32> to vector<4x8x1xf32>
    %49 = arith.truncf %46 : vector<4x8x16xf32> to vector<4x8x16xbf16>
    %c0_29 = arith.constant 0 : index
    %c0_30 = arith.constant 0 : index
    %c0_31 = arith.constant 0 : index
    %50 = vector.load %arg24[%c0_29, %c0_30, %c0_31] : memref<4x16x8xbf16, #tpu.memory_space<vmem>>, vector<4x16x8xbf16>
    "tpu.trace_start"() <{level = 10 : i32, message = "hqk,hkd->hqd"}> : () -> ()
    %cst_32 = arith.constant dense<0.000000e+00> : vector<4x8x8xf32>
    %51 = tpu.matmul %49, %50, %cst_32 {dimension_numbers = #tpu.dot_dimension_numbers<[2], [1], [1], [2], [0, 0, 0, 1, 1, 2], [0], [0]>} : vector<4x8x16xbf16>, vector<4x16x8xbf16>, vector<4x8x8xf32> -> vector<4x8x8xf32>
    "tpu.trace_stop"() : () -> ()
    %52 = tpu.reciprocal %48 {approx = true} : vector<4x8x1xf32> -> vector<4x8x1xf32>
    %53 = vector.broadcast %52 : vector<4x8x1xf32> to vector<4x8x8xf32>
    %54 = arith.mulf %51, %53 : vector<4x8x8xf32>
    %55 = vector.extract_strided_slice %54 {offsets = [0, 0, 0], sizes = [1, 8, 8], strides = [1, 1, 1]} : vector<4x8x8xf32> to vector<1x8x8xf32>
    %56 = vector.shape_cast %55 : vector<1x8x8xf32> to vector<8x8xf32>
    %57 = arith.truncf %56 : vector<8x8xf32> to vector<8x8xbf16>
    %c0_33 = arith.constant 0 : index
    %c0_34 = arith.constant 0 : index
    %58 = vector.load %arg25[%c0_33, %c0_34] : memref<8x32xbf16, #tpu.memory_space<vmem>>, vector<8x8xbf16>
    tpu.vector_store %arg25[%c0_33, %c0_34], %57 {strides = array<i32>} : memref<8x32xbf16, #tpu.memory_space<vmem>>, vector<8x8xbf16>,
    %59 = vector.extract_strided_slice %54 {offsets = [1, 0, 0], sizes = [1, 8, 8], strides = [1, 1, 1]} : vector<4x8x8xf32> to vector<1x8x8xf32>
    %60 = vector.shape_cast %59 : vector<1x8x8xf32> to vector<8x8xf32>
    %61 = arith.truncf %60 : vector<8x8xf32> to vector<8x8xbf16>
    %c0_35 = arith.constant 0 : index
    %c8 = arith.constant 8 : index
    %62 = vector.load %arg25[%c0_35, %c8] : memref<8x32xbf16, #tpu.memory_space<vmem>>, vector<8x8xbf16>
    tpu.vector_store %arg25[%c0_35, %c8], %61 {strides = array<i32>} : memref<8x32xbf16, #tpu.memory_space<vmem>>, vector<8x8xbf16>,
    %63 = vector.extract_strided_slice %54 {offsets = [2, 0, 0], sizes = [1, 8, 8], strides = [1, 1, 1]} : vector<4x8x8xf32> to vector<1x8x8xf32>
    %64 = vector.shape_cast %63 : vector<1x8x8xf32> to vector<8x8xf32>
    %65 = arith.truncf %64 : vector<8x8xf32> to vector<8x8xbf16>
    %c0_36 = arith.constant 0 : index
    %c16 = arith.constant 16 : index
    %66 = vector.load %arg25[%c0_36, %c16] : memref<8x32xbf16, #tpu.memory_space<vmem>>, vector<8x8xbf16>
    tpu.vector_store %arg25[%c0_36, %c16], %65 {strides = array<i32>} : memref<8x32xbf16, #tpu.memory_space<vmem>>, vector<8x8xbf16>,
    %67 = vector.extract_strided_slice %54 {offsets = [3, 0, 0], sizes = [1, 8, 8], strides = [1, 1, 1]} : vector<4x8x8xf32> to vector<1x8x8xf32>
    %68 = vector.shape_cast %67 : vector<1x8x8xf32> to vector<8x8xf32>
    %69 = arith.truncf %68 : vector<8x8xf32> to vector<8x8xbf16>
    %c0_37 = arith.constant 0 : index
    %c24 = arith.constant 24 : index
    %70 = vector.load %arg25[%c0_37, %c24] : memref<8x32xbf16, #tpu.memory_space<vmem>>, vector<8x8xbf16>
    tpu.vector_store %arg25[%c0_37, %c24], %69 {strides = array<i32>} : memref<8x32xbf16, #tpu.memory_space<vmem>>, vector<8x8xbf16>,
    %c0_38 = arith.constant 0 : index
    %c0_39 = arith.constant 0 : index
    %71 = vector.load %arg25[%c0_38, %c0_39] : memref<8x32xbf16, #tpu.memory_space<vmem>>, vector<8x32xbf16>
    %c0_40 = arith.constant 0 : index
    %c0_41 = arith.constant 0 : index
    %72 = vector.load %arg11[%c0_40, %c0_41] : memref<32x32xbf16, #tpu.memory_space<vmem>>, vector<32x32xbf16>
    %cst_42 = arith.constant dense<0.000000e+00> : vector<8x32xf32>
    %73 = tpu.matmul %71, %72, %cst_42 {dimension_numbers = #tpu.dot_dimension_numbers<[1], [0], [0], [1], [0, 0, 1, 1], [], []>} : vector<8x32xbf16>, vector<32x32xbf16>, vector<8x32xf32> -> vector<8x32xf32>
    %c0_43 = arith.constant 0 : index
    %c0_44 = arith.constant 0 : index
    %74 = vector.load %arg12[%c0_43, %c0_44] : memref<1x32xf32, #tpu.memory_space<vmem>>, vector<1x32xf32>
    %75 = vector.broadcast %74 : vector<1x32xf32> to vector<8x32xf32>
    %76 = arith.addf %73, %75 : vector<8x32xf32>
    %77 = arith.addf %4, %76 : vector<8x32xf32>
    %cst_45 = arith.constant dense<0.000000e+00> : vector<8xf32>
    %78 = vector.multi_reduction <add>, %77, %cst_45 [1] : vector<8x32xf32> to vector<8xf32>
    %79 = vector.shape_cast %78 : vector<8xf32> to vector<8x1xf32>
    %cst_46 = arith.constant 3.200000e+01 : f32
    %80 = vector.broadcast %cst_46 : f32 to vector<8x1xf32>
    %81 = arith.divf %79, %80 : vector<8x1xf32>
    %82 = vector.broadcast %81 : vector<8x1xf32> to vector<8x32xf32>
    %83 = arith.subf %77, %82 : vector<8x32xf32>
    %84 = arith.mulf %83, %83 : vector<8x32xf32>
    %cst_47 = arith.constant dense<0.000000e+00> : vector<8xf32>
    %85 = vector.multi_reduction <add>, %84, %cst_47 [1] : vector<8x32xf32> to vector<8xf32>
    %86 = vector.shape_cast %85 : vector<8xf32> to vector<8x1xf32>
    %cst_48 = arith.constant 3.200000e+01 : f32
    %87 = vector.broadcast %cst_48 : f32 to vector<8x1xf32>
    %88 = arith.divf %86, %87 : vector<8x1xf32>
    %89 = vector.broadcast %81 : vector<8x1xf32> to vector<8x32xf32>
    %90 = arith.subf %77, %89 : vector<8x32xf32>
    %cst_49 = arith.constant 9.99999974E-6 : f32
    %91 = vector.broadcast %cst_49 : f32 to vector<8x1xf32>
    %92 = arith.addf %88, %91 : vector<8x1xf32>
    %93 = math.rsqrt %92 : vector<8x1xf32>
    %94 = vector.broadcast %93 : vector<8x1xf32> to vector<8x32xf32>
    %95 = arith.mulf %90, %94 : vector<8x32xf32>
    %c0_50 = arith.constant 0 : index
    %c0_51 = arith.constant 0 : index
    %96 = vector.load %arg13[%c0_50, %c0_51] : memref<1x32xf32, #tpu.memory_space<vmem>>, vector<1x32xf32>
    %97 = vector.broadcast %96 : vector<1x32xf32> to vector<8x32xf32>
    %98 = arith.mulf %95, %97 : vector<8x32xf32>
    %c0_52 = arith.constant 0 : index
    %c0_53 = arith.constant 0 : index
    %99 = vector.load %arg14[%c0_52, %c0_53] : memref<1x32xf32, #tpu.memory_space<vmem>>, vector<1x32xf32>
    %100 = vector.broadcast %99 : vector<1x32xf32> to vector<8x32xf32>
    %101 = arith.addf %98, %100 : vector<8x32xf32>
    %102 = arith.truncf %101 : vector<8x32xf32> to vector<8x32xbf16>
    %c0_54 = arith.constant 0 : index
    %c0_55 = arith.constant 0 : index
    %103 = vector.load %arg15[%c0_54, %c0_55] : memref<32x64xbf16, #tpu.memory_space<vmem>>, vector<32x64xbf16>
    %cst_56 = arith.constant dense<0.000000e+00> : vector<8x64xf32>
    %104 = tpu.matmul %102, %103, %cst_56 {dimension_numbers = #tpu.dot_dimension_numbers<[1], [0], [0], [1], [0, 0, 1, 1], [], []>} : vector<8x32xbf16>, vector<32x64xbf16>, vector<8x64xf32> -> vector<8x64xf32>
    %c0_57 = arith.constant 0 : index
    %c0_58 = arith.constant 0 : index
    %105 = vector.load %arg16[%c0_57, %c0_58] : memref<1x64xf32, #tpu.memory_space<vmem>>, vector<1x64xf32>
    %106 = vector.broadcast %105 : vector<1x64xf32> to vector<8x64xf32>
    %107 = arith.addf %104, %106 : vector<8x64xf32>
    %cst_59 = arith.constant 0.000000e+00 : f32
    %108 = vector.broadcast %cst_59 : f32 to vector<8x64xf32>
    %109 = arith.maximumf %107, %108 : vector<8x64xf32>
    %110 = arith.truncf %109 : vector<8x64xf32> to vector<8x64xbf16>
    %c0_60 = arith.constant 0 : index
    %c0_61 = arith.constant 0 : index
    %111 = vector.load %arg17[%c0_60, %c0_61] : memref<64x32xbf16, #tpu.memory_space<vmem>>, vector<64x32xbf16>
    %cst_62 = arith.constant dense<0.000000e+00> : vector<8x32xf32>
    %112 = tpu.matmul %110, %111, %cst_62 {dimension_numbers = #tpu.dot_dimension_numbers<[1], [0], [0], [1], [0, 0, 1, 1], [], []>} : vector<8x64xbf16>, vector<64x32xbf16>, vector<8x32xf32> -> vector<8x32xf32>
    %c0_63 = arith.constant 0 : index
    %c0_64 = arith.constant 0 : index
    %113 = vector.load %arg18[%c0_63, %c0_64] : memref<1x32xf32, #tpu.memory_space<vmem>>, vector<1x32xf32>
    %114 = vector.broadcast %113 : vector<1x32xf32> to vector<8x32xf32>
    %115 = arith.addf %112, %114 : vector<8x32xf32>
    %116 = arith.addf %101, %115 : vector<8x32xf32>
    %cst_65 = arith.constant dense<0.000000e+00> : vector<8xf32>
    %117 = vector.multi_reduction <add>, %116, %cst_65 [1] : vector<8x32xf32> to vector<8xf32>
    %118 = vector.shape_cast %117 : vector<8xf32> to vector<8x1xf32>
    %cst_66 = arith.constant 3.200000e+01 : f32
    %119 = vector.broadcast %cst_66 : f32 to vector<8x1xf32>
    %120 = arith.divf %118, %119 : vector<8x1xf32>
    %121 = vector.broadcast %120 : vector<8x1xf32> to vector<8x32xf32>
    %122 = arith.subf %116, %121 : vector<8x32xf32>
    %123 = arith.mulf %122, %122 : vector<8x32xf32>
    %cst_67 = arith.constant dense<0.000000e+00> : vector<8xf32>
    %124 = vector.multi_reduction <add>, %123, %cst_67 [1] : vector<8x32xf32> to vector<8xf32>
    %125 = vector.shape_cast %124 : vector<8xf32> to vector<8x1xf32>
    %cst_68 = arith.constant 3.200000e+01 : f32
    %126 = vector.broadcast %cst_68 : f32 to vector<8x1xf32>
    %127 = arith.divf %125, %126 : vector<8x1xf32>
    %128 = vector.broadcast %120 : vector<8x1xf32> to vector<8x32xf32>
    %129 = arith.subf %116, %128 : vector<8x32xf32>
    %cst_69 = arith.constant 9.99999974E-6 : f32
    %130 = vector.broadcast %cst_69 : f32 to vector<8x1xf32>
    %131 = arith.addf %127, %130 : vector<8x1xf32>
    %132 = math.rsqrt %131 : vector<8x1xf32>
    %133 = vector.broadcast %132 : vector<8x1xf32> to vector<8x32xf32>
    %134 = arith.mulf %129, %133 : vector<8x32xf32>
    %c0_70 = arith.constant 0 : index
    %c0_71 = arith.constant 0 : index
    %135 = vector.load %arg19[%c0_70, %c0_71] : memref<1x32xf32, #tpu.memory_space<vmem>>, vector<1x32xf32>
    %136 = vector.broadcast %135 : vector<1x32xf32> to vector<8x32xf32>
    %137 = arith.mulf %134, %136 : vector<8x32xf32>
    %c0_72 = arith.constant 0 : index
    %c0_73 = arith.constant 0 : index
    %138 = vector.load %arg20[%c0_72, %c0_73] : memref<1x32xf32, #tpu.memory_space<vmem>>, vector<1x32xf32>
    %139 = vector.broadcast %138 : vector<1x32xf32> to vector<8x32xf32>
    %140 = arith.addf %137, %139 : vector<8x32xf32>
    %c0_74 = arith.constant 0 : index
    %c0_75 = arith.constant 0 : index
    %c0_76 = arith.constant 0 : index
    %141 = vector.load %arg21[%c0_74, %c0_75, %c0_76] : memref<1x8x32xf32, #tpu.memory_space<vmem>>, vector<1x8x32xf32>
    %142 = vector.shape_cast %141 : vector<1x8x32xf32> to vector<8x32xf32>
    %143 = vector.shape_cast %140 : vector<8x32xf32> to vector<1x8x32xf32>
    tpu.vector_store %arg21[%c0_74, %c0_75, %c0_76], %143 {strides = array<i32>} : memref<1x8x32xf32, #tpu.memory_space<vmem>>, vector<1x8x32xf32>,
    return
  }
  func.func @transform_0(%arg0: i32, %arg1: i32) -> (i32, i32, i32) {
    %c0_i32 = arith.constant 0 : i32
    %c0_i32_0 = arith.constant 0 : i32
    return %arg0, %arg1, %c0_i32 : i32, i32, i32
  }
  func.func @transform_1(%arg0: i32, %arg1: i32) -> (i32, i32, i32) {
    %c0_i32 = arith.constant 0 : i32
    %c0_i32_0 = arith.constant 0 : i32
    %c0_i32_1 = arith.constant 0 : i32
    return %arg0, %c0_i32, %c0_i32_0 : i32, i32, i32
  }
  func.func @transform_2(%arg0: i32, %arg1: i32) -> (i32, i32, i32) {
    %c0_i32 = arith.constant 0 : i32
    %c0_i32_0 = arith.constant 0 : i32
    return %arg0, %arg1, %c0_i32 : i32, i32, i32
  }
  func.func @transform_3(%arg0: i32, %arg1: i32) -> (i32, i32) {
    %c0_i32 = arith.constant 0 : i32
    %c0_i32_0 = arith.constant 0 : i32
    %c0_i32_1 = arith.constant 0 : i32
    return %c0_i32, %c0_i32_0 : i32, i32
  }
  func.func @transform_4(%arg0: i32, %arg1: i32) -> (i32, i32) {
    %c0_i32 = arith.constant 0 : i32
    %c0_i32_0 = arith.constant 0 : i32
    %c0_i32_1 = arith.constant 0 : i32
    return %c0_i32, %c0_i32_0 : i32, i32
  }
  func.func @transform_5(%arg0: i32, %arg1: i32) -> (i32, i32) {
    %c0_i32 = arith.constant 0 : i32
    %c0_i32_0 = arith.constant 0 : i32
    %c0_i32_1 = arith.constant 0 : i32
    return %c0_i32, %c0_i32_0 : i32, i32
  }
  func.func @transform_6(%arg0: i32, %arg1: i32) -> (i32, i32) {
    %c0_i32 = arith.constant 0 : i32
    %c0_i32_0 = arith.constant 0 : i32
    %c0_i32_1 = arith.constant 0 : i32
    return %c0_i32, %c0_i32_0 : i32, i32
  }
  func.func @transform_7(%arg0: i32, %arg1: i32) -> (i32, i32) {
    %c0_i32 = arith.constant 0 : i32
    %c0_i32_0 = arith.constant 0 : i32
    %c0_i32_1 = arith.constant 0 : i32
    return %c0_i32, %c0_i32_0 : i32, i32
  }
  func.func @transform_8(%arg0: i32, %arg1: i32) -> (i32, i32) {
    %c0_i32 = arith.constant 0 : i32
    %c0_i32_0 = arith.constant 0 : i32
    %c0_i32_1 = arith.constant 0 : i32
    return %c0_i32, %c0_i32_0 : i32, i32
  }
  func.func @transform_9(%arg0: i32, %arg1: i32) -> (i32, i32) {
    %c0_i32 = arith.constant 0 : i32
    %c0_i32_0 = arith.constant 0 : i32
    %c0_i32_1 = arith.constant 0 : i32
    return %c0_i32, %c0_i32_0 : i32, i32
  }
  func.func @transform_10(%arg0: i32, %arg1: i32) -> (i32, i32) {
    %c0_i32 = arith.constant 0 : i32
    %c0_i32_0 = arith.constant 0 : i32
    %c0_i32_1 = arith.constant 0 : i32
    return %c0_i32, %c0_i32_0 : i32, i32
  }
  func.func @transform_11(%arg0: i32, %arg1: i32) -> (i32, i32) {
    %c0_i32 = arith.constant 0 : i32
    %c0_i32_0 = arith.constant 0 : i32
    %c0_i32_1 = arith.constant 0 : i32
    return %c0_i32, %c0_i32_0 : i32, i32
  }
  func.func @transform_12(%arg0: i32, %arg1: i32) -> (i32, i32) {
    %c0_i32 = arith.constant 0 : i32
    %c0_i32_0 = arith.constant 0 : i32
    %c0_i32_1 = arith.constant 0 : i32
    return %c0_i32, %c0_i32_0 : i32, i32
  }
  func.func @transform_13(%arg0: i32, %arg1: i32) -> (i32, i32) {
    %c0_i32 = arith.constant 0 : i32
    %c0_i32_0 = arith.constant 0 : i32
    %c0_i32_1 = arith.constant 0 : i32
    return %c0_i32, %c0_i32_0 : i32, i32
  }
  func.func @transform_14(%arg0: i32, %arg1: i32) -> (i32, i32) {
    %c0_i32 = arith.constant 0 : i32
    %c0_i32_0 = arith.constant 0 : i32
    %c0_i32_1 = arith.constant 0 : i32
    return %c0_i32, %c0_i32_0 : i32, i32
  }
  func.func @transform_15(%arg0: i32, %arg1: i32) -> (i32, i32) {
    %c0_i32 = arith.constant 0 : i32
    %c0_i32_0 = arith.constant 0 : i32
    %c0_i32_1 = arith.constant 0 : i32
    return %c0_i32, %c0_i32_0 : i32, i32
  }
  func.func @transform_16(%arg0: i32, %arg1: i32) -> (i32, i32) {
    %c0_i32 = arith.constant 0 : i32
    %c0_i32_0 = arith.constant 0 : i32
    %c0_i32_1 = arith.constant 0 : i32
    return %c0_i32, %c0_i32_0 : i32, i32
  }
  func.func @transform_17(%arg0: i32, %arg1: i32) -> (i32, i32) {
    %c0_i32 = arith.constant 0 : i32
    %c0_i32_0 = arith.constant 0 : i32
    %c0_i32_1 = arith.constant 0 : i32
    return %c0_i32, %c0_i32_0 : i32, i32
  }
  func.func @transform_18(%arg0: i32, %arg1: i32) -> (i32, i32) {
    %c0_i32 = arith.constant 0 : i32
    %c0_i32_0 = arith.constant 0 : i32
    %c0_i32_1 = arith.constant 0 : i32
    return %c0_i32, %c0_i32_0 : i32, i32
  }
  func.func @transform_19(%arg0: i32, %arg1: i32) -> (i32, i32, i32) {
    %c0_i32 = arith.constant 0 : i32
    %c0_i32_0 = arith.constant 0 : i32
    return %arg0, %arg1, %c0_i32 : i32, i32, i32
  }
}

</mosaic_0001>

<llo_original>
// kernel: tpu_custom_call.1
$region0: #{tpu_custom_call.1}
  #allocation0 [shape = 'u32[]', space=smem, size = 0x4, offset = 0x4, fixed_abs, tag = 'smem constant byte address 0x4 - core index']
  #allocation1 [shape = 'u32[144,128]{1,0:T(1,128)}', space=vmem, size = 0x12000, scoped, tag = 'internal scratch']
  #allocation2 [shape = 'bf16[4,8,8]{2,1,0:T(8,128)(2,1)}', space=vmem, size = 0x2000, scoped, tag = 'scratch operand']
  #allocation3 [shape = 'bf16[4,16,8]{2,1,0:T(16,128)(2,1)}', space=vmem, size = 0x4000, scoped, tag = 'scratch operand']
  #allocation4 [shape = 'bf16[4,16,8]{2,1,0:T(16,128)(2,1)}', space=vmem, size = 0x4000, scoped, tag = 'scratch operand']
  #allocation5 [shape = 'bf16[8,32]{1,0:T(8,128)(2,1)}', space=vmem, size = 0x800, scoped, tag = 'scratch operand']
  %s0 = inlined_call_operand.vmem [shape: f32[2,16,32], index: 0, kind: input, shape index: {}]
  %s1 = inlined_call_operand.vmem [shape: bf16[2,16,32], index: 1, kind: input, shape index: {}]
  %s2 = inlined_call_operand.hbm [shape: bf16[2,16,16], index: 2, kind: input, shape index: {}]
  %s3 = inlined_call_operand.hbm [shape: bf16[32,32], index: 3, kind: input, shape index: {}]
  %s4 = inlined_call_operand.vmem [shape: f32[1,32], index: 4, kind: input, shape index: {}]
  %s5 = inlined_call_operand.hbm [shape: bf16[32,32], index: 5, kind: input, shape index: {}]
  %s6 = inlined_call_operand.hbm [shape: f32[1,32], index: 6, kind: input, shape index: {}]
  %s7 = inlined_call_operand.hbm [shape: bf16[32,32], index: 7, kind: input, shape index: {}]
  %s8 = inlined_call_operand.hbm [shape: f32[1,32], index: 8, kind: input, shape index: {}]
  %s9 = inlined_call_operand.vmem [shape: bf16[32,32], index: 9, kind: input, shape index: {}]
  %s10 = inlined_call_operand.hbm [shape: f32[1,32], index: 10, kind: input, shape index: {}]
  %s11 = inlined_call_operand.hbm [shape: f32[1,32], index: 11, kind: input, shape index: {}]
  %s12 = inlined_call_operand.hbm [shape: f32[1,32], index: 12, kind: input, shape index: {}]
  %s13 = inlined_call_operand.vmem [shape: bf16[32,64], index: 13, kind: input, shape index: {}]
  %s14 = inlined_call_operand.vmem [shape: f32[1,64], index: 14, kind: input, shape index: {}]
  %s15 = inlined_call_operand.vmem [shape: bf16[64,32], index: 15, kind: input, shape index: {}]
  %s16 = inlined_call_operand.vmem [shape: f32[1,32], index: 16, kind: input, shape index: {}]
  %s17 = inlined_call_operand.vmem [shape: f32[1,32], index: 17, kind: input, shape index: {}]
  %s18 = inlined_call_operand.vmem [shape: f32[1,32], index: 18, kind: input, shape index: {}]
  %s19 = inlined_call_operand.hbm [shape: f32[2,16,32], index: 19, kind: output, shape index: {}]
  %s20 = sld [smem:[#allocation0]]
  $region149: #{tpu_custom_call.1} parent=0
    _
  %s22 = ssub.s32 1, %s20
  %s23 = scalar_select 0, %s22, %s20
  $region1: #{tpu_custom_call.1} parent=0
    #allocation6 [shape = 'u8[4096]{0}', space=vmem, size = 0x1000, scoped, tag = 'input window, operand 2']
    #allocation7 [shape = 's32[2]{0}', space=sflag, size = 0x8, scoped, tag = 'scoped memory for tpu_custom_call.1']
    #allocation8 [shape = 's32[2]{0}', space=sflag, size = 0x8, scoped, tag = 'scoped memory for tpu_custom_call.1']
    #allocation9 [shape = 'u8[8192]{0}', space=vmem, size = 0x2000, scoped, tag = 'input window, operand 3, single buffered']
    #allocation10 [shape = 's32[1]{0}', space=sflag, size = 0x4, scoped, tag = 'scoped memory for tpu_custom_call.1']
    #allocation11 [shape = 'u8[8192]{0}', space=vmem, size = 0x2000, scoped, tag = 'input window, operand 5, single buffered']
    #allocation12 [shape = 'u8[512]{0}', space=vmem, size = 0x400, scoped, tag = 'input window, operand 6, single buffered']
    #allocation13 [shape = 's32[1]{0}', space=sflag, size = 0x4, scoped, tag = 'scoped memory for tpu_custom_call.1']
    #allocation14 [shape = 'u8[8192]{0}', space=vmem, size = 0x2000, scoped, tag = 'input window, operand 7, single buffered']
    #allocation15 [shape = 'u8[512]{0}', space=vmem, size = 0x400, scoped, tag = 'input window, operand 8, single buffered']
    #allocation16 [shape = 's32[1]{0}', space=sflag, size = 0x4, scoped, tag = 'scoped memory for tpu_custom_call.1']
    #allocation17 [shape = 'u8[512]{0}', space=vmem, size = 0x400, scoped, tag = 'input window, operand 10, single buffered']
    #allocation18 [shape = 'u8[512]{0}', space=vmem, size = 0x400, scoped, tag = 'input window, operand 11, single buffered']
    #allocation19 [shape = 's32[1]{0}', space=sflag, size = 0x4, scoped, tag = 'scoped memory for tpu_custom_call.1']
    #allocation20 [shape = 'u8[512]{0}', space=vmem, size = 0x400, scoped, tag = 'input window, operand 12, single buffered']
    #allocation21 [shape = 'u8[8192]{0}', space=vmem, size = 0x2000, scoped, tag = 'output window, operand 0']
    %24 = vsyncpa [#allocation7], 0
    %s25 = scalar_lea.sflag [#allocation7], 1
    %26 = vsyncpa %s25, 0
    %27 = vsyncpa [#allocation10], 0
    %28 = vsyncpa [#allocation13], 0
    %29 = vsyncpa [#allocation16], 0
    %30 = vsyncpa [#allocation19], 0
    %31 = vsyncpa [#allocation8], 0
    %s32 = scalar_lea.sflag [#allocation8], 1
    %33 = vsyncpa %s32, 0
    loop: start=0, step=1, limit=6
    $region2: #{tpu_custom_call.1} parent=1 // loop_pre_header
      _
    $region3: #{tpu_custom_call.1} parent=1 // loop_header
      %s35 = sphi 0, %s39
      %p36 = scmp.ge.s32.totalorder %s35, 6
      %s42 = sphi 0, %s54
      %s43 = sphi 0, %s50
      %s44 = sphi 0, %s42
      %s45 = sphi 0, %s43
      %s46 = sphi 0, %s44
      %s47 = sphi 0, %s45
      %s59 = sphi 0, %s61
      %s62 = sphi 0, %s59
      %s63 = sphi 0, %s62
      %s79 = sphi 0, %s63
      %s85 = sphi 0, %s87
      %s88 = sphi 0, %s85
      %s89 = sphi 0, %s88
      %s105 = sphi 0, %s89
      %s113 = sphi 0, %s115
      %s116 = sphi 0, %s113
      %s117 = sphi 0, %s116
      %s133 = sphi 0, %s117
      %s137 = sphi 0, %s137
      %s139 = sphi 0, %s137
      %s140 = sphi 0, %s139
      %s154 = sphi 0, %s140
      %s158 = sphi 0, %s158
      %s160 = sphi 0, %s158
      %s161 = sphi 0, %s160
      %s175 = sphi 0, %s161
      %s179 = sphi 0, %s179
      %s181 = sphi 0, %s179
      %s182 = sphi 0, %s181
      %s196 = sphi 0, %s182
      %s200 = sphi 0, %s200
      %s202 = sphi 0, %s200
      %s203 = sphi 0, %s202
      %s217 = sphi 0, %s203
      %s221 = sphi 0, %s221
      %s223 = sphi 0, %s221
      %s224 = sphi 0, %s223
      %s238 = sphi 0, %s224
      %s242 = sphi 0, %s242
      %s244 = sphi 0, %s242
      %s245 = sphi 0, %s244
      %s259 = sphi 0, %s245
      %s263 = sphi 0, %s263
      %s265 = sphi 0, %s263
      %s266 = sphi 0, %s265
      %s280 = sphi 0, %s266
      %s284 = sphi 0, %s284
      %s286 = sphi 0, %s284
      %s287 = sphi 0, %s286
      %s301 = sphi 0, %s287
      %s305 = sphi 0, %s305
      %s307 = sphi 0, %s305
      %s308 = sphi 0, %s307
      %s322 = sphi 0, %s308
      %s326 = sphi 0, %s326
      %s328 = sphi 0, %s326
      %s329 = sphi 0, %s328
      %s343 = sphi 0, %s329
      %s347 = sphi 0, %s347
      %s349 = sphi 0, %s347
      %s350 = sphi 0, %s349
      %s364 = sphi 0, %s350
      %s368 = sphi 0, %s368
      %s370 = sphi 0, %s368
      %s371 = sphi 0, %s370
      %s385 = sphi 0, %s371
      %s389 = sphi 0, %s389
      %s391 = sphi 0, %s389
      %s392 = sphi 0, %s391
      %s406 = sphi 0, %s392
      %s410 = sphi 0, %s410
      %s412 = sphi 0, %s410
      %s413 = sphi 0, %s412
      %s427 = sphi 0, %s413
      %s431 = sphi 0, %s431
      %s433 = sphi 0, %s431
      %s434 = sphi 0, %s433
      %s448 = sphi 0, %s434
      %s452 = sphi 0, %s452
      %s454 = sphi 0, %s452
      %s455 = sphi 0, %s454
      %s469 = sphi 0, %s455
      %s477 = sphi 0, %s479
      %s480 = sphi 0, %s477
      %s481 = sphi 0, %s480
      %s497 = sphi 0, %s481
    $region4: #{tpu_custom_call.1} parent=1 // loop_header_branch
      %38 = sbr.rel (%p36) target = $region8
    $region5: #{tpu_custom_call.1} parent=1 // loop_body
      %s40 = ssub.s32 %s35, 1
      %s41 = ssub.s32 %s35, 2
      %s48 = sadd.s32 1, %s43
      %p49 = scmp.ge.s32.totalorder %s48, 2
      %s50 = scalar_select %p49, 0, %s48
      %s51 = sadd.s32 1, %s42
      %s52 = scalar_select %p49, %s51, %s42
      %p53 = scmp.ge.s32.totalorder %s52, 2
      %s54 = scalar_select %p53, 0, %s52
      %s55 = ssub.s32 %s42, %s54
      %s56 = ssub.s32 %s43, %s50
      %s57 = sor.u32 %s55, %s56
      %p58 = scmp.eq.s32.totalorder %s57, 0
      %s60 = sadd.s32 %s59, 1
      %s61 = scalar_select %p58, %s59, %s60
      %p64 = pneg %p58
      %p65 = scmp.eq.s32.totalorder %s35, 3
      %p66 = por %p64, %p65
      %p67 = scmp.ne.s32.totalorder %s59, %s62
      %p68 = scmp.eq.s32.totalorder %s35, 0
      %p69 = por %p67, %p68
      %p70 = scmp.ne.s32.totalorder %s59, %s62
      %p71 = scmp.eq.s32.totalorder %s40, 3
      %p72 = por %p70, %p71
      %p73 = scmp.ne.s32.totalorder %s62, %s63
      %p74 = scmp.eq.s32.totalorder %s40, 0
      %p75 = por %p73, %p74
      %p76 = scmp.ne.s32.totalorder %s62, %s63
      %p77 = scmp.eq.s32.totalorder %s41, 3
      %p78 = por %p76, %p77
      %p80 = scmp.ne.s32.totalorder %s63, %s79
      %p81 = scmp.eq.s32.totalorder %s41, 0
      %p82 = por %p80, %p81
      %s83 = ssub.s32 %s42, %s54
      %p84 = scmp.eq.s32.totalorder %s83, 0
      %s86 = sadd.s32 %s85, 1
      %s87 = scalar_select %p84, %s85, %s86
      %p90 = pneg %p84
      %p91 = scmp.eq.s32.totalorder %s35, 3
      %p92 = por %p90, %p91
      %p93 = scmp.ne.s32.totalorder %s85, %s88
      %p94 = scmp.eq.s32.totalorder %s35, 0
      %p95 = por %p93, %p94
      %p96 = scmp.ne.s32.totalorder %s85, %s88
      %p97 = scmp.eq.s32.totalorder %s40, 3
      %p98 = por %p96, %p97
      %p99 = scmp.ne.s32.totalorder %s88, %s89
      %p100 = scmp.eq.s32.totalorder %s40, 0
      %p101 = por %p99, %p100
      %p102 = scmp.ne.s32.totalorder %s88, %s89
      %p103 = scmp.eq.s32.totalorder %s41, 3
      %p104 = por %p102, %p103
      %p106 = scmp.ne.s32.totalorder %s89, %s105
      %p107 = scmp.eq.s32.totalorder %s41, 0
      %p108 = por %p106, %p107
      %s109 = ssub.s32 %s42, %s54
      %s110 = ssub.s32 %s43, %s50
      %s111 = sor.u32 %s109, %s110
      %p112 = scmp.eq.s32.totalorder %s111, 0
      %s114 = sadd.s32 %s113, 1
      %s115 = scalar_select %p112, %s113, %s114
      %p118 = pneg %p112
      %p119 = scmp.eq.s32.totalorder %s35, 3
      %p120 = por %p118, %p119
      %p121 = scmp.ne.s32.totalorder %s113, %s116
      %p122 = scmp.eq.s32.totalorder %s35, 0
      %p123 = por %p121, %p122
      %p124 = scmp.ne.s32.totalorder %s113, %s116
      %p125 = scmp.eq.s32.totalorder %s40, 3
      %p126 = por %p124, %p125
      %p127 = scmp.ne.s32.totalorder %s116, %s117
      %p128 = scmp.eq.s32.totalorder %s40, 0
      %p129 = por %p127, %p128
      %p130 = scmp.ne.s32.totalorder %s116, %s117
      %p131 = scmp.eq.s32.totalorder %s41, 3
      %p132 = por %p130, %p131
      %p134 = scmp.ne.s32.totalorder %s117, %s133
      %p135 = scmp.eq.s32.totalorder %s41, 0
      %p136 = por %p134, %p135
      %s138 = sadd.s32 %s137, 1
      %p141 = scmp.eq.s32.totalorder %s35, 3
      %p142 = scmp.ne.s32.totalorder %s137, %s139
      %p143 = scmp.eq.s32.totalorder %s35, 0
      %p144 = por %p142, %p143
      %p145 = scmp.ne.s32.totalorder %s137, %s139
      %p146 = scmp.eq.s32.totalorder %s40, 3
      %p147 = por %p145, %p146
      %p148 = scmp.ne.s32.totalorder %s139, %s140
      %p149 = scmp.eq.s32.totalorder %s40, 0
      %p150 = por %p148, %p149
      %p151 = scmp.ne.s32.totalorder %s139, %s140
      %p152 = scmp.eq.s32.totalorder %s41, 3
      %p153 = por %p151, %p152
      %p155 = scmp.ne.s32.totalorder %s140, %s154
      %p156 = scmp.eq.s32.totalorder %s41, 0
      %p157 = por %p155, %p156
      %s159 = sadd.s32 %s158, 1
      %p162 = scmp.eq.s32.totalorder %s35, 3
      %p163 = scmp.ne.s32.totalorder %s158, %s160
      %p164 = scmp.eq.s32.totalorder %s35, 0
      %p165 = por %p163, %p164
      %p166 = scmp.ne.s32.totalorder %s158, %s160
      %p167 = scmp.eq.s32.totalorder %s40, 3
      %p168 = por %p166, %p167
      %p169 = scmp.ne.s32.totalorder %s160, %s161
      %p170 = scmp.eq.s32.totalorder %s40, 0
      %p171 = por %p169, %p170
      %p172 = scmp.ne.s32.totalorder %s160, %s161
      %p173 = scmp.eq.s32.totalorder %s41, 3
      %p174 = por %p172, %p173
      %p176 = scmp.ne.s32.totalorder %s161, %s175
      %p177 = scmp.eq.s32.totalorder %s41, 0
      %p178 = por %p176, %p177
      %s180 = sadd.s32 %s179, 1
      %p183 = scmp.eq.s32.totalorder %s35, 3
      %p184 = scmp.ne.s32.totalorder %s179, %s181
      %p185 = scmp.eq.s32.totalorder %s35, 0
      %p186 = por %p184, %p185
      %p187 = scmp.ne.s32.totalorder %s179, %s181
      %p188 = scmp.eq.s32.totalorder %s40, 3
      %p189 = por %p187, %p188
      %p190 = scmp.ne.s32.totalorder %s181, %s182
      %p191 = scmp.eq.s32.totalorder %s40, 0
      %p192 = por %p190, %p191
      %p193 = scmp.ne.s32.totalorder %s181, %s182
      %p194 = scmp.eq.s32.totalorder %s41, 3
      %p195 = por %p193, %p194
      %p197 = scmp.ne.s32.totalorder %s182, %s196
      %p198 = scmp.eq.s32.totalorder %s41, 0
      %p199 = por %p197, %p198
      %s201 = sadd.s32 %s200, 1
      %p204 = scmp.eq.s32.totalorder %s35, 3
      %p205 = scmp.ne.s32.totalorder %s200, %s202
      %p206 = scmp.eq.s32.totalorder %s35, 0
      %p207 = por %p205, %p206
      %p208 = scmp.ne.s32.totalorder %s200, %s202
      %p209 = scmp.eq.s32.totalorder %s40, 3
      %p210 = por %p208, %p209
      %p211 = scmp.ne.s32.totalorder %s202, %s203
      %p212 = scmp.eq.s32.totalorder %s40, 0
      %p213 = por %p211, %p212
      %p214 = scmp.ne.s32.totalorder %s202, %s203
      %p215 = scmp.eq.s32.totalorder %s41, 3
      %p216 = por %p214, %p215
      %p218 = scmp.ne.s32.totalorder %s203, %s217
      %p219 = scmp.eq.s32.totalorder %s41, 0
      %p220 = por %p218, %p219
      %s222 = sadd.s32 %s221, 1
      %p225 = scmp.eq.s32.totalorder %s35, 3
      %p226 = scmp.ne.s32.totalorder %s221, %s223
      %p227 = scmp.eq.s32.totalorder %s35, 0
      %p228 = por %p226, %p227
      %p229 = scmp.ne.s32.totalorder %s221, %s223
      %p230 = scmp.eq.s32.totalorder %s40, 3
      %p231 = por %p229, %p230
      %p232 = scmp.ne.s32.totalorder %s223, %s224
      %p233 = scmp.eq.s32.totalorder %s40, 0
      %p234 = por %p232, %p233
      %p235 = scmp.ne.s32.totalorder %s223, %s224
      %p236 = scmp.eq.s32.totalorder %s41, 3
      %p237 = por %p235, %p236
      %p239 = scmp.ne.s32.totalorder %s224, %s238
      %p240 = scmp.eq.s32.totalorder %s41, 0
      %p241 = por %p239, %p240
      %s243 = sadd.s32 %s242, 1
      %p246 = scmp.eq.s32.totalorder %s35, 3
      %p247 = scmp.ne.s32.totalorder %s242, %s244
      %p248 = scmp.eq.s32.totalorder %s35, 0
      %p249 = por %p247, %p248
      %p250 = scmp.ne.s32.totalorder %s242, %s244
      %p251 = scmp.eq.s32.totalorder %s40, 3
      %p252 = por %p250, %p251
      %p253 = scmp.ne.s32.totalorder %s244, %s245
      %p254 = scmp.eq.s32.totalorder %s40, 0
      %p255 = por %p253, %p254
      %p256 = scmp.ne.s32.totalorder %s244, %s245
      %p257 = scmp.eq.s32.totalorder %s41, 3
      %p258 = por %p256, %p257
      %p260 = scmp.ne.s32.totalorder %s245, %s259
      %p261 = scmp.eq.s32.totalorder %s41, 0
      %p262 = por %p260, %p261
      %s264 = sadd.s32 %s263, 1
      %p267 = scmp.eq.s32.totalorder %s35, 3
      %p268 = scmp.ne.s32.totalorder %s263, %s265
      %p269 = scmp.eq.s32.totalorder %s35, 0
      %p270 = por %p268, %p269
      %p271 = scmp.ne.s32.totalorder %s263, %s265
      %p272 = scmp.eq.s32.totalorder %s40, 3
      %p273 = por %p271, %p272
      %p274 = scmp.ne.s32.totalorder %s265, %s266
      %p275 = scmp.eq.s32.totalorder %s40, 0
      %p276 = por %p274, %p275
      %p277 = scmp.ne.s32.totalorder %s265, %s266
      %p278 = scmp.eq.s32.totalorder %s41, 3
      %p279 = por %p277, %p278
      %p281 = scmp.ne.s32.totalorder %s266, %s280
      %p282 = scmp.eq.s32.totalorder %s41, 0
      %p283 = por %p281, %p282
      %s285 = sadd.s32 %s284, 1
      %p288 = scmp.eq.s32.totalorder %s35, 3
      %p289 = scmp.ne.s32.totalorder %s284, %s286
      %p290 = scmp.eq.s32.totalorder %s35, 0
      %p291 = por %p289, %p290
      %p292 = scmp.ne.s32.totalorder %s284, %s286
      %p293 = scmp.eq.s32.totalorder %s40, 3
      %p294 = por %p292, %p293
      %p295 = scmp.ne.s32.totalorder %s286, %s287
      %p296 = scmp.eq.s32.totalorder %s40, 0
      %p297 = por %p295, %p296
      %p298 = scmp.ne.s32.totalorder %s286, %s287
      %p299 = scmp.eq.s32.totalorder %s41, 3
      %p300 = por %p298, %p299
      %p302 = scmp.ne.s32.totalorder %s287, %s301
      %p303 = scmp.eq.s32.totalorder %s41, 0
      %p304 = por %p302, %p303
      %s306 = sadd.s32 %s305, 1
      %p309 = scmp.eq.s32.totalorder %s35, 3
      %p310 = scmp.ne.s32.totalorder %s305, %s307
      %p311 = scmp.eq.s32.totalorder %s35, 0
      %p312 = por %p310, %p311
      %p313 = scmp.ne.s32.totalorder %s305, %s307
      %p314 = scmp.eq.s32.totalorder %s40, 3
      %p315 = por %p313, %p314
      %p316 = scmp.ne.s32.totalorder %s307, %s308
      %p317 = scmp.eq.s32.totalorder %s40, 0
      %p318 = por %p316, %p317
      %p319 = scmp.ne.s32.totalorder %s307, %s308
      %p320 = scmp.eq.s32.totalorder %s41, 3
      %p321 = por %p319, %p320
      %p323 = scmp.ne.s32.totalorder %s308, %s322
      %p324 = scmp.eq.s32.totalorder %s41, 0
      %p325 = por %p323, %p324
      %s327 = sadd.s32 %s326, 1
      %p330 = scmp.eq.s32.totalorder %s35, 3
      %p331 = scmp.ne.s32.totalorder %s326, %s328
      %p332 = scmp.eq.s32.totalorder %s35, 0
      %p333 = por %p331, %p332
      %p334 = scmp.ne.s32.totalorder %s326, %s328
      %p335 = scmp.eq.s32.totalorder %s40, 3
      %p336 = por %p334, %p335
      %p337 = scmp.ne.s32.totalorder %s328, %s329
      %p338 = scmp.eq.s32.totalorder %s40, 0
      %p339 = por %p337, %p338
      %p340 = scmp.ne.s32.totalorder %s328, %s329
      %p341 = scmp.eq.s32.totalorder %s41, 3
      %p342 = por %p340, %p341
      %p344 = scmp.ne.s32.totalorder %s329, %s343
      %p345 = scmp.eq.s32.totalorder %s41, 0
      %p346 = por %p344, %p345
      %s348 = sadd.s32 %s347, 1
      %p351 = scmp.eq.s32.totalorder %s35, 3
      %p352 = scmp.ne.s32.totalorder %s347, %s349
      %p353 = scmp.eq.s32.totalorder %s35, 0
      %p354 = por %p352, %p353
      %p355 = scmp.ne.s32.totalorder %s347, %s349
      %p356 = scmp.eq.s32.totalorder %s40, 3
      %p357 = por %p355, %p356
      %p358 = scmp.ne.s32.totalorder %s349, %s350
      %p359 = scmp.eq.s32.totalorder %s40, 0
      %p360 = por %p358, %p359
      %p361 = scmp.ne.s32.totalorder %s349, %s350
      %p362 = scmp.eq.s32.totalorder %s41, 3
      %p363 = por %p361, %p362
      %p365 = scmp.ne.s32.totalorder %s350, %s364
      %p366 = scmp.eq.s32.totalorder %s41, 0
      %p367 = por %p365, %p366
      %s369 = sadd.s32 %s368, 1
      %p372 = scmp.eq.s32.totalorder %s35, 3
      %p373 = scmp.ne.s32.totalorder %s368, %s370
      %p374 = scmp.eq.s32.totalorder %s35, 0
      %p375 = por %p373, %p374
      %p376 = scmp.ne.s32.totalorder %s368, %s370
      %p377 = scmp.eq.s32.totalorder %s40, 3
      %p378 = por %p376, %p377
      %p379 = scmp.ne.s32.totalorder %s370, %s371
      %p380 = scmp.eq.s32.totalorder %s40, 0
      %p381 = por %p379, %p380
      %p382 = scmp.ne.s32.totalorder %s370, %s371
      %p383 = scmp.eq.s32.totalorder %s41, 3
      %p384 = por %p382, %p383
      %p386 = scmp.ne.s32.totalorder %s371, %s385
      %p387 = scmp.eq.s32.totalorder %s41, 0
      %p388 = por %p386, %p387
      %s390 = sadd.s32 %s389, 1
      %p393 = scmp.eq.s32.totalorder %s35, 3
      %p394 = scmp.ne.s32.totalorder %s389, %s391
      %p395 = scmp.eq.s32.totalorder %s35, 0
      %p396 = por %p394, %p395
      %p397 = scmp.ne.s32.totalorder %s389, %s391
      %p398 = scmp.eq.s32.totalorder %s40, 3
      %p399 = por %p397, %p398
      %p400 = scmp.ne.s32.totalorder %s391, %s392
      %p401 = scmp.eq.s32.totalorder %s40, 0
      %p402 = por %p400, %p401
      %p403 = scmp.ne.s32.totalorder %s391, %s392
      %p404 = scmp.eq.s32.totalorder %s41, 3
      %p405 = por %p403, %p404
      %p407 = scmp.ne.s32.totalorder %s392, %s406
      %p408 = scmp.eq.s32.totalorder %s41, 0
      %p409 = por %p407, %p408
      %s411 = sadd.s32 %s410, 1
      %p414 = scmp.eq.s32.totalorder %s35, 3
      %p415 = scmp.ne.s32.totalorder %s410, %s412
      %p416 = scmp.eq.s32.totalorder %s35, 0
      %p417 = por %p415, %p416
      %p418 = scmp.ne.s32.totalorder %s410, %s412
      %p419 = scmp.eq.s32.totalorder %s40, 3
      %p420 = por %p418, %p419
      %p421 = scmp.ne.s32.totalorder %s412, %s413
      %p422 = scmp.eq.s32.totalorder %s40, 0
      %p423 = por %p421, %p422
      %p424 = scmp.ne.s32.totalorder %s412, %s413
      %p425 = scmp.eq.s32.totalorder %s41, 3
      %p426 = por %p424, %p425
      %p428 = scmp.ne.s32.totalorder %s413, %s427
      %p429 = scmp.eq.s32.totalorder %s41, 0
      %p430 = por %p428, %p429
      %s432 = sadd.s32 %s431, 1
      %p435 = scmp.eq.s32.totalorder %s35, 3
      %p436 = scmp.ne.s32.totalorder %s431, %s433
      %p437 = scmp.eq.s32.totalorder %s35, 0
      %p438 = por %p436, %p437
      %p439 = scmp.ne.s32.totalorder %s431, %s433
      %p440 = scmp.eq.s32.totalorder %s40, 3
      %p441 = por %p439, %p440
      %p442 = scmp.ne.s32.totalorder %s433, %s434
      %p443 = scmp.eq.s32.totalorder %s40, 0
      %p444 = por %p442, %p443
      %p445 = scmp.ne.s32.totalorder %s433, %s434
      %p446 = scmp.eq.s32.totalorder %s41, 3
      %p447 = por %p445, %p446
      %p449 = scmp.ne.s32.totalorder %s434, %s448
      %p450 = scmp.eq.s32.totalorder %s41, 0
      %p451 = por %p449, %p450
      %s453 = sadd.s32 %s452, 1
      %p456 = scmp.eq.s32.totalorder %s35, 3
      %p457 = scmp.ne.s32.totalorder %s452, %s454
      %p458 = scmp.eq.s32.totalorder %s35, 0
      %p459 = por %p457, %p458
      %p460 = scmp.ne.s32.totalorder %s452, %s454
      %p461 = scmp.eq.s32.totalorder %s40, 3
      %p462 = por %p460, %p461
      %p463 = scmp.ne.s32.totalorder %s454, %s455
      %p464 = scmp.eq.s32.totalorder %s40, 0
      %p465 = por %p463, %p464
      %p466 = scmp.ne.s32.totalorder %s454, %s455
      %p467 = scmp.eq.s32.totalorder %s41, 3
      %p468 = por %p466, %p467
      %p470 = scmp.ne.s32.totalorder %s455, %s469
      %p471 = scmp.eq.s32.totalorder %s41, 0
      %p472 = por %p470, %p471
      %s473 = ssub.s32 %s42, %s54
      %s474 = ssub.s32 %s43, %s50
      %s475 = sor.u32 %s473, %s474
      %p476 = scmp.eq.s32.totalorder %s475, 0
      %s478 = sadd.s32 %s477, 1
      %s479 = scalar_select %p476, %s477, %s478
      %p482 = pneg %p476
      %p483 = scmp.eq.s32.totalorder %s35, 3
      %p484 = por %p482, %p483
      %p485 = scmp.ne.s32.totalorder %s477, %s480
      %p486 = scmp.eq.s32.totalorder %s35, 0
      %p487 = por %p485, %p486
      %p488 = scmp.ne.s32.totalorder %s477, %s480
      %p489 = scmp.eq.s32.totalorder %s40, 3
      %p490 = por %p488, %p489
      %p491 = scmp.ne.s32.totalorder %s480, %s481
      %p492 = scmp.eq.s32.totalorder %s40, 0
      %p493 = por %p491, %p492
      %p494 = scmp.ne.s32.totalorder %s480, %s481
      %p495 = scmp.eq.s32.totalorder %s41, 3
      %p496 = por %p494, %p495
      %p498 = scmp.ne.s32.totalorder %s481, %s497
      %p499 = scmp.eq.s32.totalorder %s41, 0
      %p500 = por %p498, %p499
      %p501 = scmp.le.s32.totalorder 1, %s35
      %p502 = scmp.lt.s32.totalorder %s35, 5
      %p503 = pnand %p501, %p502
      %p504 = pneg %p503
      // Predicated region
      $region9: #{tpu_custom_call.1} parent=5 // pred_check
        _
      $region10: #{tpu_custom_call.1} parent=5 // pred_check_branch
        %506 = sbr.rel (%p503) target = $region12
      $region11: #{tpu_custom_call.1} parent=5 // pred_region
        %s507 = ssub.s32 %s35, 1
        // Predicated region
        $region13: #{tpu_custom_call.1} parent=11 // pred_check
          %p508 = pneg %p150
        $region14: #{tpu_custom_call.1} parent=11 // pred_check_branch
          %510 = sbr.rel (%p508) target = $region16
        $region15: #{tpu_custom_call.1} parent=11 // pred_region
          %s512 = ssub.s32 256, 256
          %513 = vsyncadd [#allocation10], %s512
          %s514 = sshll.u32 [#allocation9], 4
          %s515 = int_to_ptr.vmem [resolvable:$true] %s514
          %520 = dma.hbm_to_vmem [thread:$0]  %s3, 256, %s515, [#allocation10], 64, 64, 4
        $region16: #{tpu_custom_call.1} parent=11 // pred_fallthru
          _
        // Predicated region
        $region17: #{tpu_custom_call.1} parent=11 // pred_check
          %p521 = pneg %p171
        $region18: #{tpu_custom_call.1} parent=11 // pred_check_branch
          %523 = sbr.rel (%p521) target = $region20
        $region19: #{tpu_custom_call.1} parent=11 // pred_region
          _
        $region20: #{tpu_custom_call.1} parent=11 // pred_fallthru
          _
        // Predicated region
        $region21: #{tpu_custom_call.1} parent=11 // pred_check
          %p524 = pneg %p192
        $region22: #{tpu_custom_call.1} parent=11 // pred_check_branch
          %526 = sbr.rel (%p524) target = $region24
        $region23: #{tpu_custom_call.1} parent=11 // pred_region
          %s528 = ssub.s32 256, 256
          %529 = vsyncadd [#allocation10], %s528
          %s530 = sshll.u32 [#allocation11], 4
          %s531 = int_to_ptr.vmem [resolvable:$true] %s530
          %536 = dma.hbm_to_vmem [thread:$0]  %s5, 256, %s531, [#allocation10], 64, 64, 4
        $region24: #{tpu_custom_call.1} parent=11 // pred_fallthru
          _
        // Predicated region
        $region25: #{tpu_custom_call.1} parent=11 // pred_check
          %p537 = pneg %p213
        $region26: #{tpu_custom_call.1} parent=11 // pred_check_branch
          %539 = sbr.rel (%p537) target = $region28
        $region27: #{tpu_custom_call.1} parent=11 // pred_region
          %s541 = ssub.s32 16, 16
          %542 = vsyncadd [#allocation13], %s541
          %s544 = sshll.u32 [#allocation12], 4
          %s545 = int_to_ptr.vmem [resolvable:$true] %s544
          %547 = dma.hbm_to_vmem [thread:$0]  %s6, 16, %s545, [#allocation13]
        $region28: #{tpu_custom_call.1} parent=11 // pred_fallthru
          _
        // Predicated region
        $region29: #{tpu_custom_call.1} parent=11 // pred_check
          %p548 = pneg %p234
        $region30: #{tpu_custom_call.1} parent=11 // pred_check_branch
          %550 = sbr.rel (%p548) target = $region32
        $region31: #{tpu_custom_call.1} parent=11 // pred_region
          %s552 = ssub.s32 256, 256
          %553 = vsyncadd [#allocation13], %s552
          %s554 = sshll.u32 [#allocation14], 4
          %s555 = int_to_ptr.vmem [resolvable:$true] %s554
          %560 = dma.hbm_to_vmem [thread:$0]  %s7, 256, %s555, [#allocation13], 64, 64, 4
        $region32: #{tpu_custom_call.1} parent=11 // pred_fallthru
          _
        // Predicated region
        $region33: #{tpu_custom_call.1} parent=11 // pred_check
          %p561 = pneg %p255
        $region34: #{tpu_custom_call.1} parent=11 // pred_check_branch
          %563 = sbr.rel (%p561) target = $region36
        $region35: #{tpu_custom_call.1} parent=11 // pred_region
          %s565 = ssub.s32 16, 16
          %566 = vsyncadd [#allocation16], %s565
          %s568 = sshll.u32 [#allocation15], 4
          %s569 = int_to_ptr.vmem [resolvable:$true] %s568
          %571 = dma.hbm_to_vmem [thread:$0]  %s8, 16, %s569, [#allocation16]
        $region36: #{tpu_custom_call.1} parent=11 // pred_fallthru
          _
        // Predicated region
        $region37: #{tpu_custom_call.1} parent=11 // pred_check
          %p572 = pneg %p276
        $region38: #{tpu_custom_call.1} parent=11 // pred_check_branch
          %574 = sbr.rel (%p572) target = $region40
        $region39: #{tpu_custom_call.1} parent=11 // pred_region
          _
        $region40: #{tpu_custom_call.1} parent=11 // pred_fallthru
          _
        // Predicated region
        $region41: #{tpu_custom_call.1} parent=11 // pred_check
          %p575 = pneg %p297
        $region42: #{tpu_custom_call.1} parent=11 // pred_check_branch
          %577 = sbr.rel (%p575) target = $region44
        $region43: #{tpu_custom_call.1} parent=11 // pred_region
          %s579 = ssub.s32 16, 16
          %580 = vsyncadd [#allocation16], %s579
          %s582 = sshll.u32 [#allocation17], 4
          %s583 = int_to_ptr.vmem [resolvable:$true] %s582
          %585 = dma.hbm_to_vmem [thread:$0]  %s10, 16, %s583, [#allocation16]
        $region44: #{tpu_custom_call.1} parent=11 // pred_fallthru
          _
        // Predicated region
        $region45: #{tpu_custom_call.1} parent=11 // pred_check
          %p586 = pneg %p318
        $region46: #{tpu_custom_call.1} parent=11 // pred_check_branch
          %588 = sbr.rel (%p586) target = $region48
        $region47: #{tpu_custom_call.1} parent=11 // pred_region
          %s590 = ssub.s32 16, 16
          %591 = vsyncadd [#allocation19], %s590
          %s593 = sshll.u32 [#allocation18], 4
          %s594 = int_to_ptr.vmem [resolvable:$true] %s593
          %596 = dma.hbm_to_vmem [thread:$0]  %s11, 16, %s594, [#allocation19]
        $region48: #{tpu_custom_call.1} parent=11 // pred_fallthru
          _
        // Predicated region
        $region49: #{tpu_custom_call.1} parent=11 // pred_check
          %p597 = pneg %p339
        $region50: #{tpu_custom_call.1} parent=11 // pred_check_branch
          %599 = sbr.rel (%p597) target = $region52
        $region51: #{tpu_custom_call.1} parent=11 // pred_region
          %s601 = ssub.s32 16, 16
          %602 = vsyncadd [#allocation19], %s601
          %s604 = sshll.u32 [#allocation20], 4
          %s605 = int_to_ptr.vmem [resolvable:$true] %s604
          %607 = dma.hbm_to_vmem [thread:$0]  %s12, 16, %s605, [#allocation19]
        $region52: #{tpu_custom_call.1} parent=11 // pred_fallthru
          _
        // Predicated region
        $region53: #{tpu_custom_call.1} parent=11 // pred_check
          %p608 = pneg %p360
        $region54: #{tpu_custom_call.1} parent=11 // pred_check_branch
          %610 = sbr.rel (%p608) target = $region56
        $region55: #{tpu_custom_call.1} parent=11 // pred_region
          _
        $region56: #{tpu_custom_call.1} parent=11 // pred_fallthru
          _
        // Predicated region
        $region57: #{tpu_custom_call.1} parent=11 // pred_check
          %p611 = pneg %p381
        $region58: #{tpu_custom_call.1} parent=11 // pred_check_branch
          %613 = sbr.rel (%p611) target = $region60
        $region59: #{tpu_custom_call.1} parent=11 // pred_region
          _
        $region60: #{tpu_custom_call.1} parent=11 // pred_fallthru
          _
        // Predicated region
        $region61: #{tpu_custom_call.1} parent=11 // pred_check
          %p614 = pneg %p402
        $region62: #{tpu_custom_call.1} parent=11 // pred_check_branch
          %616 = sbr.rel (%p614) target = $region64
        $region63: #{tpu_custom_call.1} parent=11 // pred_region
          _
        $region64: #{tpu_custom_call.1} parent=11 // pred_fallthru
          _
        // Predicated region
        $region65: #{tpu_custom_call.1} parent=11 // pred_check
          %p617 = pneg %p423
        $region66: #{tpu_custom_call.1} parent=11 // pred_check_branch
          %619 = sbr.rel (%p617) target = $region68
        $region67: #{tpu_custom_call.1} parent=11 // pred_region
          _
        $region68: #{tpu_custom_call.1} parent=11 // pred_fallthru
          _
        // Predicated region
        $region69: #{tpu_custom_call.1} parent=11 // pred_check
          %p620 = pneg %p444
        $region70: #{tpu_custom_call.1} parent=11 // pred_check_branch
          %622 = sbr.rel (%p620) target = $region72
        $region71: #{tpu_custom_call.1} parent=11 // pred_region
          _
        $region72: #{tpu_custom_call.1} parent=11 // pred_fallthru
          _
        // Predicated region
        $region73: #{tpu_custom_call.1} parent=11 // pred_check
          %p623 = pneg %p465
        $region74: #{tpu_custom_call.1} parent=11 // pred_check_branch
          %625 = sbr.rel (%p623) target = $region76
        $region75: #{tpu_custom_call.1} parent=11 // pred_region
          _
        $region76: #{tpu_custom_call.1} parent=11 // pred_fallthru
          _
      $region12: #{tpu_custom_call.1} parent=5 // pred_fallthru
        _
      %p626 = scmp.lt.s32.totalorder %s35, 4
      // Predicated region
      $region77: #{tpu_custom_call.1} parent=5 // pred_check
        %p627 = pneg %p626
      $region78: #{tpu_custom_call.1} parent=5 // pred_check_branch
        %629 = sbr.rel (%p627) target = $region80
      $region79: #{tpu_custom_call.1} parent=5 // pred_region
        // Predicated region
        $region81: #{tpu_custom_call.1} parent=79 // pred_check
          %p630 = pneg %p69
        $region82: #{tpu_custom_call.1} parent=79 // pred_check_branch
          %632 = sbr.rel (%p630) target = $region84
        $region83: #{tpu_custom_call.1} parent=79 // pred_region
          %p633 = scmp.lt.s32.totalorder %s42, 1
          %s634 = scalar_select %p633, %s42, 1
          %p635 = scmp.lt.s32.totalorder %s43, 1
          %s636 = scalar_select %p635, %s43, 1
          %s637 = smul.addr %s634, 2
          %s638 = sadd.s32 %s636, %s637
          %s639 = smul.addr %s638, 8
          %s640 = scalar_lea.vmem %s0, %s639
        $region84: #{tpu_custom_call.1} parent=79 // pred_fallthru
          _
        // Predicated region
        $region85: #{tpu_custom_call.1} parent=79 // pred_check
          %p641 = pneg %p95
        $region86: #{tpu_custom_call.1} parent=79 // pred_check_branch
          %643 = sbr.rel (%p641) target = $region88
        $region87: #{tpu_custom_call.1} parent=79 // pred_region
          %p644 = scmp.lt.s32.totalorder %s42, 1
          %s645 = scalar_select %p644, %s42, 1
          %s646 = smul.addr %s645, 2
          %s647 = smul.addr %s646, 4
          %s648 = scalar_lea.vmem %s1, %s647
        $region88: #{tpu_custom_call.1} parent=79 // pred_fallthru
          _
        // Predicated region
        $region89: #{tpu_custom_call.1} parent=79 // pred_check
          %p649 = pneg %p123
        $region90: #{tpu_custom_call.1} parent=79 // pred_check_branch
          %651 = sbr.rel (%p649) target = $region92
        $region91: #{tpu_custom_call.1} parent=79 // pred_region
          %s652 = sand.u32 %s113, 1
          %s653 = scalar_lea.sflag [#allocation7], %s652
          %s654 = sand.u32 %s113, 1
          %s655 = smul.addr %s654, 4
          %s656 = scalar_lea.vmem [#allocation6], %s655
          %s658 = ssub.s32 64, 64
          %659 = vsyncadd %s653, %s658
          %s660 = smul.addr %s42, 2
          %s661 = sadd.s32 %s43, %s660
          %s662 = smul.addr %s661, 64
          %s663 = scalar_lea.hbm %s2, %s662
          %s665 = sshll.u32 %s656, 4
          %s666 = int_to_ptr.vmem [resolvable:$true] %s665
          %668 = dma.hbm_to_vmem [thread:$0]  %s663, 64, %s666, %s653
        $region92: #{tpu_custom_call.1} parent=79 // pred_fallthru
          _
      $region80: #{tpu_custom_call.1} parent=5 // pred_fallthru
        _
      %p669 = scmp.le.s32.totalorder 1, %s35
      %p670 = scmp.lt.s32.totalorder %s35, 5
      %p671 = pnand %p669, %p670
      %p672 = pneg %p671
      // Predicated region
      $region93: #{tpu_custom_call.1} parent=5 // pred_check
        _
      $region94: #{tpu_custom_call.1} parent=5 // pred_check_branch
        %674 = sbr.rel (%p671) target = $region96
      $region95: #{tpu_custom_call.1} parent=5 // pred_region
        %s675 = ssub.s32 %s35, 1
        %s676 = sand.u32 %s116, 1
        %s677 = scalar_lea.sflag [#allocation7], %s676
        %s678 = sand.u32 %s116, 1
        %s679 = smul.addr %s678, 4
        %s680 = scalar_lea.vmem [#allocation6], %s679
        // Predicated region
        $region97: #{tpu_custom_call.1} parent=95 // pred_check
          %p681 = pneg %p129
        $region98: #{tpu_custom_call.1} parent=95 // pred_check_branch
          %683 = sbr.rel (%p681) target = $region100
        $region99: #{tpu_custom_call.1} parent=95 // pred_region
          %684 = dma.done %s677, 64
        $region100: #{tpu_custom_call.1} parent=95 // pred_fallthru
          _
        // Predicated region
        $region101: #{tpu_custom_call.1} parent=95 // pred_check
          %p685 = pneg %p150
        $region102: #{tpu_custom_call.1} parent=95 // pred_check_branch
          %687 = sbr.rel (%p685) target = $region104
        $region103: #{tpu_custom_call.1} parent=95 // pred_region
          %688 = dma.done [#allocation10], 256
        $region104: #{tpu_custom_call.1} parent=95 // pred_fallthru
          _
        // Predicated region
        $region105: #{tpu_custom_call.1} parent=95 // pred_check
          %p689 = pneg %p192
        $region106: #{tpu_custom_call.1} parent=95 // pred_check_branch
          %691 = sbr.rel (%p689) target = $region108
        $region107: #{tpu_custom_call.1} parent=95 // pred_region
          %692 = dma.done [#allocation10], 256
        $region108: #{tpu_custom_call.1} parent=95 // pred_fallthru
          _
        // Predicated region
        $region109: #{tpu_custom_call.1} parent=95 // pred_check
          %p693 = pneg %p213
        $region110: #{tpu_custom_call.1} parent=95 // pred_check_branch
          %695 = sbr.rel (%p693) target = $region112
        $region111: #{tpu_custom_call.1} parent=95 // pred_region
          %696 = dma.done [#allocation13], 16
        $region112: #{tpu_custom_call.1} parent=95 // pred_fallthru
          _
        // Predicated region
        $region113: #{tpu_custom_call.1} parent=95 // pred_check
          %p697 = pneg %p234
        $region114: #{tpu_custom_call.1} parent=95 // pred_check_branch
          %699 = sbr.rel (%p697) target = $region116
        $region115: #{tpu_custom_call.1} parent=95 // pred_region
          %700 = dma.done [#allocation13], 256
        $region116: #{tpu_custom_call.1} parent=95 // pred_fallthru
          _
        // Predicated region
        $region117: #{tpu_custom_call.1} parent=95 // pred_check
          %p701 = pneg %p255
        $region118: #{tpu_custom_call.1} parent=95 // pred_check_branch
          %703 = sbr.rel (%p701) target = $region120
        $region119: #{tpu_custom_call.1} parent=95 // pred_region
          %704 = dma.done [#allocation16], 16
        $region120: #{tpu_custom_call.1} parent=95 // pred_fallthru
          _
        // Predicated region
        $region121: #{tpu_custom_call.1} parent=95 // pred_check
          %p705 = pneg %p297
        $region122: #{tpu_custom_call.1} parent=95 // pred_check_branch
          %707 = sbr.rel (%p705) target = $region124
        $region123: #{tpu_custom_call.1} parent=95 // pred_region
          %708 = dma.done [#allocation16], 16
        $region124: #{tpu_custom_call.1} parent=95 // pred_fallthru
          _
        // Predicated region
        $region125: #{tpu_custom_call.1} parent=95 // pred_check
          %p709 = pneg %p318
        $region126: #{tpu_custom_call.1} parent=95 // pred_check_branch
          %711 = sbr.rel (%p709) target = $region128
        $region127: #{tpu_custom_call.1} parent=95 // pred_region
          %712 = dma.done [#allocation19], 16
        $region128: #{tpu_custom_call.1} parent=95 // pred_fallthru
          _
        // Predicated region
        $region129: #{tpu_custom_call.1} parent=95 // pred_check
          %p713 = pneg %p339
        $region130: #{tpu_custom_call.1} parent=95 // pred_check_branch
          %715 = sbr.rel (%p713) target = $region132
        $region131: #{tpu_custom_call.1} parent=95 // pred_region
          %716 = dma.done [#allocation19], 16
        $region132: #{tpu_custom_call.1} parent=95 // pred_fallthru
          _
        %p717 = scmp.lt.s32.totalorder %s44, 1
        %s718 = scalar_select %p717, %s44, 1
        %p719 = scmp.lt.s32.totalorder %s45, 1
        %s720 = scalar_select %p719, %s45, 1
        %s721 = smul.addr %s718, 2
        %s722 = sadd.s32 %s720, %s721
        %s723 = smul.addr %s722, 8
        %s724 = scalar_lea.vmem %s0, %s723
        %p725 = pneg %p75
        %p726 = pneg %p72
        %p727 = scmp.lt.s32.totalorder %s44, 1
        %s728 = scalar_select %p727, %s44, 1
        %s729 = smul.addr %s728, 2
        %s730 = smul.addr %s729, 4
        %s731 = scalar_lea.vmem %s1, %s730
        %p732 = pneg %p101
        %p733 = pneg %p98
        %s734 = sand.u32 %s116, 1
        %s735 = scalar_lea.sflag [#allocation7], %s734
        %s736 = sand.u32 %s116, 1
        %s737 = smul.addr %s736, 4
        %s738 = scalar_lea.vmem [#allocation6], %s737
        %p739 = pneg %p129
        %p740 = pneg %p126
        %p741 = pneg %p150
        %p742 = pneg %p147
        %p743 = pneg %p171
        %p744 = pneg %p168
        %p745 = pneg %p192
        %p746 = pneg %p189
        %p747 = pneg %p213
        %p748 = pneg %p210
        %p749 = pneg %p234
        %p750 = pneg %p231
        %p751 = pneg %p255
        %p752 = pneg %p252
        %p753 = pneg %p276
        %p754 = pneg %p273
        %p755 = pneg %p297
        %p756 = pneg %p294
        %p757 = pneg %p318
        %p758 = pneg %p315
        %p759 = pneg %p339
        %p760 = pneg %p336
        %p761 = pneg %p360
        %p762 = pneg %p357
        %p763 = pneg %p381
        %p764 = pneg %p378
        %p765 = pneg %p402
        %p766 = pneg %p399
        %p767 = pneg %p423
        %p768 = pneg %p420
        %p769 = pneg %p444
        %p770 = pneg %p441
        %p771 = pneg %p465
        %p772 = pneg %p462
        %p773 = pneg %p493
        %p774 = pneg %p490
        %s775 = sand.u32 %s480, 1
        %s776 = scalar_lea.sflag [#allocation8], %s775
        %s777 = sand.u32 %s480, 1
        %s778 = smul.addr %s777, 8
        %s779 = scalar_lea.vmem [#allocation21], %s778
        %p780 = scmp.lt.s32.totalorder %s44, 1
        %s781 = scalar_select %p780, %s44, 1
        %p782 = scmp.lt.s32.totalorder %s45, 1
        %s783 = scalar_select %p782, %s45, 1
        %s784 = smul.addr %s781, 2
        %s785 = sadd.s32 %s783, %s784
        %s786 = smul.addr %s785, 8
        %s787 = scalar_lea.vmem %s0, %s786
        %p788 = scmp.lt.s32.totalorder %s44, 1
        %s789 = scalar_select %p788, %s44, 1
        %s790 = smul.addr %s789, 2
        %s791 = smul.addr %s790, 4
        %s792 = scalar_lea.vmem %s1, %s791
        %p794 = scmp.eq.s32.totalorder %s45, 0
        // Predicated region
        $region133: #{tpu_custom_call.1} parent=95 // pred_check
          %p795 = pneg %p794
        $region134: #{tpu_custom_call.1} parent=95 // pred_check_branch
          %797 = sbr.rel (%p795) target = $region136
        $region135: #{tpu_custom_call.1} parent=95 // pred_region
          %v798 = vld [vmem:[%s792] sm:$0xf]
          %v799 = vld [vmem:[%s792 + $0x4] sm:$0xf]
          %v800 = vld [vmem:[#allocation11] sm:$0xf]
          %v801 = vld [vmem:[#allocation11 + $0x4] sm:$0xf]
          %v802 = vld [vmem:[#allocation11 + $0x8] sm:$0xf]
          %v803 = vld [vmem:[#allocation11 + $0xc] sm:$0xf]
          %v804 = vld [vmem:[#allocation12] sm:$0x1]
          %v806 = vlaneseq
          %v807 = vshrl.u32 %v806, 7
          %v808 = vsub.s32 0, %v807
          %v809 = vrot.slane %v804, %v808
          %v813 = vunpack.c.l.b16 %v798
          %v814 = vunpack.c.l.b16 %v799
          %v815 = vpack.c.b16 %v814, %v813
          %v820 = vunpack.c.l.b16 %v800
          %v821 = vunpack.c.l.b16 %v801
          %v822 = vunpack.c.l.b16 %v802
          %v823 = vunpack.c.l.b16 %v803
          %v824 = vpack.c.b16 %v821, %v820
          %v825 = vpack.c.b16 %v823, %v822
          %vm828 = vcmask 261120
          %v830 = vsel %vm828, %v815, 0
          %832 = vmatprep.subr.bf16.mxu0 0
          %833 = vmatpush1.bf16.msra.mxu0 %v824
          %834 = vmatprep.subr.bf16.mxu0 0
          %835 = vmatpush1.bf16.msra.mxu0 %v825
          %836 = vmatprep.subr.bf16.mxu0 0
          %837 = vmatpush1.bf16.msra.mxu0 0
          %838 = vmatprep.subr.bf16.mxu0 0
          %839 = vmatpush1.bf16.msra.mxu0 0
          %840 = vmatprep.subr.bf16.mxu0 0
          %841 = vmatpush1.bf16.msra.mxu0 0
          %842 = vmatprep.subr.bf16.mxu0 0
          %843 = vmatpush1.bf16.msra.mxu0 0
          %844 = vmatprep.subr.bf16.mxu0 0
          %845 = vmatpush1.bf16.msra.mxu0 0
          %846 = vmatprep.subr.bf16.mxu0 0
          %847 = vmatpush1.bf16.msra.mxu0 0
          %848 = vmatprep.subr.bf16.mxu0 0
          %849 = vmatpush1.bf16.msra.mxu0 0
          %850 = vmatprep.subr.bf16.mxu0 0
          %851 = vmatpush1.bf16.msra.mxu0 0
          %852 = vmatprep.subr.bf16.mxu0 0
          %853 = vmatpush1.bf16.msra.mxu0 0
          %854 = vmatprep.subr.bf16.mxu0 0
          %855 = vmatpush1.bf16.msra.mxu0 0
          %856 = vmatprep.subr.bf16.mxu0 0
          %857 = vmatpush1.bf16.msra.mxu0 0
          %858 = vmatprep.subr.bf16.mxu0 0
          %859 = vmatpush1.bf16.msra.mxu0 0
          %860 = vmatprep.subr.bf16.mxu0 0
          %861 = vmatpush1.bf16.msra.mxu0 0
          %862 = vmatprep.subr.bf16.mxu0 0
          %863 = vmatpush1.bf16.msra.mxu0 0
          %864 = vmatprep.mubr.bf16.mxu0 0
          %865 = vmatmul.mubr.bf16.gmra.mrb[0].mxu0 %v830
          %v866 = vpop.f32.mrb[0].mxu0
          %v867 = vadd.f32 %v809, %v866
          %v868 = vpop.f32.mrb[0].mxu0
          %v869 = vpop.f32.mrb[0].mxu0
          %v870 = vadd.f32 %v809, %v869
          %v871 = vpop.f32.mrb[0].mxu0
          %872 = vdwg.mxu0
          %v873 = vld [vmem:[#allocation14] sm:$0xf]
          %v874 = vld [vmem:[#allocation14 + $0x4] sm:$0xf]
          %v875 = vld [vmem:[#allocation14 + $0x8] sm:$0xf]
          %v876 = vld [vmem:[#allocation14 + $0xc] sm:$0xf]
          %v877 = vld [vmem:[#allocation15] sm:$0x1]
          %v879 = vlaneseq
          %v880 = vshrl.u32 %v879, 7
          %v881 = vsub.s32 0, %v880
          %v882 = vrot.slane %v877, %v881
          %v888 = vunpack.c.l.b16 %v873
          %v889 = vunpack.c.l.b16 %v874
          %v890 = vunpack.c.l.b16 %v875
          %v891 = vunpack.c.l.b16 %v876
          %v892 = vpack.c.b16 %v889, %v888
          %v893 = vpack.c.b16 %v891, %v890
          %896 = vmatprep.subr.bf16.mxu0 0
          %897 = vmatpush1.bf16.msra.mxu0 %v892
          %898 = vmatprep.subr.bf16.mxu0 0
          %899 = vmatpush1.bf16.msra.mxu0 %v893
          %900 = vmatprep.subr.bf16.mxu0 0
          %901 = vmatpush1.bf16.msra.mxu0 0
          %902 = vmatprep.subr.bf16.mxu0 0
          %903 = vmatpush1.bf16.msra.mxu0 0
          %904 = vmatprep.subr.bf16.mxu0 0
          %905 = vmatpush1.bf16.msra.mxu0 0
          %906 = vmatprep.subr.bf16.mxu0 0
          %907 = vmatpush1.bf16.msra.mxu0 0
          %908 = vmatprep.subr.bf16.mxu0 0
          %909 = vmatpush1.bf16.msra.mxu0 0
          %910 = vmatprep.subr.bf16.mxu0 0
          %911 = vmatpush1.bf16.msra.mxu0 0
          %912 = vmatprep.subr.bf16.mxu0 0
          %913 = vmatpush1.bf16.msra.mxu0 0
          %914 = vmatprep.subr.bf16.mxu0 0
          %915 = vmatpush1.bf16.msra.mxu0 0
          %916 = vmatprep.subr.bf16.mxu0 0
          %917 = vmatpush1.bf16.msra.mxu0 0
          %918 = vmatprep.subr.bf16.mxu0 0
          %919 = vmatpush1.bf16.msra.mxu0 0
          %920 = vmatprep.subr.bf16.mxu0 0
          %921 = vmatpush1.bf16.msra.mxu0 0
          %922 = vmatprep.subr.bf16.mxu0 0
          %923 = vmatpush1.bf16.msra.mxu0 0
          %924 = vmatprep.subr.bf16.mxu0 0
          %925 = vmatpush1.bf16.msra.mxu0 0
          %926 = vmatprep.subr.bf16.mxu0 0
          %927 = vmatpush1.bf16.msra.mxu0 0
          %928 = vmatprep.mubr.bf16.mxu0 0
          %929 = vmatmul.mubr.bf16.gmra.mrb[0].mxu0 %v830
          %v930 = vpop.f32.mrb[0].mxu0
          %v931 = vadd.f32 %v882, %v930
          %v932 = vpop.f32.mrb[0].mxu0
          %v933 = vpop.f32.mrb[0].mxu0
          %v934 = vadd.f32 %v882, %v933
          %v935 = vpop.f32.mrb[0].mxu0
          %936 = vdwg.mxu0
          %v937 = vpack.c.bf16 %v870, %v867
          %vm938 = vcmask 64512
          %939 = vst.msk [vmem:[#allocation3] sm:$0xff] %vm938, %v937
          %v940 = vpack.c.bf16 %v934, %v931
          %941 = vst.msk [vmem:[#allocation4] sm:$0xff] %vm938, %v940
          %943 = vrot.lane.b32.xlu0 %v937, 120
          %v944 = vpop.permute.xlu0 %943
          %s946 = scalar_lea.vmem [#allocation3], 8
          %947 = vst.msk [vmem:[%s946] sm:$0xff] %vm938, %v944
          %949 = vrot.lane.b32.xlu0 %v940, 120
          %v950 = vpop.permute.xlu0 %949
          %s952 = scalar_lea.vmem [#allocation4], 8
          %953 = vst.msk [vmem:[%s952] sm:$0xff] %vm938, %v950
          %954 = vrot.lane.b32.xlu0 %v937, 112
          %v955 = vpop.permute.xlu0 %954
          %s957 = scalar_lea.vmem [#allocation3], 16
          %958 = vst.msk [vmem:[%s957] sm:$0xff] %vm938, %v955
          %959 = vrot.lane.b32.xlu0 %v940, 112
          %v960 = vpop.permute.xlu0 %959
          %s962 = scalar_lea.vmem [#allocation4], 16
          %963 = vst.msk [vmem:[%s962] sm:$0xff] %vm938, %v960
          %964 = vrot.lane.b32.xlu0 %v937, 104
          %v965 = vpop.permute.xlu0 %964
          %s967 = scalar_lea.vmem [#allocation3], 24
          %968 = vst.msk [vmem:[%s967] sm:$0xff] %vm938, %v965
          %969 = vrot.lane.b32.xlu0 %v940, 104
          %v970 = vpop.permute.xlu0 %969
          %s972 = scalar_lea.vmem [#allocation4], 24
          %973 = vst.msk [vmem:[%s972] sm:$0xff] %vm938, %v970
        $region136: #{tpu_custom_call.1} parent=95 // pred_fallthru
          _
        %v974 = vld [vmem:[%s787] sm:$0xff]
        %v975 = vpack.c.bf16 %v974, %v974
        %v976 = vld [vmem:[#allocation9] sm:$0xf]
        %v977 = vld [vmem:[#allocation9 + $0x4] sm:$0xf]
        %v978 = vld [vmem:[#allocation9 + $0x8] sm:$0xf]
        %v979 = vld [vmem:[#allocation9 + $0xc] sm:$0xf]
        %v980 = vld [vmem:[%s4] sm:$0x1]
        %v982 = vlaneseq
        %v983 = vshrl.u32 %v982, 7
        %v984 = vsub.s32 0, %v983
        %v985 = vrot.slane %v980, %v984
        %v991 = vunpack.c.l.b16 %v976
        %v992 = vunpack.c.l.b16 %v977
        %v993 = vunpack.c.l.b16 %v978
        %v994 = vunpack.c.l.b16 %v979
        %v995 = vpack.c.b16 %v992, %v991
        %v996 = vpack.c.b16 %v994, %v993
        %vm999 = vcmask 261120
        %v1001 = vsel %vm999, %v975, 0
        %1003 = vmatprep.subr.bf16.mxu0 0
        %1004 = vmatpush1.bf16.msra.mxu0 %v995
        %1005 = vmatprep.subr.bf16.mxu0 0
        %1006 = vmatpush1.bf16.msra.mxu0 %v996
        %1007 = vmatprep.subr.bf16.mxu0 0
        %1008 = vmatpush1.bf16.msra.mxu0 0
        %1009 = vmatprep.subr.bf16.mxu0 0
        %1010 = vmatpush1.bf16.msra.mxu0 0
        %1011 = vmatprep.subr.bf16.mxu0 0
        %1012 = vmatpush1.bf16.msra.mxu0 0
        %1013 = vmatprep.subr.bf16.mxu0 0
        %1014 = vmatpush1.bf16.msra.mxu0 0
        %1015 = vmatprep.subr.bf16.mxu0 0
        %1016 = vmatpush1.bf16.msra.mxu0 0
        %1017 = vmatprep.subr.bf16.mxu0 0
        %1018 = vmatpush1.bf16.msra.mxu0 0
        %1019 = vmatprep.subr.bf16.mxu0 0
        %1020 = vmatpush1.bf16.msra.mxu0 0
        %1021 = vmatprep.subr.bf16.mxu0 0
        %1022 = vmatpush1.bf16.msra.mxu0 0
        %1023 = vmatprep.subr.bf16.mxu0 0
        %1024 = vmatpush1.bf16.msra.mxu0 0
        %1025 = vmatprep.subr.bf16.mxu0 0
        %1026 = vmatpush1.bf16.msra.mxu0 0
        %1027 = vmatprep.subr.bf16.mxu0 0
        %1028 = vmatpush1.bf16.msra.mxu0 0
        %1029 = vmatprep.subr.bf16.mxu0 0
        %1030 = vmatpush1.bf16.msra.mxu0 0
        %1031 = vmatprep.subr.bf16.mxu0 0
        %1032 = vmatpush1.bf16.msra.mxu0 0
        %1033 = vmatprep.subr.bf16.mxu0 0
        %1034 = vmatpush1.bf16.msra.mxu0 0
        %1035 = vmatprep.mubr.bf16.mxu0 0
        %1036 = vmatmul.mubr.bf16.gmra.mrb[0].mxu0 %v1001
        %v1037 = vpop.f32.mrb[0].mxu0
        %v1038 = vadd.f32 %v985, %v1037
        %v1039 = vpop.f32.mrb[0].mxu0
        %v1040 = vpop.f32.mrb[0].mxu0
        %v1041 = vpop.f32.mrb[0].mxu0
        %1042 = vdwg.mxu0
        %v1043 = vmul.f32 %v1038, 0.35355338
        %v1044 = vpack.c.bf16 %v1043, %v1043
        %vm1045 = vcmask 60416
        %1046 = vst.msk [vmem:[#allocation2] sm:$0xf] %vm1045, %v1044
        %v1048 = vunpack.c.l.b16 %v1044
        %v1049 = vpack.c.b16 %v1048, %v1048
        %1050 = vrot.lane.b32.xlu0 %v1049, 120
        %v1051 = vpop.permute.xlu0 %1050
        %s1053 = scalar_lea.vmem [#allocation2], 4
        %1054 = vst.msk [vmem:[%s1053] sm:$0xf] %vm1045, %v1051
        %1055 = vrot.lane.b32.xlu0 %v1049, 112
        %v1056 = vpop.permute.xlu0 %1055
        %s1058 = scalar_lea.vmem [#allocation2], 8
        %1059 = vst.msk [vmem:[%s1058] sm:$0xf] %vm1045, %v1056
        %1060 = vrot.lane.b32.xlu0 %v1049, 104
        %v1061 = vpop.permute.xlu0 %1060
        %s1063 = scalar_lea.vmem [#allocation2], 12
        %1064 = vst.msk [vmem:[%s1063] sm:$0xf] %vm1045, %v1061
        %v1065 = vld [vmem:[#allocation2] sm:$0xf]
        %v1066 = vld [vmem:[#allocation2 + $0x4] sm:$0xf]
        %v1067 = vld [vmem:[#allocation2 + $0x8] sm:$0xf]
        %v1068 = vld [vmem:[#allocation2 + $0xc] sm:$0xf]
        %v1069 = vld [vmem:[#allocation3] sm:$0xff]
        %v1070 = vld [vmem:[#allocation3 + $0x8] sm:$0xff]
        %v1071 = vld [vmem:[#allocation3 + $0x10] sm:$0xff]
        %v1072 = vld [vmem:[#allocation3 + $0x18] sm:$0xff]
        %v1073 = vld [vmem:[%s680] sm:$0xf]
        %v1074 = vunpack.c.l.bf16 %v1073
        %vm1075 = vcmask 64512
        %v1077 = vsel %vm1075, %v1065, 0
        %v1080 = vsel %vm1075, %v1069, 0
        %1082 = vmatprep.subr.bf16.mxu0 0
        %1083 = vmatpush1.bf16.xpose.msra.mxu0 %v1080
        %1084 = vmatprep.subr.bf16.mxu0 0
        %1085 = vmatpush1.bf16.xpose.msra.mxu0 0
        %1086 = vmatprep.subr.bf16.mxu0 0
        %1087 = vmatpush1.bf16.xpose.msra.mxu0 0
        %1088 = vmatprep.subr.bf16.mxu0 0
        %1089 = vmatpush1.bf16.xpose.msra.mxu0 0
        %1090 = vmatprep.subr.bf16.mxu0 0
        %1091 = vmatpush1.bf16.xpose.msra.mxu0 0
        %1092 = vmatprep.subr.bf16.mxu0 0
        %1093 = vmatpush1.bf16.xpose.msra.mxu0 0
        %1094 = vmatprep.subr.bf16.mxu0 0
        %1095 = vmatpush1.bf16.xpose.msra.mxu0 0
        %1096 = vmatprep.subr.bf16.mxu0 0
        %1097 = vmatpush1.bf16.xpose.msra.mxu0 0
        %1098 = vmatprep.subr.bf16.mxu0 0
        %1099 = vmatpush1.bf16.xpose.msra.mxu0 0
        %1100 = vmatprep.subr.bf16.mxu0 0
        %1101 = vmatpush1.bf16.xpose.msra.mxu0 0
        %1102 = vmatprep.subr.bf16.mxu0 0
        %1103 = vmatpush1.bf16.xpose.msra.mxu0 0
        %1104 = vmatprep.subr.bf16.mxu0 0
        %1105 = vmatpush1.bf16.xpose.msra.mxu0 0
        %1106 = vmatprep.subr.bf16.mxu0 0
        %1107 = vmatpush1.bf16.xpose.msra.mxu0 0
        %1108 = vmatprep.subr.bf16.mxu0 0
        %1109 = vmatpush1.bf16.xpose.msra.mxu0 0
        %1110 = vmatprep.subr.bf16.mxu0 0
        %1111 = vmatpush1.bf16.xpose.msra.mxu0 0
        %1112 = vmatprep.subr.bf16.mxu0 0
        %1113 = vmatpush1.bf16.xpose.msra.mxu0 0
        %1114 = vmatprep.mubr.bf16.mxu0 0
        %1115 = vmatmul.mubr.bf16.gmra.mrb[0].mxu0 %v1077
        %v1116 = vpop.f32.mrb[0].mxu0
        %v1117 = vadd.f32 %v1074, %v1116
        %v1118 = vpop.f32.mrb[0].mxu0
        %v1119 = vpop.f32.mrb[0].mxu0
        %v1120 = vpop.f32.mrb[0].mxu0
        %1121 = vdwg.mxu0
        %v1123 = vsel %vm1075, %v1066, 0
        %v1126 = vsel %vm1075, %v1070, 0
        %1128 = vmatprep.subr.bf16.mxu0 0
        %1129 = vmatpush1.bf16.xpose.msra.mxu0 %v1126
        %1130 = vmatprep.subr.bf16.mxu0 0
        %1131 = vmatpush1.bf16.xpose.msra.mxu0 0
        %1132 = vmatprep.subr.bf16.mxu0 0
        %1133 = vmatpush1.bf16.xpose.msra.mxu0 0
        %1134 = vmatprep.subr.bf16.mxu0 0
        %1135 = vmatpush1.bf16.xpose.msra.mxu0 0
        %1136 = vmatprep.subr.bf16.mxu0 0
        %1137 = vmatpush1.bf16.xpose.msra.mxu0 0
        %1138 = vmatprep.subr.bf16.mxu0 0
        %1139 = vmatpush1.bf16.xpose.msra.mxu0 0
        %1140 = vmatprep.subr.bf16.mxu0 0
        %1141 = vmatpush1.bf16.xpose.msra.mxu0 0
        %1142 = vmatprep.subr.bf16.mxu0 0
        %1143 = vmatpush1.bf16.xpose.msra.mxu0 0
        %1144 = vmatprep.subr.bf16.mxu0 0
        %1145 = vmatpush1.bf16.xpose.msra.mxu0 0
        %1146 = vmatprep.subr.bf16.mxu0 0
        %1147 = vmatpush1.bf16.xpose.msra.mxu0 0
        %1148 = vmatprep.subr.bf16.mxu0 0
        %1149 = vmatpush1.bf16.xpose.msra.mxu0 0
        %1150 = vmatprep.subr.bf16.mxu0 0
        %1151 = vmatpush1.bf16.xpose.msra.mxu0 0
        %1152 = vmatprep.subr.bf16.mxu0 0
        %1153 = vmatpush1.bf16.xpose.msra.mxu0 0
        %1154 = vmatprep.subr.bf16.mxu0 0
        %1155 = vmatpush1.bf16.xpose.msra.mxu0 0
        %1156 = vmatprep.subr.bf16.mxu0 0
        %1157 = vmatpush1.bf16.xpose.msra.mxu0 0
        %1158 = vmatprep.subr.bf16.mxu0 0
        %1159 = vmatpush1.bf16.xpose.msra.mxu0 0
        %1160 = vmatprep.mubr.bf16.mxu0 0
        %1161 = vmatmul.mubr.bf16.gmra.mrb[0].mxu0 %v1123
        %v1162 = vpop.f32.mrb[0].mxu0
        %v1163 = vadd.f32 %v1074, %v1162
        %v1164 = vpop.f32.mrb[0].mxu0
        %v1165 = vpop.f32.mrb[0].mxu0
        %v1166 = vpop.f32.mrb[0].mxu0
        %1167 = vdwg.mxu0
        %v1169 = vsel %vm1075, %v1067, 0
        %v1172 = vsel %vm1075, %v1071, 0
        %1174 = vmatprep.subr.bf16.mxu0 0
        %1175 = vmatpush1.bf16.xpose.msra.mxu0 %v1172
        %1176 = vmatprep.subr.bf16.mxu0 0
        %1177 = vmatpush1.bf16.xpose.msra.mxu0 0
        %1178 = vmatprep.subr.bf16.mxu0 0
        %1179 = vmatpush1.bf16.xpose.msra.mxu0 0
        %1180 = vmatprep.subr.bf16.mxu0 0
        %1181 = vmatpush1.bf16.xpose.msra.mxu0 0
        %1182 = vmatprep.subr.bf16.mxu0 0
        %1183 = vmatpush1.bf16.xpose.msra.mxu0 0
        %1184 = vmatprep.subr.bf16.mxu0 0
        %1185 = vmatpush1.bf16.xpose.msra.mxu0 0
        %1186 = vmatprep.subr.bf16.mxu0 0
        %1187 = vmatpush1.bf16.xpose.msra.mxu0 0
        %1188 = vmatprep.subr.bf16.mxu0 0
        %1189 = vmatpush1.bf16.xpose.msra.mxu0 0
        %1190 = vmatprep.subr.bf16.mxu0 0
        %1191 = vmatpush1.bf16.xpose.msra.mxu0 0
        %1192 = vmatprep.subr.bf16.mxu0 0
        %1193 = vmatpush1.bf16.xpose.msra.mxu0 0
        %1194 = vmatprep.subr.bf16.mxu0 0
        %1195 = vmatpush1.bf16.xpose.msra.mxu0 0
        %1196 = vmatprep.subr.bf16.mxu0 0
        %1197 = vmatpush1.bf16.xpose.msra.mxu0 0
        %1198 = vmatprep.subr.bf16.mxu0 0
        %1199 = vmatpush1.bf16.xpose.msra.mxu0 0
        %1200 = vmatprep.subr.bf16.mxu0 0
        %1201 = vmatpush1.bf16.xpose.msra.mxu0 0
        %1202 = vmatprep.subr.bf16.mxu0 0
        %1203 = vmatpush1.bf16.xpose.msra.mxu0 0
        %1204 = vmatprep.subr.bf16.mxu0 0
        %1205 = vmatpush1.bf16.xpose.msra.mxu0 0
        %1206 = vmatprep.mubr.bf16.mxu0 0
        %1207 = vmatmul.mubr.bf16.gmra.mrb[0].mxu0 %v1169
        %v1208 = vpop.f32.mrb[0].mxu0
        %v1209 = vadd.f32 %v1074, %v1208
        %v1210 = vpop.f32.mrb[0].mxu0
        %v1211 = vpop.f32.mrb[0].mxu0
        %v1212 = vpop.f32.mrb[0].mxu0
        %1213 = vdwg.mxu0
        %v1215 = vsel %vm1075, %v1068, 0
        %v1218 = vsel %vm1075, %v1072, 0
        %1220 = vmatprep.subr.bf16.mxu0 0
        %1221 = vmatpush1.bf16.xpose.msra.mxu0 %v1218
        %1222 = vmatprep.subr.bf16.mxu0 0
        %1223 = vmatpush1.bf16.xpose.msra.mxu0 0
        %1224 = vmatprep.subr.bf16.mxu0 0
        %1225 = vmatpush1.bf16.xpose.msra.mxu0 0
        %1226 = vmatprep.subr.bf16.mxu0 0
        %1227 = vmatpush1.bf16.xpose.msra.mxu0 0
        %1228 = vmatprep.subr.bf16.mxu0 0
        %1229 = vmatpush1.bf16.xpose.msra.mxu0 0
        %1230 = vmatprep.subr.bf16.mxu0 0
        %1231 = vmatpush1.bf16.xpose.msra.mxu0 0
        %1232 = vmatprep.subr.bf16.mxu0 0
        %1233 = vmatpush1.bf16.xpose.msra.mxu0 0
        %1234 = vmatprep.subr.bf16.mxu0 0
        %1235 = vmatpush1.bf16.xpose.msra.mxu0 0
        %1236 = vmatprep.subr.bf16.mxu0 0
        %1237 = vmatpush1.bf16.xpose.msra.mxu0 0
        %1238 = vmatprep.subr.bf16.mxu0 0
        %1239 = vmatpush1.bf16.xpose.msra.mxu0 0
        %1240 = vmatprep.subr.bf16.mxu0 0
        %1241 = vmatpush1.bf16.xpose.msra.mxu0 0
        %1242 = vmatprep.subr.bf16.mxu0 0
        %1243 = vmatpush1.bf16.xpose.msra.mxu0 0
        %1244 = vmatprep.subr.bf16.mxu0 0
        %1245 = vmatpush1.bf16.xpose.msra.mxu0 0
        %1246 = vmatprep.subr.bf16.mxu0 0
        %1247 = vmatpush1.bf16.xpose.msra.mxu0 0
        %1248 = vmatprep.subr.bf16.mxu0 0
        %1249 = vmatpush1.bf16.xpose.msra.mxu0 0
        %1250 = vmatprep.subr.bf16.mxu0 0
        %1251 = vmatpush1.bf16.xpose.msra.mxu0 0
        %1252 = vmatprep.mubr.bf16.mxu0 0
        %1253 = vmatmul.mubr.bf16.gmra.mrb[0].mxu0 %v1215
        %v1254 = vpop.f32.mrb[0].mxu0
        %v1255 = vadd.f32 %v1074, %v1254
        %v1256 = vpop.f32.mrb[0].mxu0
        %v1257 = vpop.f32.mrb[0].mxu0
        %v1258 = vpop.f32.mrb[0].mxu0
        %1259 = vdwg.mxu0
        %vm1260 = vcmask 130048
        %v1261 = vsel %vm1260, %v1117, -inf
        %1262 = vmax.xlane.f32.xlu0 %v1261
        %v1263 = vpop.xlane.xlu0 %1262
        %v1264 = vsel %vm1260, %v1163, -inf
        %1265 = vmax.xlane.f32.xlu0 %v1264
        %v1266 = vpop.xlane.xlu0 %1265
        %v1267 = vsel %vm1260, %v1209, -inf
        %1268 = vmax.xlane.f32.xlu0 %v1267
        %v1269 = vpop.xlane.xlu0 %1268
        %v1270 = vsel %vm1260, %v1255, -inf
        %1271 = vmax.xlane.f32.xlu0 %v1270
        %v1272 = vpop.xlane.xlu0 %1271
        %v1273 = vsub.f32 %v1117, %v1263
        %v1274 = vsub.f32 %v1163, %v1266
        %v1275 = vsub.f32 %v1209, %v1269
        %v1276 = vsub.f32 %v1255, %v1272
        %v1277 = vmul.f32 %v1273, 1.442695
        %v1278 = vpow.pop %v1277
        %v1279 = vmul.f32 %v1274, 1.442695
        %v1280 = vpow.pop %v1279
        %v1281 = vmul.f32 %v1275, 1.442695
        %v1282 = vpow.pop %v1281
        %v1283 = vmul.f32 %v1276, 1.442695
        %v1284 = vpow.pop %v1283
        %v1285 = vsel %vm1260, %v1278, 0.0
        %1286 = vadd.xlane.f32.xlu0 %v1285
        %v1287 = vpop.xlane.xlu0 %1286
        %v1288 = vsel %vm1260, %v1280, 0.0
        %1289 = vadd.xlane.f32.xlu0 %v1288
        %v1290 = vpop.xlane.xlu0 %1289
        %v1291 = vsel %vm1260, %v1282, 0.0
        %1292 = vadd.xlane.f32.xlu0 %v1291
        %v1293 = vpop.xlane.xlu0 %1292
        %v1294 = vsel %vm1260, %v1284, 0.0
        %1295 = vadd.xlane.f32.xlu0 %v1294
        %v1296 = vpop.xlane.xlu0 %1295
        %v1297 = vpack.c.bf16 %v1278, %v1278
        %v1298 = vpack.c.bf16 %v1280, %v1280
        %v1299 = vpack.c.bf16 %v1282, %v1282
        %v1300 = vpack.c.bf16 %v1284, %v1284
        %v1301 = vld [vmem:[#allocation4] sm:$0xff]
        %v1302 = vld [vmem:[#allocation4 + $0x8] sm:$0xff]
        %v1303 = vld [vmem:[#allocation4 + $0x10] sm:$0xff]
        %v1304 = vld [vmem:[#allocation4 + $0x18] sm:$0xff]
        %v1306 = vsel %vm1260, %v1297, 0
        %1308 = vmatprep.subr.bf16.mxu0 0
        %1309 = vmatpush1.bf16.msra.mxu0 %v1301
        %1310 = vmatprep.subr.bf16.mxu0 0
        %1311 = vmatpush1.bf16.msra.mxu0 0
        %1312 = vmatprep.subr.bf16.mxu0 0
        %1313 = vmatpush1.bf16.msra.mxu0 0
        %1314 = vmatprep.subr.bf16.mxu0 0
        %1315 = vmatpush1.bf16.msra.mxu0 0
        %1316 = vmatprep.subr.bf16.mxu0 0
        %1317 = vmatpush1.bf16.msra.mxu0 0
        %1318 = vmatprep.subr.bf16.mxu0 0
        %1319 = vmatpush1.bf16.msra.mxu0 0
        %1320 = vmatprep.subr.bf16.mxu0 0
        %1321 = vmatpush1.bf16.msra.mxu0 0
        %1322 = vmatprep.subr.bf16.mxu0 0
        %1323 = vmatpush1.bf16.msra.mxu0 0
        %1324 = vmatprep.subr.bf16.mxu0 0
        %1325 = vmatpush1.bf16.msra.mxu0 0
        %1326 = vmatprep.subr.bf16.mxu0 0
        %1327 = vmatpush1.bf16.msra.mxu0 0
        %1328 = vmatprep.subr.bf16.mxu0 0
        %1329 = vmatpush1.bf16.msra.mxu0 0
        %1330 = vmatprep.subr.bf16.mxu0 0
        %1331 = vmatpush1.bf16.msra.mxu0 0
        %1332 = vmatprep.subr.bf16.mxu0 0
        %1333 = vmatpush1.bf16.msra.mxu0 0
        %1334 = vmatprep.subr.bf16.mxu0 0
        %1335 = vmatpush1.bf16.msra.mxu0 0
        %1336 = vmatprep.subr.bf16.mxu0 0
        %1337 = vmatpush1.bf16.msra.mxu0 0
        %1338 = vmatprep.subr.bf16.mxu0 0
        %1339 = vmatpush1.bf16.msra.mxu0 0
        %1340 = vmatprep.mubr.bf16.mxu0 0
        %1341 = vmatmul.mubr.bf16.gmra.mrb[0].mxu0 %v1306
        %v1342 = vpop.f32.mrb[0].mxu0
        %v1343 = vadd.f32 0.0, %v1342
        %v1344 = vpop.f32.mrb[0].mxu0
        %v1345 = vpop.f32.mrb[0].mxu0
        %v1346 = vpop.f32.mrb[0].mxu0
        %1347 = vdwg.mxu0
        %v1349 = vsel %vm1260, %v1298, 0
        %1351 = vmatprep.subr.bf16.mxu0 0
        %1352 = vmatpush1.bf16.msra.mxu0 %v1302
        %1353 = vmatprep.subr.bf16.mxu0 0
        %1354 = vmatpush1.bf16.msra.mxu0 0
        %1355 = vmatprep.subr.bf16.mxu0 0
        %1356 = vmatpush1.bf16.msra.mxu0 0
        %1357 = vmatprep.subr.bf16.mxu0 0
        %1358 = vmatpush1.bf16.msra.mxu0 0
        %1359 = vmatprep.subr.bf16.mxu0 0
        %1360 = vmatpush1.bf16.msra.mxu0 0
        %1361 = vmatprep.subr.bf16.mxu0 0
        %1362 = vmatpush1.bf16.msra.mxu0 0
        %1363 = vmatprep.subr.bf16.mxu0 0
        %1364 = vmatpush1.bf16.msra.mxu0 0
        %1365 = vmatprep.subr.bf16.mxu0 0
        %1366 = vmatpush1.bf16.msra.mxu0 0
        %1367 = vmatprep.subr.bf16.mxu0 0
        %1368 = vmatpush1.bf16.msra.mxu0 0
        %1369 = vmatprep.subr.bf16.mxu0 0
        %1370 = vmatpush1.bf16.msra.mxu0 0
        %1371 = vmatprep.subr.bf16.mxu0 0
        %1372 = vmatpush1.bf16.msra.mxu0 0
        %1373 = vmatprep.subr.bf16.mxu0 0
        %1374 = vmatpush1.bf16.msra.mxu0 0
        %1375 = vmatprep.subr.bf16.mxu0 0
        %1376 = vmatpush1.bf16.msra.mxu0 0
        %1377 = vmatprep.subr.bf16.mxu0 0
        %1378 = vmatpush1.bf16.msra.mxu0 0
        %1379 = vmatprep.subr.bf16.mxu0 0
        %1380 = vmatpush1.bf16.msra.mxu0 0
        %1381 = vmatprep.subr.bf16.mxu0 0
        %1382 = vmatpush1.bf16.msra.mxu0 0
        %1383 = vmatprep.mubr.bf16.mxu0 0
        %1384 = vmatmul.mubr.bf16.gmra.mrb[0].mxu0 %v1349
        %v1385 = vpop.f32.mrb[0].mxu0
        %v1386 = vadd.f32 0.0, %v1385
        %v1387 = vpop.f32.mrb[0].mxu0
        %v1388 = vpop.f32.mrb[0].mxu0
        %v1389 = vpop.f32.mrb[0].mxu0
        %1390 = vdwg.mxu0
        %v1392 = vsel %vm1260, %v1299, 0
        %1394 = vmatprep.subr.bf16.mxu0 0
        %1395 = vmatpush1.bf16.msra.mxu0 %v1303
        %1396 = vmatprep.subr.bf16.mxu0 0
        %1397 = vmatpush1.bf16.msra.mxu0 0
        %1398 = vmatprep.subr.bf16.mxu0 0
        %1399 = vmatpush1.bf16.msra.mxu0 0
        %1400 = vmatprep.subr.bf16.mxu0 0
        %1401 = vmatpush1.bf16.msra.mxu0 0
        %1402 = vmatprep.subr.bf16.mxu0 0
        %1403 = vmatpush1.bf16.msra.mxu0 0
        %1404 = vmatprep.subr.bf16.mxu0 0
        %1405 = vmatpush1.bf16.msra.mxu0 0
        %1406 = vmatprep.subr.bf16.mxu0 0
        %1407 = vmatpush1.bf16.msra.mxu0 0
        %1408 = vmatprep.subr.bf16.mxu0 0
        %1409 = vmatpush1.bf16.msra.mxu0 0
        %1410 = vmatprep.subr.bf16.mxu0 0
        %1411 = vmatpush1.bf16.msra.mxu0 0
        %1412 = vmatprep.subr.bf16.mxu0 0
        %1413 = vmatpush1.bf16.msra.mxu0 0
        %1414 = vmatprep.subr.bf16.mxu0 0
        %1415 = vmatpush1.bf16.msra.mxu0 0
        %1416 = vmatprep.subr.bf16.mxu0 0
        %1417 = vmatpush1.bf16.msra.mxu0 0
        %1418 = vmatprep.subr.bf16.mxu0 0
        %1419 = vmatpush1.bf16.msra.mxu0 0
        %1420 = vmatprep.subr.bf16.mxu0 0
        %1421 = vmatpush1.bf16.msra.mxu0 0
        %1422 = vmatprep.subr.bf16.mxu0 0
        %1423 = vmatpush1.bf16.msra.mxu0 0
        %1424 = vmatprep.subr.bf16.mxu0 0
        %1425 = vmatpush1.bf16.msra.mxu0 0
        %1426 = vmatprep.mubr.bf16.mxu0 0
        %1427 = vmatmul.mubr.bf16.gmra.mrb[0].mxu0 %v1392
        %v1428 = vpop.f32.mrb[0].mxu0
        %v1429 = vadd.f32 0.0, %v1428
        %v1430 = vpop.f32.mrb[0].mxu0
        %v1431 = vpop.f32.mrb[0].mxu0
        %v1432 = vpop.f32.mrb[0].mxu0
        %1433 = vdwg.mxu0
        %v1435 = vsel %vm1260, %v1300, 0
        %1437 = vmatprep.subr.bf16.mxu0 0
        %1438 = vmatpush1.bf16.msra.mxu0 %v1304
        %1439 = vmatprep.subr.bf16.mxu0 0
        %1440 = vmatpush1.bf16.msra.mxu0 0
        %1441 = vmatprep.subr.bf16.mxu0 0
        %1442 = vmatpush1.bf16.msra.mxu0 0
        %1443 = vmatprep.subr.bf16.mxu0 0
        %1444 = vmatpush1.bf16.msra.mxu0 0
        %1445 = vmatprep.subr.bf16.mxu0 0
        %1446 = vmatpush1.bf16.msra.mxu0 0
        %1447 = vmatprep.subr.bf16.mxu0 0
        %1448 = vmatpush1.bf16.msra.mxu0 0
        %1449 = vmatprep.subr.bf16.mxu0 0
        %1450 = vmatpush1.bf16.msra.mxu0 0
        %1451 = vmatprep.subr.bf16.mxu0 0
        %1452 = vmatpush1.bf16.msra.mxu0 0
        %1453 = vmatprep.subr.bf16.mxu0 0
        %1454 = vmatpush1.bf16.msra.mxu0 0
        %1455 = vmatprep.subr.bf16.mxu0 0
        %1456 = vmatpush1.bf16.msra.mxu0 0
        %1457 = vmatprep.subr.bf16.mxu0 0
        %1458 = vmatpush1.bf16.msra.mxu0 0
        %1459 = vmatprep.subr.bf16.mxu0 0
        %1460 = vmatpush1.bf16.msra.mxu0 0
        %1461 = vmatprep.subr.bf16.mxu0 0
        %1462 = vmatpush1.bf16.msra.mxu0 0
        %1463 = vmatprep.subr.bf16.mxu0 0
        %1464 = vmatpush1.bf16.msra.mxu0 0
        %1465 = vmatprep.subr.bf16.mxu0 0
        %1466 = vmatpush1.bf16.msra.mxu0 0
        %1467 = vmatprep.subr.bf16.mxu0 0
        %1468 = vmatpush1.bf16.msra.mxu0 0
        %1469 = vmatprep.mubr.bf16.mxu0 0
        %1470 = vmatmul.mubr.bf16.gmra.mrb[0].mxu0 %v1435
        %v1471 = vpop.f32.mrb[0].mxu0
        %v1472 = vadd.f32 0.0, %v1471
        %v1473 = vpop.f32.mrb[0].mxu0
        %v1474 = vpop.f32.mrb[0].mxu0
        %v1475 = vpop.f32.mrb[0].mxu0
        %1476 = vdwg.mxu0
        %v1477 = vrcp.pop %v1287
        %v1478 = vrcp.pop %v1290
        %v1479 = vrcp.pop %v1293
        %v1480 = vrcp.pop %v1296
        %v1481 = vmul.f32 %v1343, %v1477
        %v1482 = vmul.f32 %v1386, %v1478
        %v1483 = vmul.f32 %v1429, %v1479
        %v1484 = vmul.f32 %v1472, %v1480
        %v1485 = vpack.c.bf16 %v1481, %v1481
        %1486 = vst.msk [vmem:[#allocation5] sm:$0xf] %vm1045, %v1485
        %v1487 = vpack.c.bf16 %v1482, %v1482
        %v1489 = vunpack.c.l.b16 %v1487
        %v1490 = vpack.c.b16 %v1489, %v1489
        %1491 = vrot.lane.b32.xlu0 %v1490, 8
        %v1492 = vpop.permute.xlu0 %1491
        %vm1494 = vcmask 126016
        %1495 = vst.msk [vmem:[#allocation5] sm:$0xf] %vm1494, %v1492
        %v1496 = vpack.c.bf16 %v1483, %v1483
        %v1498 = vunpack.c.l.b16 %v1496
        %v1499 = vpack.c.b16 %v1498, %v1498
        %1500 = vrot.lane.b32.xlu0 %v1499, 16
        %v1501 = vpop.permute.xlu0 %1500
        %vm1503 = vcmask 191616
        %1504 = vst.msk [vmem:[#allocation5] sm:$0xf] %vm1503, %v1501
        %v1505 = vpack.c.bf16 %v1484, %v1484
        %v1507 = vunpack.c.l.b16 %v1505
        %v1508 = vpack.c.b16 %v1507, %v1507
        %1509 = vrot.lane.b32.xlu0 %v1508, 24
        %v1510 = vpop.permute.xlu0 %1509
        %vm1512 = vcmask 257216
        %1513 = vst.msk [vmem:[#allocation5] sm:$0xf] %vm1512, %v1510
        %v1514 = vld [vmem:[#allocation5] sm:$0xf]
        %v1515 = vld [vmem:[%s9] sm:$0xf]
        %v1516 = vld [vmem:[%s9 + $0x4] sm:$0xf]
        %v1517 = vld [vmem:[%s9 + $0x8] sm:$0xf]
        %v1518 = vld [vmem:[%s9 + $0xc] sm:$0xf]
        %v1519 = vld [vmem:[#allocation17] sm:$0x1]
        %v1521 = vlaneseq
        %v1522 = vshrl.u32 %v1521, 7
        %v1523 = vsub.s32 0, %v1522
        %v1524 = vrot.slane %v1519, %v1523
        %v1530 = vunpack.c.l.b16 %v1515
        %v1531 = vunpack.c.l.b16 %v1516
        %v1532 = vunpack.c.l.b16 %v1517
        %v1533 = vunpack.c.l.b16 %v1518
        %v1534 = vpack.c.b16 %v1531, %v1530
        %v1535 = vpack.c.b16 %v1533, %v1532
        %v1539 = vsel %vm999, %v1514, 0
        %1541 = vmatprep.subr.bf16.mxu0 0
        %1542 = vmatpush1.bf16.msra.mxu0 %v1534
        %1543 = vmatprep.subr.bf16.mxu0 0
        %1544 = vmatpush1.bf16.msra.mxu0 %v1535
        %1545 = vmatprep.subr.bf16.mxu0 0
        %1546 = vmatpush1.bf16.msra.mxu0 0
        %1547 = vmatprep.subr.bf16.mxu0 0
        %1548 = vmatpush1.bf16.msra.mxu0 0
        %1549 = vmatprep.subr.bf16.mxu0 0
        %1550 = vmatpush1.bf16.msra.mxu0 0
        %1551 = vmatprep.subr.bf16.mxu0 0
        %1552 = vmatpush1.bf16.msra.mxu0 0
        %1553 = vmatprep.subr.bf16.mxu0 0
        %1554 = vmatpush1.bf16.msra.mxu0 0
        %1555 = vmatprep.subr.bf16.mxu0 0
        %1556 = vmatpush1.bf16.msra.mxu0 0
        %1557 = vmatprep.subr.bf16.mxu0 0
        %1558 = vmatpush1.bf16.msra.mxu0 0
        %1559 = vmatprep.subr.bf16.mxu0 0
        %1560 = vmatpush1.bf16.msra.mxu0 0
        %1561 = vmatprep.subr.bf16.mxu0 0
        %1562 = vmatpush1.bf16.msra.mxu0 0
        %1563 = vmatprep.subr.bf16.mxu0 0
        %1564 = vmatpush1.bf16.msra.mxu0 0
        %1565 = vmatprep.subr.bf16.mxu0 0
        %1566 = vmatpush1.bf16.msra.mxu0 0
        %1567 = vmatprep.subr.bf16.mxu0 0
        %1568 = vmatpush1.bf16.msra.mxu0 0
        %1569 = vmatprep.subr.bf16.mxu0 0
        %1570 = vmatpush1.bf16.msra.mxu0 0
        %1571 = vmatprep.subr.bf16.mxu0 0
        %1572 = vmatpush1.bf16.msra.mxu0 0
        %1573 = vmatprep.mubr.bf16.mxu0 0
        %1574 = vmatmul.mubr.bf16.gmra.mrb[0].mxu0 %v1539
        %v1575 = vpop.f32.mrb[0].mxu0
        %v1576 = vadd.f32 %v1524, %v1575
        %v1577 = vpop.f32.mrb[0].mxu0
        %v1578 = vpop.f32.mrb[0].mxu0
        %v1579 = vpop.f32.mrb[0].mxu0
        %1580 = vdwg.mxu0
        %v1581 = vadd.f32 %v974, %v1576
        %v1582 = vsel %vm999, %v1581, 0.0
        %1583 = vadd.xlane.f32.xlu0 %v1582
        %v1584 = vpop.xlane.xlu0 %1583
        %v1585 = vrcp.pop 32.0
        %v1586 = vmul.f32 %v1584, %v1585
        %v1587 = vsub.f32 %v1581, %v1586
        %v1588 = vmul.f32 %v1587, %v1587
        %v1589 = vsel %vm999, %v1588, 0.0
        %1590 = vadd.xlane.f32.xlu0 %v1589
        %v1591 = vpop.xlane.xlu0 %1590
        %v1592 = vmul.f32 %v1591, %v1585
        %v1593 = vadd.f32 %v1592, 1e-05
        %v1594 = vrsqrt.pop %v1593
        %v1595 = vmul.f32 %v1587, %v1594
        %v1596 = vld [vmem:[#allocation18] sm:$0x1]
        %v1598 = vlaneseq
        %v1599 = vshrl.u32 %v1598, 7
        %v1600 = vsub.s32 0, %v1599
        %v1601 = vrot.slane %v1596, %v1600
        %v1603 = vmul.f32 %v1595, %v1601
        %v1604 = vld [vmem:[#allocation20] sm:$0x1]
        %v1606 = vlaneseq
        %v1607 = vshrl.u32 %v1606, 7
        %v1608 = vsub.s32 0, %v1607
        %v1609 = vrot.slane %v1604, %v1608
        %v1611 = vadd.f32 %v1603, %v1609
        %v1612 = vpack.c.bf16 %v1611, %v1611
        %v1613 = vld [vmem:[%s13] sm:$0xf]
        %v1614 = vld [vmem:[%s13 + $0x4] sm:$0xf]
        %v1615 = vld [vmem:[%s13 + $0x8] sm:$0xf]
        %v1616 = vld [vmem:[%s13 + $0xc] sm:$0xf]
        %v1617 = vld [vmem:[%s14] sm:$0x1]
        %v1619 = vlaneseq
        %v1620 = vshrl.u32 %v1619, 7
        %v1621 = vsub.s32 0, %v1620
        %v1622 = vrot.slane %v1617, %v1621
        %v1628 = vunpack.c.l.b16 %v1613
        %v1629 = vunpack.c.l.b16 %v1614
        %v1630 = vunpack.c.l.b16 %v1615
        %v1631 = vunpack.c.l.b16 %v1616
        %v1632 = vpack.c.b16 %v1629, %v1628
        %v1633 = vpack.c.b16 %v1631, %v1630
        %v1637 = vsel %vm999, %v1612, 0
        %1639 = vmatprep.subr.bf16.mxu0 0
        %1640 = vmatpush1.bf16.msra.mxu0 %v1632
        %1641 = vmatprep.subr.bf16.mxu0 0
        %1642 = vmatpush1.bf16.msra.mxu0 %v1633
        %1643 = vmatprep.subr.bf16.mxu0 0
        %1644 = vmatpush1.bf16.msra.mxu0 0
        %1645 = vmatprep.subr.bf16.mxu0 0
        %1646 = vmatpush1.bf16.msra.mxu0 0
        %1647 = vmatprep.subr.bf16.mxu0 0
        %1648 = vmatpush1.bf16.msra.mxu0 0
        %1649 = vmatprep.subr.bf16.mxu0 0
        %1650 = vmatpush1.bf16.msra.mxu0 0
        %1651 = vmatprep.subr.bf16.mxu0 0
        %1652 = vmatpush1.bf16.msra.mxu0 0
        %1653 = vmatprep.subr.bf16.mxu0 0
        %1654 = vmatpush1.bf16.msra.mxu0 0
        %1655 = vmatprep.subr.bf16.mxu0 0
        %1656 = vmatpush1.bf16.msra.mxu0 0
        %1657 = vmatprep.subr.bf16.mxu0 0
        %1658 = vmatpush1.bf16.msra.mxu0 0
        %1659 = vmatprep.subr.bf16.mxu0 0
        %1660 = vmatpush1.bf16.msra.mxu0 0
        %1661 = vmatprep.subr.bf16.mxu0 0
        %1662 = vmatpush1.bf16.msra.mxu0 0
        %1663 = vmatprep.subr.bf16.mxu0 0
        %1664 = vmatpush1.bf16.msra.mxu0 0
        %1665 = vmatprep.subr.bf16.mxu0 0
        %1666 = vmatpush1.bf16.msra.mxu0 0
        %1667 = vmatprep.subr.bf16.mxu0 0
        %1668 = vmatpush1.bf16.msra.mxu0 0
        %1669 = vmatprep.subr.bf16.mxu0 0
        %1670 = vmatpush1.bf16.msra.mxu0 0
        %1671 = vmatprep.mubr.bf16.mxu0 0
        %1672 = vmatmul.mubr.bf16.gmra.mrb[0].mxu0 %v1637
        %v1673 = vpop.f32.mrb[0].mxu0
        %v1674 = vadd.f32 %v1622, %v1673
        %v1675 = vpop.f32.mrb[0].mxu0
        %v1676 = vpop.f32.mrb[0].mxu0
        %v1677 = vpop.f32.mrb[0].mxu0
        %1678 = vdwg.mxu0
        %v1679 = vmax.f32 %v1674, 0.0
        %v1680 = vpack.c.bf16 %v1679, %v1679
        %v1681 = vld [vmem:[%s15] sm:$0xf]
        %v1682 = vld [vmem:[%s15 + $0x4] sm:$0xf]
        %v1683 = vld [vmem:[%s15 + $0x8] sm:$0xf]
        %v1684 = vld [vmem:[%s15 + $0xc] sm:$0xf]
        %v1685 = vld [vmem:[%s15 + $0x10] sm:$0xf]
        %v1686 = vld [vmem:[%s15 + $0x14] sm:$0xf]
        %v1687 = vld [vmem:[%s15 + $0x18] sm:$0xf]
        %v1688 = vld [vmem:[%s15 + $0x1c] sm:$0xf]
        %v1689 = vld [vmem:[%s16] sm:$0x1]
        %v1691 = vlaneseq
        %v1692 = vshrl.u32 %v1691, 7
        %v1693 = vsub.s32 0, %v1692
        %v1694 = vrot.slane %v1689, %v1693
        %v1704 = vunpack.c.l.b16 %v1681
        %v1705 = vunpack.c.l.b16 %v1682
        %v1706 = vunpack.c.l.b16 %v1683
        %v1707 = vunpack.c.l.b16 %v1684
        %v1708 = vunpack.c.l.b16 %v1685
        %v1709 = vunpack.c.l.b16 %v1686
        %v1710 = vunpack.c.l.b16 %v1687
        %v1711 = vunpack.c.l.b16 %v1688
        %v1712 = vpack.c.b16 %v1705, %v1704
        %v1713 = vpack.c.b16 %v1707, %v1706
        %v1714 = vpack.c.b16 %v1709, %v1708
        %v1715 = vpack.c.b16 %v1711, %v1710
        %vm1720 = vcmask 523264
        %v1722 = vsel %vm1720, %v1680, 0
        %1724 = vmatprep.subr.bf16.mxu0 0
        %1725 = vmatpush1.bf16.msra.mxu0 %v1712
        %1726 = vmatprep.subr.bf16.mxu0 0
        %1727 = vmatpush1.bf16.msra.mxu0 %v1713
        %1728 = vmatprep.subr.bf16.mxu0 0
        %1729 = vmatpush1.bf16.msra.mxu0 %v1714
        %1730 = vmatprep.subr.bf16.mxu0 0
        %1731 = vmatpush1.bf16.msra.mxu0 %v1715
        %1732 = vmatprep.subr.bf16.mxu0 0
        %1733 = vmatpush1.bf16.msra.mxu0 0
        %1734 = vmatprep.subr.bf16.mxu0 0
        %1735 = vmatpush1.bf16.msra.mxu0 0
        %1736 = vmatprep.subr.bf16.mxu0 0
        %1737 = vmatpush1.bf16.msra.mxu0 0
        %1738 = vmatprep.subr.bf16.mxu0 0
        %1739 = vmatpush1.bf16.msra.mxu0 0
        %1740 = vmatprep.subr.bf16.mxu0 0
        %1741 = vmatpush1.bf16.msra.mxu0 0
        %1742 = vmatprep.subr.bf16.mxu0 0
        %1743 = vmatpush1.bf16.msra.mxu0 0
        %1744 = vmatprep.subr.bf16.mxu0 0
        %1745 = vmatpush1.bf16.msra.mxu0 0
        %1746 = vmatprep.subr.bf16.mxu0 0
        %1747 = vmatpush1.bf16.msra.mxu0 0
        %1748 = vmatprep.subr.bf16.mxu0 0
        %1749 = vmatpush1.bf16.msra.mxu0 0
        %1750 = vmatprep.subr.bf16.mxu0 0
        %1751 = vmatpush1.bf16.msra.mxu0 0
        %1752 = vmatprep.subr.bf16.mxu0 0
        %1753 = vmatpush1.bf16.msra.mxu0 0
        %1754 = vmatprep.subr.bf16.mxu0 0
        %1755 = vmatpush1.bf16.msra.mxu0 0
        %1756 = vmatprep.mubr.bf16.mxu0 0
        %1757 = vmatmul.mubr.bf16.gmra.mrb[0].mxu0 %v1722
        %v1758 = vpop.f32.mrb[0].mxu0
        %v1759 = vadd.f32 %v1694, %v1758
        %v1760 = vpop.f32.mrb[0].mxu0
        %v1761 = vpop.f32.mrb[0].mxu0
        %v1762 = vpop.f32.mrb[0].mxu0
        %1763 = vdwg.mxu0
        %v1764 = vadd.f32 %v1611, %v1759
        %v1765 = vsel %vm999, %v1764, 0.0
        %1766 = vadd.xlane.f32.xlu0 %v1765
        %v1767 = vpop.xlane.xlu0 %1766
        %v1768 = vmul.f32 %v1767, %v1585
        %v1769 = vsub.f32 %v1764, %v1768
        %v1770 = vmul.f32 %v1769, %v1769
        %v1771 = vsel %vm999, %v1770, 0.0
        %1772 = vadd.xlane.f32.xlu0 %v1771
        %v1773 = vpop.xlane.xlu0 %1772
        %v1774 = vmul.f32 %v1773, %v1585
        %v1775 = vadd.f32 %v1774, 1e-05
        %v1776 = vrsqrt.pop %v1775
        %v1777 = vmul.f32 %v1769, %v1776
        %v1778 = vld [vmem:[%s17] sm:$0x1]
        %v1780 = vlaneseq
        %v1781 = vshrl.u32 %v1780, 7
        %v1782 = vsub.s32 0, %v1781
        %v1783 = vrot.slane %v1778, %v1782
        %v1785 = vmul.f32 %v1777, %v1783
        %v1786 = vld [vmem:[%s18] sm:$0x1]
        %v1788 = vlaneseq
        %v1789 = vshrl.u32 %v1788, 7
        %v1790 = vsub.s32 0, %v1789
        %v1791 = vrot.slane %v1786, %v1790
        %v1793 = vadd.f32 %v1785, %v1791
        %1794 = vst.msk [vmem:[%s779] sm:$0xff] %vm999, %v1793
        %s1795 = sand.u32 %s480, 1
        %s1796 = scalar_lea.sflag [#allocation8], %s1795
        %s1797 = sand.u32 %s480, 1
        %s1798 = smul.addr %s1797, 8
        %s1799 = scalar_lea.vmem [#allocation21], %s1798
        // Predicated region
        $region137: #{tpu_custom_call.1} parent=95 // pred_check
          %p1800 = pneg %p490
        $region138: #{tpu_custom_call.1} parent=95 // pred_check_branch
          %1802 = sbr.rel (%p1800) target = $region140
        $region139: #{tpu_custom_call.1} parent=95 // pred_region
          %s1804 = ssub.s32 128, 128
          %1805 = vsyncadd %s1796, %s1804
          %s1806 = smul.addr %s44, 2
          %s1807 = sadd.s32 %s45, %s1806
          %s1808 = smul.addr %s1807, 128
          %s1809 = scalar_lea.hbm %s19, %s1808
          %s1811 = sshll.u32 %s1799, 4
          %s1812 = int_to_ptr.vmem [resolvable:$true] %s1811
          %1814 = dma.vmem_to_hbm [thread:$0]  %s1812, 128, %s1809, %s1796
        $region140: #{tpu_custom_call.1} parent=95 // pred_fallthru
          _
      $region96: #{tpu_custom_call.1} parent=5 // pred_fallthru
        _
      %p1815 = scmp.le.s32.totalorder 2, %s35
      // Predicated region
      $region141: #{tpu_custom_call.1} parent=5 // pred_check
        %p1816 = pneg %p1815
      $region142: #{tpu_custom_call.1} parent=5 // pred_check_branch
        %1818 = sbr.rel (%p1816) target = $region144
      $region143: #{tpu_custom_call.1} parent=5 // pred_region
        %s1819 = ssub.s32 %s35, 2
        // Predicated region
        $region145: #{tpu_custom_call.1} parent=143 // pred_check
          %p1820 = pneg %p496
        $region146: #{tpu_custom_call.1} parent=143 // pred_check_branch
          %1822 = sbr.rel (%p1820) target = $region148
        $region147: #{tpu_custom_call.1} parent=143 // pred_region
          %s1823 = sand.u32 %s481, 1
          %s1824 = scalar_lea.sflag [#allocation8], %s1823
          %s1825 = sand.u32 %s481, 1
          %s1826 = smul.addr %s1825, 8
          %s1827 = scalar_lea.vmem [#allocation21], %s1826
          %1828 = dma.done %s1824, 128
        $region148: #{tpu_custom_call.1} parent=143 // pred_fallthru
          _
      $region144: #{tpu_custom_call.1} parent=5 // pred_fallthru
        _
    $region6: #{tpu_custom_call.1} parent=1 // loop_footer
      %s39 = sadd.s32 1, %s35
    $region7: #{tpu_custom_call.1} parent=1 // loop_footer_branch
      %34 = sbr.rel target = $region3
    $region8: #{tpu_custom_call.1} parent=1 // loop_exit
      _
    %1829 = vsyncpa [#allocation7], 1
    %s1830 = scalar_lea.sflag [#allocation7], 1
    %1831 = vsyncpa %s1830, 1
    %1832 = vsyncpa [#allocation10], 1
    %1833 = vsyncpa [#allocation13], 1
    %1834 = vsyncpa [#allocation16], 1
    %1835 = vsyncpa [#allocation19], 1
    %1836 = vsyncpa [#allocation8], 1
    %s1837 = scalar_lea.sflag [#allocation8], 1
    %1838 = vsyncpa %s1837, 1

// kernel: tpu_custom_call.1
$region0: #{tpu_custom_call.1}
  #allocation0 [shape = 'u32[]', space=smem, size = 0x4, offset = 0x4, fixed_abs, tag = 'smem constant byte address 0x4 - core index']
  #allocation1 [shape = 'u32[144,128]{1,0:T(1,128)}', space=vmem, size = 0x12000, scoped, tag = 'internal scratch']
  #allocation2 [shape = 'bf16[4,8,8]{2,1,0:T(8,128)(2,1)}', space=vmem, size = 0x2000, scoped, tag = 'scratch operand']
  #allocation3 [shape = 'bf16[4,16,8]{2,1,0:T(16,128)(2,1)}', space=vmem, size = 0x4000, scoped, tag = 'scratch operand']
  #allocation4 [shape = 'bf16[4,16,8]{2,1,0:T(16,128)(2,1)}', space=vmem, size = 0x4000, scoped, tag = 'scratch operand']
  #allocation5 [shape = 'bf16[8,32]{1,0:T(8,128)(2,1)}', space=vmem, size = 0x800, scoped, tag = 'scratch operand']
  %s0 = inlined_call_operand.vmem [shape: f32[2,16,32], index: 0, kind: input, shape index: {}]
  %s1 = inlined_call_operand.vmem [shape: bf16[2,16,32], index: 1, kind: input, shape index: {}]
  %s2 = inlined_call_operand.hbm [shape: bf16[2,16,16], index: 2, kind: input, shape index: {}]
  %s3 = inlined_call_operand.hbm [shape: bf16[32,32], index: 3, kind: input, shape index: {}]
  %s4 = inlined_call_operand.vmem [shape: f32[1,32], index: 4, kind: input, shape index: {}]
  %s5 = inlined_call_operand.hbm [shape: bf16[32,32], index: 5, kind: input, shape index: {}]
  %s6 = inlined_call_operand.hbm [shape: f32[1,32], index: 6, kind: input, shape index: {}]
  %s7 = inlined_call_operand.hbm [shape: bf16[32,32], index: 7, kind: input, shape index: {}]
  %s8 = inlined_call_operand.hbm [shape: f32[1,32], index: 8, kind: input, shape index: {}]
  %s9 = inlined_call_operand.vmem [shape: bf16[32,32], index: 9, kind: input, shape index: {}]
  %s10 = inlined_call_operand.hbm [shape: f32[1,32], index: 10, kind: input, shape index: {}]
  %s11 = inlined_call_operand.hbm [shape: f32[1,32], index: 11, kind: input, shape index: {}]
  %s12 = inlined_call_operand.hbm [shape: f32[1,32], index: 12, kind: input, shape index: {}]
  %s13 = inlined_call_operand.vmem [shape: bf16[32,64], index: 13, kind: input, shape index: {}]
  %s14 = inlined_call_operand.vmem [shape: f32[1,64], index: 14, kind: input, shape index: {}]
  %s15 = inlined_call_operand.vmem [shape: bf16[64,32], index: 15, kind: input, shape index: {}]
  %s16 = inlined_call_operand.vmem [shape: f32[1,32], index: 16, kind: input, shape index: {}]
  %s17 = inlined_call_operand.vmem [shape: f32[1,32], index: 17, kind: input, shape index: {}]
  %s18 = inlined_call_operand.vmem [shape: f32[1,32], index: 18, kind: input, shape index: {}]
  %s19 = inlined_call_operand.hbm [shape: f32[2,16,32], index: 19, kind: output, shape index: {}]
  %s20 = sld [smem:[#allocation0]]
  $region149: #{tpu_custom_call.1} parent=0
    _
  %s22 = ssub.s32 1, %s20
  %s23 = scalar_select 0, %s22, %s20
  $region1: #{tpu_custom_call.1} parent=0
    #allocation6 [shape = 'u8[4096]{0}', space=vmem, size = 0x1000, scoped, tag = 'input window, operand 2']
    #allocation7 [shape = 's32[2]{0}', space=sflag, size = 0x8, scoped, tag = 'scoped memory for tpu_custom_call.1']
    #allocation8 [shape = 's32[2]{0}', space=sflag, size = 0x8, scoped, tag = 'scoped memory for tpu_custom_call.1']
    #allocation9 [shape = 'u8[8192]{0}', space=vmem, size = 0x2000, scoped, tag = 'input window, operand 3, single buffered']
    #allocation10 [shape = 's32[1]{0}', space=sflag, size = 0x4, scoped, tag = 'scoped memory for tpu_custom_call.1']
    #allocation11 [shape = 'u8[8192]{0}', space=vmem, size = 0x2000, scoped, tag = 'input window, operand 5, single buffered']
    #allocation12 [shape = 'u8[512]{0}', space=vmem, size = 0x400, scoped, tag = 'input window, operand 6, single buffered']
    #allocation13 [shape = 's32[1]{0}', space=sflag, size = 0x4, scoped, tag = 'scoped memory for tpu_custom_call.1']
    #allocation14 [shape = 'u8[8192]{0}', space=vmem, size = 0x2000, scoped, tag = 'input window, operand 7, single buffered']
    #allocation15 [shape = 'u8[512]{0}', space=vmem, size = 0x400, scoped, tag = 'input window, operand 8, single buffered']
    #allocation16 [shape = 's32[1]{0}', space=sflag, size = 0x4, scoped, tag = 'scoped memory for tpu_custom_call.1']
    #allocation17 [shape = 'u8[512]{0}', space=vmem, size = 0x400, scoped, tag = 'input window, operand 10, single buffered']
    #allocation18 [shape = 'u8[512]{0}', space=vmem, size = 0x400, scoped, tag = 'input window, operand 11, single buffered']
    #allocation19 [shape = 's32[1]{0}', space=sflag, size = 0x4, scoped, tag = 'scoped memory for tpu_custom_call.1']
    #allocation20 [shape = 'u8[512]{0}', space=vmem, size = 0x400, scoped, tag = 'input window, operand 12, single buffered']
    #allocation21 [shape = 'u8[8192]{0}', space=vmem, size = 0x2000, scoped, tag = 'output window, operand 0']
    %24 = vsyncpa [#allocation7], 0
    %s25 = scalar_lea.sflag [#allocation7], 1
    %26 = vsyncpa %s25, 0
    %27 = vsyncpa [#allocation10], 0
    %28 = vsyncpa [#allocation13], 0
    %29 = vsyncpa [#allocation16], 0
    %30 = vsyncpa [#allocation19], 0
    %31 = vsyncpa [#allocation8], 0
    %s32 = scalar_lea.sflag [#allocation8], 1
    %33 = vsyncpa %s32, 0
    loop: start=0, step=1, limit=6
    $region2: #{tpu_custom_call.1} parent=1 // loop_pre_header
      _
    $region3: #{tpu_custom_call.1} parent=1 // loop_header
      %s35 = sphi 0, %s39
      %p36 = scmp.ge.s32.totalorder %s35, 6
      %s42 = sphi 0, %s54
      %s43 = sphi 0, %s50
      %s44 = sphi 0, %s42
      %s45 = sphi 0, %s43
      %s46 = sphi 0, %s44
      %s47 = sphi 0, %s45
      %s59 = sphi 0, %s61
      %s62 = sphi 0, %s59
      %s63 = sphi 0, %s62
      %s79 = sphi 0, %s63
      %s85 = sphi 0, %s87
      %s88 = sphi 0, %s85
      %s89 = sphi 0, %s88
      %s105 = sphi 0, %s89
      %s113 = sphi 0, %s115
      %s116 = sphi 0, %s113
      %s117 = sphi 0, %s116
      %s133 = sphi 0, %s117
      %s137 = sphi 0, %s137
      %s139 = sphi 0, %s137
      %s140 = sphi 0, %s139
      %s154 = sphi 0, %s140
      %s158 = sphi 0, %s158
      %s160 = sphi 0, %s158
      %s161 = sphi 0, %s160
      %s175 = sphi 0, %s161
      %s179 = sphi 0, %s179
      %s181 = sphi 0, %s179
      %s182 = sphi 0, %s181
      %s196 = sphi 0, %s182
      %s200 = sphi 0, %s200
      %s202 = sphi 0, %s200
      %s203 = sphi 0, %s202
      %s217 = sphi 0, %s203
      %s221 = sphi 0, %s221
      %s223 = sphi 0, %s221
      %s224 = sphi 0, %s223
      %s238 = sphi 0, %s224
      %s242 = sphi 0, %s242
      %s244 = sphi 0, %s242
      %s245 = sphi 0, %s244
      %s259 = sphi 0, %s245
      %s263 = sphi 0, %s263
      %s265 = sphi 0, %s263
      %s266 = sphi 0, %s265
      %s280 = sphi 0, %s266
      %s284 = sphi 0, %s284
      %s286 = sphi 0, %s284
      %s287 = sphi 0, %s286
      %s301 = sphi 0, %s287
      %s305 = sphi 0, %s305
      %s307 = sphi 0, %s305
      %s308 = sphi 0, %s307
      %s322 = sphi 0, %s308
      %s326 = sphi 0, %s326
      %s328 = sphi 0, %s326
      %s329 = sphi 0, %s328
      %s343 = sphi 0, %s329
      %s347 = sphi 0, %s347
      %s349 = sphi 0, %s347
      %s350 = sphi 0, %s349
      %s364 = sphi 0, %s350
      %s368 = sphi 0, %s368
      %s370 = sphi 0, %s368
      %s371 = sphi 0, %s370
      %s385 = sphi 0, %s371
      %s389 = sphi 0, %s389
      %s391 = sphi 0, %s389
      %s392 = sphi 0, %s391
      %s406 = sphi 0, %s392
      %s410 = sphi 0, %s410
      %s412 = sphi 0, %s410
      %s413 = sphi 0, %s412
      %s427 = sphi 0, %s413
      %s431 = sphi 0, %s431
      %s433 = sphi 0, %s431
      %s434 = sphi 0, %s433
      %s448 = sphi 0, %s434
      %s452 = sphi 0, %s452
      %s454 = sphi 0, %s452
      %s455 = sphi 0, %s454
      %s469 = sphi 0, %s455
      %s477 = sphi 0, %s479
      %s480 = sphi 0, %s477
      %s481 = sphi 0, %s480
      %s497 = sphi 0, %s481
    $region4: #{tpu_custom_call.1} parent=1 // loop_header_branch
      %38 = sbr.rel (%p36) target = $region8
    $region5: #{tpu_custom_call.1} parent=1 // loop_body
      %s40 = ssub.s32 %s35, 1
      %s41 = ssub.s32 %s35, 2
      %s48 = sadd.s32 1, %s43
      %p49 = scmp.ge.s32.totalorder %s48, 2
      %s50 = scalar_select %p49, 0, %s48
      %s51 = sadd.s32 1, %s42
      %s52 = scalar_select %p49, %s51, %s42
      %p53 = scmp.ge.s32.totalorder %s52, 2
      %s54 = scalar_select %p53, 0, %s52
      %s55 = ssub.s32 %s42, %s54
      %s56 = ssub.s32 %s43, %s50
      %s57 = sor.u32 %s55, %s56
      %p58 = scmp.eq.s32.totalorder %s57, 0
      %s60 = sadd.s32 %s59, 1
      %s61 = scalar_select %p58, %s59, %s60
      %p64 = pneg %p58
      %p65 = scmp.eq.s32.totalorder %s35, 3
      %p66 = por %p64, %p65
      %p67 = scmp.ne.s32.totalorder %s59, %s62
      %p68 = scmp.eq.s32.totalorder %s35, 0
      %p69 = por %p67, %p68
      %p70 = scmp.ne.s32.totalorder %s59, %s62
      %p71 = scmp.eq.s32.totalorder %s40, 3
      %p72 = por %p70, %p71
      %p73 = scmp.ne.s32.totalorder %s62, %s63
      %p74 = scmp.eq.s32.totalorder %s40, 0
      %p75 = por %p73, %p74
      %p76 = scmp.ne.s32.totalorder %s62, %s63
      %p77 = scmp.eq.s32.totalorder %s41, 3
      %p78 = por %p76, %p77
      %p80 = scmp.ne.s32.totalorder %s63, %s79
      %p81 = scmp.eq.s32.totalorder %s41, 0
      %p82 = por %p80, %p81
      %s83 = ssub.s32 %s42, %s54
      %p84 = scmp.eq.s32.totalorder %s83, 0
      %s86 = sadd.s32 %s85, 1
      %s87 = scalar_select %p84, %s85, %s86
      %p90 = pneg %p84
      %p91 = scmp.eq.s32.totalorder %s35, 3
      %p92 = por %p90, %p91
      %p93 = scmp.ne.s32.totalorder %s85, %s88
      %p94 = scmp.eq.s32.totalorder %s35, 0
      %p95 = por %p93, %p94
      %p96 = scmp.ne.s32.totalorder %s85, %s88
      %p97 = scmp.eq.s32.totalorder %s40, 3
      %p98 = por %p96, %p97
      %p99 = scmp.ne.s32.totalorder %s88, %s89
      %p100 = scmp.eq.s32.totalorder %s40, 0
      %p101 = por %p99, %p100
      %p102 = scmp.ne.s32.totalorder %s88, %s89
      %p103 = scmp.eq.s32.totalorder %s41, 3
      %p104 = por %p102, %p103
      %p106 = scmp.ne.s32.totalorder %s89, %s105
      %p107 = scmp.eq.s32.totalorder %s41, 0
      %p108 = por %p106, %p107
      %s109 = ssub.s32 %s42, %s54
      %s110 = ssub.s32 %s43, %s50
      %s111 = sor.u32 %s109, %s110
      %p112 = scmp.eq.s32.totalorder %s111, 0
      %s114 = sadd.s32 %s113, 1
      %s115 = scalar_select %p112, %s113, %s114
      %p118 = pneg %p112
      %p119 = scmp.eq.s32.totalorder %s35, 3
      %p120 = por %p118, %p119
      %p121 = scmp.ne.s32.totalorder %s113, %s116
      %p122 = scmp.eq.s32.totalorder %s35, 0
      %p123 = por %p121, %p122
      %p124 = scmp.ne.s32.totalorder %s113, %s116
      %p125 = scmp.eq.s32.totalorder %s40, 3
      %p126 = por %p124, %p125
      %p127 = scmp.ne.s32.totalorder %s116, %s117
      %p128 = scmp.eq.s32.totalorder %s40, 0
      %p129 = por %p127, %p128
      %p130 = scmp.ne.s32.totalorder %s116, %s117
      %p131 = scmp.eq.s32.totalorder %s41, 3
      %p132 = por %p130, %p131
      %p134 = scmp.ne.s32.totalorder %s117, %s133
      %p135 = scmp.eq.s32.totalorder %s41, 0
      %p136 = por %p134, %p135
      %s138 = sadd.s32 %s137, 1
      %p141 = scmp.eq.s32.totalorder %s35, 3
      %p142 = scmp.ne.s32.totalorder %s137, %s139
      %p143 = scmp.eq.s32.totalorder %s35, 0
      %p144 = por %p142, %p143
      %p145 = scmp.ne.s32.totalorder %s137, %s139
      %p146 = scmp.eq.s32.totalorder %s40, 3
      %p147 = por %p145, %p146
      %p148 = scmp.ne.s32.totalorder %s139, %s140
      %p149 = scmp.eq.s32.totalorder %s40, 0
      %p150 = por %p148, %p149
      %p151 = scmp.ne.s32.totalorder %s139, %s140
      %p152 = scmp.eq.s32.totalorder %s41, 3
      %p153 = por %p151, %p152
      %p155 = scmp.ne.s32.totalorder %s140, %s154
      %p156 = scmp.eq.s32.totalorder %s41, 0
      %p157 = por %p155, %p156
      %s159 = sadd.s32 %s158, 1
      %p162 = scmp.eq.s32.totalorder %s35, 3
      %p163 = scmp.ne.s32.totalorder %s158, %s160
      %p164 = scmp.eq.s32.totalorder %s35, 0
      %p165 = por %p163, %p164
      %p166 = scmp.ne.s32.totalorder %s158, %s160
      %p167 = scmp.eq.s32.totalorder %s40, 3
      %p168 = por %p166, %p167
      %p169 = scmp.ne.s32.totalorder %s160, %s161
      %p170 = scmp.eq.s32.totalorder %s40, 0
      %p171 = por %p169, %p170
      %p172 = scmp.ne.s32.totalorder %s160, %s161
      %p173 = scmp.eq.s32.totalorder %s41, 3
      %p174 = por %p172, %p173
      %p176 = scmp.ne.s32.totalorder %s161, %s175
      %p177 = scmp.eq.s32.totalorder %s41, 0
      %p178 = por %p176, %p177
      %s180 = sadd.s32 %s179, 1
      %p183 = scmp.eq.s32.totalorder %s35, 3
      %p184 = scmp.ne.s32.totalorder %s179, %s181
      %p185 = scmp.eq.s32.totalorder %s35, 0
      %p186 = por %p184, %p185
      %p187 = scmp.ne.s32.totalorder %s179, %s181
      %p188 = scmp.eq.s32.totalorder %s40, 3
      %p189 = por %p187, %p188
      %p190 = scmp.ne.s32.totalorder %s181, %s182
      %p191 = scmp.eq.s32.totalorder %s40, 0
      %p192 = por %p190, %p191
      %p193 = scmp.ne.s32.totalorder %s181, %s182
      %p194 = scmp.eq.s32.totalorder %s41, 3
      %p195 = por %p193, %p194
      %p197 = scmp.ne.s32.totalorder %s182, %s196
      %p198 = scmp.eq.s32.totalorder %s41, 0
      %p199 = por %p197, %p198
      %s201 = sadd.s32 %s200, 1
      %p204 = scmp.eq.s32.totalorder %s35, 3
      %p205 = scmp.ne.s32.totalorder %s200, %s202
      %p206 = scmp.eq.s32.totalorder %s35, 0
      %p207 = por %p205, %p206
      %p208 = scmp.ne.s32.totalorder %s200, %s202
      %p209 = scmp.eq.s32.totalorder %s40, 3
      %p210 = por %p208, %p209
      %p211 = scmp.ne.s32.totalorder %s202, %s203
      %p212 = scmp.eq.s32.totalorder %s40, 0
      %p213 = por %p211, %p212
      %p214 = scmp.ne.s32.totalorder %s202, %s203
      %p215 = scmp.eq.s32.totalorder %s41, 3
      %p216 = por %p214, %p215
      %p218 = scmp.ne.s32.totalorder %s203, %s217
      %p219 = scmp.eq.s32.totalorder %s41, 0
      %p220 = por %p218, %p219
      %s222 = sadd.s32 %s221, 1
      %p225 = scmp.eq.s32.totalorder %s35, 3
      %p226 = scmp.ne.s32.totalorder %s221, %s223
      %p227 = scmp.eq.s32.totalorder %s35, 0
      %p228 = por %p226, %p227
      %p229 = scmp.ne.s32.totalorder %s221, %s223
      %p230 = scmp.eq.s32.totalorder %s40, 3
      %p231 = por %p229, %p230
      %p232 = scmp.ne.s32.totalorder %s223, %s224
      %p233 = scmp.eq.s32.totalorder %s40, 0
      %p234 = por %p232, %p233
      %p235 = scmp.ne.s32.totalorder %s223, %s224
      %p236 = scmp.eq.s32.totalorder %s41, 3
      %p237 = por %p235, %p236
      %p239 = scmp.ne.s32.totalorder %s224, %s238
      %p240 = scmp.eq.s32.totalorder %s41, 0
      %p241 = por %p239, %p240
      %s243 = sadd.s32 %s242, 1
      %p246 = scmp.eq.s32.totalorder %s35, 3
      %p247 = scmp.ne.s32.totalorder %s242, %s244
      %p248 = scmp.eq.s32.totalorder %s35, 0
      %p249 = por %p247, %p248
      %p250 = scmp.ne.s32.totalorder %s242, %s244
      %p251 = scmp.eq.s32.totalorder %s40, 3
      %p252 = por %p250, %p251
      %p253 = scmp.ne.s32.totalorder %s244, %s245
      %p254 = scmp.eq.s32.totalorder %s40, 0
      %p255 = por %p253, %p254
      %p256 = scmp.ne.s32.totalorder %s244, %s245
      %p257 = scmp.eq.s32.totalorder %s41, 3
      %p258 = por %p256, %p257
      %p260 = scmp.ne.s32.totalorder %s245, %s259
      %p261 = scmp.eq.s32.totalorder %s41, 0
      %p262 = por %p260, %p261
      %s264 = sadd.s32 %s263, 1
      %p267 = scmp.eq.s32.totalorder %s35, 3
      %p268 = scmp.ne.s32.totalorder %s263, %s265
      %p269 = scmp.eq.s32.totalorder %s35, 0
      %p270 = por %p268, %p269
      %p271 = scmp.ne.s32.totalorder %s263, %s265
      %p272 = scmp.eq.s32.totalorder %s40, 3
      %p273 = por %p271, %p272
      %p274 = scmp.ne.s32.totalorder %s265, %s266
      %p275 = scmp.eq.s32.totalorder %s40, 0
      %p276 = por %p274, %p275
      %p277 = scmp.ne.s32.totalorder %s265, %s266
      %p278 = scmp.eq.s32.totalorder %s41, 3
      %p279 = por %p277, %p278
      %p281 = scmp.ne.s32.totalorder %s266, %s280
      %p282 = scmp.eq.s32.totalorder %s41, 0
      %p283 = por %p281, %p282
      %s285 = sadd.s32 %s284, 1
      %p288 = scmp.eq.s32.totalorder %s35, 3
      %p289 = scmp.ne.s32.totalorder %s284, %s286
      %p290 = scmp.eq.s32.totalorder %s35, 0
      %p291 = por %p289, %p290
      %p292 = scmp.ne.s32.totalorder %s284, %s286
      %p293 = scmp.eq.s32.totalorder %s40, 3
      %p294 = por %p292, %p293
      %p295 = scmp.ne.s32.totalorder %s286, %s287
      %p296 = scmp.eq.s32.totalorder %s40, 0
      %p297 = por %p295, %p296
      %p298 = scmp.ne.s32.totalorder %s286, %s287
      %p299 = scmp.eq.s32.totalorder %s41, 3
      %p300 = por %p298, %p299
      %p302 = scmp.ne.s32.totalorder %s287, %s301
      %p303 = scmp.eq.s32.totalorder %s41, 0
      %p304 = por %p302, %p303
      %s306 = sadd.s32 %s305, 1
      %p309 = scmp.eq.s32.totalorder %s35, 3
      %p310 = scmp.ne.s32.totalorder %s305, %s307
      %p311 = scmp.eq.s32.totalorder %s35, 0
      %p312 = por %p310, %p311
      %p313 = scmp.ne.s32.totalorder %s305, %s307
      %p314 = scmp.eq.s32.totalorder %s40, 3
      %p315 = por %p313, %p314
      %p316 = scmp.ne.s32.totalorder %s307, %s308
      %p317 = scmp.eq.s32.totalorder %s40, 0
      %p318 = por %p316, %p317
      %p319 = scmp.ne.s32.totalorder %s307, %s308
      %p320 = scmp.eq.s32.totalorder %s41, 3
      %p321 = por %p319, %p320
      %p323 = scmp.ne.s32.totalorder %s308, %s322
      %p324 = scmp.eq.s32.totalorder %s41, 0
      %p325 = por %p323, %p324
      %s327 = sadd.s32 %s326, 1
      %p330 = scmp.eq.s32.totalorder %s35, 3
      %p331 = scmp.ne.s32.totalorder %s326, %s328
      %p332 = scmp.eq.s32.totalorder %s35, 0
      %p333 = por %p331, %p332
      %p334 = scmp.ne.s32.totalorder %s326, %s328
      %p335 = scmp.eq.s32.totalorder %s40, 3
      %p336 = por %p334, %p335
      %p337 = scmp.ne.s32.totalorder %s328, %s329
      %p338 = scmp.eq.s32.totalorder %s40, 0
      %p339 = por %p337, %p338
      %p340 = scmp.ne.s32.totalorder %s328, %s329
      %p341 = scmp.eq.s32.totalorder %s41, 3
      %p342 = por %p340, %p341
      %p344 = scmp.ne.s32.totalorder %s329, %s343
      %p345 = scmp.eq.s32.totalorder %s41, 0
      %p346 = por %p344, %p345
      %s348 = sadd.s32 %s347, 1
      %p351 = scmp.eq.s32.totalorder %s35, 3
      %p352 = scmp.ne.s32.totalorder %s347, %s349
      %p353 = scmp.eq.s32.totalorder %s35, 0
      %p354 = por %p352, %p353
      %p355 = scmp.ne.s32.totalorder %s347, %s349
      %p356 = scmp.eq.s32.totalorder %s40, 3
      %p357 = por %p355, %p356
      %p358 = scmp.ne.s32.totalorder %s349, %s350
      %p359 = scmp.eq.s32.totalorder %s40, 0
      %p360 = por %p358, %p359
      %p361 = scmp.ne.s32.totalorder %s349, %s350
      %p362 = scmp.eq.s32.totalorder %s41, 3
      %p363 = por %p361, %p362
      %p365 = scmp.ne.s32.totalorder %s350, %s364
      %p366 = scmp.eq.s32.totalorder %s41, 0
      %p367 = por %p365, %p366
      %s369 = sadd.s32 %s368, 1
      %p372 = scmp.eq.s32.totalorder %s35, 3
      %p373 = scmp.ne.s32.totalorder %s368, %s370
      %p374 = scmp.eq.s32.totalorder %s35, 0
      %p375 = por %p373, %p374
      %p376 = scmp.ne.s32.totalorder %s368, %s370
      %p377 = scmp.eq.s32.totalorder %s40, 3
      %p378 = por %p376, %p377
      %p379 = scmp.ne.s32.totalorder %s370, %s371
      %p380 = scmp.eq.s32.totalorder %s40, 0
      %p381 = por %p379, %p380
      %p382 = scmp.ne.s32.totalorder %s370, %s371
      %p383 = scmp.eq.s32.totalorder %s41, 3
      %p384 = por %p382, %p383
      %p386 = scmp.ne.s32.totalorder %s371, %s385
      %p387 = scmp.eq.s32.totalorder %s41, 0
      %p388 = por %p386, %p387
      %s390 = sadd.s32 %s389, 1
      %p393 = scmp.eq.s32.totalorder %s35, 3
      %p394 = scmp.ne.s32.totalorder %s389, %s391
      %p395 = scmp.eq.s32.totalorder %s35, 0
      %p396 = por %p394, %p395
      %p397 = scmp.ne.s32.totalorder %s389, %s391
      %p398 = scmp.eq.s32.totalorder %s40, 3
      %p399 = por %p397, %p398
      %p400 = scmp.ne.s32.totalorder %s391, %s392
      %p401 = scmp.eq.s32.totalorder %s40, 0
      %p402 = por %p400, %p401
      %p403 = scmp.ne.s32.totalorder %s391, %s392
      %p404 = scmp.eq.s32.totalorder %s41, 3
      %p405 = por %p403, %p404
      %p407 = scmp.ne.s32.totalorder %s392, %s406
      %p408 = scmp.eq.s32.totalorder %s41, 0
      %p409 = por %p407, %p408
      %s411 = sadd.s32 %s410, 1
      %p414 = scmp.eq.s32.totalorder %s35, 3
      %p415 = scmp.ne.s32.totalorder %s410, %s412
      %p416 = scmp.eq.s32.totalorder %s35, 0
      %p417 = por %p415, %p416
      %p418 = scmp.ne.s32.totalorder %s410, %s412
      %p419 = scmp.eq.s32.totalorder %s40, 3
      %p420 = por %p418, %p419
      %p421 = scmp.ne.s32.totalorder %s412, %s413
      %p422 = scmp.eq.s32.totalorder %s40, 0
      %p423 = por %p421, %p422
      %p424 = scmp.ne.s32.totalorder %s412, %s413
      %p425 = scmp.eq.s32.totalorder %s41, 3
      %p426 = por %p424, %p425
      %p428 = scmp.ne.s32.totalorder %s413, %s427
      %p429 = scmp.eq.s32.totalorder %s41, 0
      %p430 = por %p428, %p429
      %s432 = sadd.s32 %s431, 1
      %p435 = scmp.eq.s32.totalorder %s35, 3
      %p436 = scmp.ne.s32.totalorder %s431, %s433
      %p437 = scmp.eq.s32.totalorder %s35, 0
      %p438 = por %p436, %p437
      %p439 = scmp.ne.s32.totalorder %s431, %s433
      %p440 = scmp.eq.s32.totalorder %s40, 3
      %p441 = por %p439, %p440
      %p442 = scmp.ne.s32.totalorder %s433, %s434
      %p443 = scmp.eq.s32.totalorder %s40, 0
      %p444 = por %p442, %p443
      %p445 = scmp.ne.s32.totalorder %s433, %s434
      %p446 = scmp.eq.s32.totalorder %s41, 3
      %p447 = por %p445, %p446
      %p449 = scmp.ne.s32.totalorder %s434, %s448
      %p450 = scmp.eq.s32.totalorder %s41, 0
      %p451 = por %p449, %p450
      %s453 = sadd.s32 %s452, 1
      %p456 = scmp.eq.s32.totalorder %s35, 3
      %p457 = scmp.ne.s32.totalorder %s452, %s454
      %p458 = scmp.eq.s32.totalorder %s35, 0
      %p459 = por %p457, %p458
      %p460 = scmp.ne.s32.totalorder %s452, %s454
      %p461 = scmp.eq.s32.totalorder %s40, 3
      %p462 = por %p460, %p461
      %p463 = scmp.ne.s32.totalorder %s454, %s455
      %p464 = scmp.eq.s32.totalorder %s40, 0
      %p465 = por %p463, %p464
      %p466 = scmp.ne.s32.totalorder %s454, %s455
      %p467 = scmp.eq.s32.totalorder %s41, 3
      %p468 = por %p466, %p467
      %p470 = scmp.ne.s32.totalorder %s455, %s469
      %p471 = scmp.eq.s32.totalorder %s41, 0
      %p472 = por %p470, %p471
      %s473 = ssub.s32 %s42, %s54
      %s474 = ssub.s32 %s43, %s50
      %s475 = sor.u32 %s473, %s474
      %p476 = scmp.eq.s32.totalorder %s475, 0
      %s478 = sadd.s32 %s477, 1
      %s479 = scalar_select %p476, %s477, %s478
      %p482 = pneg %p476
      %p483 = scmp.eq.s32.totalorder %s35, 3
      %p484 = por %p482, %p483
      %p485 = scmp.ne.s32.totalorder %s477, %s480
      %p486 = scmp.eq.s32.totalorder %s35, 0
      %p487 = por %p485, %p486
      %p488 = scmp.ne.s32.totalorder %s477, %s480
      %p489 = scmp.eq.s32.totalorder %s40, 3
      %p490 = por %p488, %p489
      %p491 = scmp.ne.s32.totalorder %s480, %s481
      %p492 = scmp.eq.s32.totalorder %s40, 0
      %p493 = por %p491, %p492
      %p494 = scmp.ne.s32.totalorder %s480, %s481
      %p495 = scmp.eq.s32.totalorder %s41, 3
      %p496 = por %p494, %p495
      %p498 = scmp.ne.s32.totalorder %s481, %s497
      %p499 = scmp.eq.s32.totalorder %s41, 0
      %p500 = por %p498, %p499
      %p501 = scmp.le.s32.totalorder 1, %s35
      %p502 = scmp.lt.s32.totalorder %s35, 5
      %p503 = pnand %p501, %p502
      %p504 = pneg %p503
      // Predicated region
      $region9: #{tpu_custom_call.1} parent=5 // pred_check
        _
      $region10: #{tpu_custom_call.1} parent=5 // pred_check_branch
        %506 = sbr.rel (%p503) target = $region12
      $region11: #{tpu_custom_call.1} parent=5 // pred_region
        %s507 = ssub.s32 %s35, 1
        // Predicated region
        $region13: #{tpu_custom_call.1} parent=11 // pred_check
          %p508 = pneg %p150
        $region14: #{tpu_custom_call.1} parent=11 // pred_check_branch
          %510 = sbr.rel (%p508) target = $region16
        $region15: #{tpu_custom_call.1} parent=11 // pred_region
          %s512 = ssub.s32 256, 256
          %513 = vsyncadd [#allocation10], %s512
          %s514 = sshll.u32 [#allocation9], 4
          %s515 = int_to_ptr.vmem [resolvable:$true] %s514
          %520 = dma.hbm_to_vmem [thread:$0]  %s3, 256, %s515, [#allocation10], 64, 64, 4
        $region16: #{tpu_custom_call.1} parent=11 // pred_fallthru
          _
        // Predicated region
        $region17: #{tpu_custom_call.1} parent=11 // pred_check
          %p521 = pneg %p171
        $region18: #{tpu_custom_call.1} parent=11 // pred_check_branch
          %523 = sbr.rel (%p521) target = $region20
        $region19: #{tpu_custom_call.1} parent=11 // pred_region
          _
        $region20: #{tpu_custom_call.1} parent=11 // pred_fallthru
          _
        // Predicated region
        $region21: #{tpu_custom_call.1} parent=11 // pred_check
          %p524 = pneg %p192
        $region22: #{tpu_custom_call.1} parent=11 // pred_check_branch
          %526 = sbr.rel (%p524) target = $region24
        $region23: #{tpu_custom_call.1} parent=11 // pred_region
          %s528 = ssub.s32 256, 256
          %529 = vsyncadd [#allocation10], %s528
          %s530 = sshll.u32 [#allocation11], 4
          %s531 = int_to_ptr.vmem [resolvable:$true] %s530
          %536 = dma.hbm_to_vmem [thread:$0]  %s5, 256, %s531, [#allocation10], 64, 64, 4
        $region24: #{tpu_custom_call.1} parent=11 // pred_fallthru
          _
        // Predicated region
        $region25: #{tpu_custom_call.1} parent=11 // pred_check
          %p537 = pneg %p213
        $region26: #{tpu_custom_call.1} parent=11 // pred_check_branch
          %539 = sbr.rel (%p537) target = $region28
        $region27: #{tpu_custom_call.1} parent=11 // pred_region
          %s541 = ssub.s32 16, 16
          %542 = vsyncadd [#allocation13], %s541
          %s544 = sshll.u32 [#allocation12], 4
          %s545 = int_to_ptr.vmem [resolvable:$true] %s544
          %547 = dma.hbm_to_vmem [thread:$0]  %s6, 16, %s545, [#allocation13]
        $region28: #{tpu_custom_call.1} parent=11 // pred_fallthru
          _
        // Predicated region
        $region29: #{tpu_custom_call.1} parent=11 // pred_check
          %p548 = pneg %p234
        $region30: #{tpu_custom_call.1} parent=11 // pred_check_branch
          %550 = sbr.rel (%p548) target = $region32
        $region31: #{tpu_custom_call.1} parent=11 // pred_region
          %s552 = ssub.s32 256, 256
          %553 = vsyncadd [#allocation13], %s552
          %s554 = sshll.u32 [#allocation14], 4
          %s555 = int_to_ptr.vmem [resolvable:$true] %s554
          %560 = dma.hbm_to_vmem [thread:$0]  %s7, 256, %s555, [#allocation13], 64, 64, 4
        $region32: #{tpu_custom_call.1} parent=11 // pred_fallthru
          _
        // Predicated region
        $region33: #{tpu_custom_call.1} parent=11 // pred_check
          %p561 = pneg %p255
        $region34: #{tpu_custom_call.1} parent=11 // pred_check_branch
          %563 = sbr.rel (%p561) target = $region36
        $region35: #{tpu_custom_call.1} parent=11 // pred_region
          %s565 = ssub.s32 16, 16
          %566 = vsyncadd [#allocation16], %s565
          %s568 = sshll.u32 [#allocation15], 4
          %s569 = int_to_ptr.vmem [resolvable:$true] %s568
          %571 = dma.hbm_to_vmem [thread:$0]  %s8, 16, %s569, [#allocation16]
        $region36: #{tpu_custom_call.1} parent=11 // pred_fallthru
          _
        // Predicated region
        $region37: #{tpu_custom_call.1} parent=11 // pred_check
          %p572 = pneg %p276
        $region38: #{tpu_custom_call.1} parent=11 // pred_check_branch
          %574 = sbr.rel (%p572) target = $region40
        $region39: #{tpu_custom_call.1} parent=11 // pred_region
          _
        $region40: #{tpu_custom_call.1} parent=11 // pred_fallthru
          _
        // Predicated region
        $region41: #{tpu_custom_call.1} parent=11 // pred_check
          %p575 = pneg %p297
        $region42: #{tpu_custom_call.1} parent=11 // pred_check_branch
          %577 = sbr.rel (%p575) target = $region44
        $region43: #{tpu_custom_call.1} parent=11 // pred_region
          %s579 = ssub.s32 16, 16
          %580 = vsyncadd [#allocation16], %s579
          %s582 = sshll.u32 [#allocation17], 4
          %s583 = int_to_ptr.vmem [resolvable:$true] %s582
          %585 = dma.hbm_to_vmem [thread:$0]  %s10, 16, %s583, [#allocation16]
        $region44: #{tpu_custom_call.1} parent=11 // pred_fallthru
          _
        // Predicated region
        $region45: #{tpu_custom_call.1} parent=11 // pred_check
          %p586 = pneg %p318
        $region46: #{tpu_custom_call.1} parent=11 // pred_check_branch
          %588 = sbr.rel (%p586) target = $region48
        $region47: #{tpu_custom_call.1} parent=11 // pred_region
          %s590 = ssub.s32 16, 16
          %591 = vsyncadd [#allocation19], %s590
          %s593 = sshll.u32 [#allocation18], 4
          %s594 = int_to_ptr.vmem [resolvable:$true] %s593
          %596 = dma.hbm_to_vmem [thread:$0]  %s11, 16, %s594, [#allocation19]
        $region48: #{tpu_custom_call.1} parent=11 // pred_fallthru
          _
        // Predicated region
        $region49: #{tpu_custom_call.1} parent=11 // pred_check
          %p597 = pneg %p339
        $region50: #{tpu_custom_call.1} parent=11 // pred_check_branch
          %599 = sbr.rel (%p597) target = $region52
        $region51: #{tpu_custom_call.1} parent=11 // pred_region
          %s601 = ssub.s32 16, 16
          %602 = vsyncadd [#allocation19], %s601
          %s604 = sshll.u32 [#allocation20], 4
          %s605 = int_to_ptr.vmem [resolvable:$true] %s604
          %607 = dma.hbm_to_vmem [thread:$0]  %s12, 16, %s605, [#allocation19]
        $region52: #{tpu_custom_call.1} parent=11 // pred_fallthru
          _
        // Predicated region
        $region53: #{tpu_custom_call.1} parent=11 // pred_check
          %p608 = pneg %p360
        $region54: #{tpu_custom_call.1} parent=11 // pred_check_branch
          %610 = sbr.rel (%p608) target = $region56
        $region55: #{tpu_custom_call.1} parent=11 // pred_region
          _
        $region56: #{tpu_custom_call.1} parent=11 // pred_fallthru
          _
        // Predicated region
        $region57: #{tpu_custom_call.1} parent=11 // pred_check
          %p611 = pneg %p381
        $region58: #{tpu_custom_call.1} parent=11 // pred_check_branch
          %613 = sbr.rel (%p611) target = $region60
        $region59: #{tpu_custom_call.1} parent=11 // pred_region
          _
        $region60: #{tpu_custom_call.1} parent=11 // pred_fallthru
          _
        // Predicated region
        $region61: #{tpu_custom_call.1} parent=11 // pred_check
          %p614 = pneg %p402
        $region62: #{tpu_custom_call.1} parent=11 // pred_check_branch
          %616 = sbr.rel (%p614) target = $region64
        $region63: #{tpu_custom_call.1} parent=11 // pred_region
          _
        $region64: #{tpu_custom_call.1} parent=11 // pred_fallthru
          _
        // Predicated region
        $region65: #{tpu_custom_call.1} parent=11 // pred_check
          %p617 = pneg %p423
        $region66: #{tpu_custom_call.1} parent=11 // pred_check_branch
          %619 = sbr.rel (%p617) target = $region68
        $region67: #{tpu_custom_call.1} parent=11 // pred_region
          _
        $region68: #{tpu_custom_call.1} parent=11 // pred_fallthru
          _
        // Predicated region
        $region69: #{tpu_custom_call.1} parent=11 // pred_check
          %p620 = pneg %p444
        $region70: #{tpu_custom_call.1} parent=11 // pred_check_branch
          %622 = sbr.rel (%p620) target = $region72
        $region71: #{tpu_custom_call.1} parent=11 // pred_region
          _
        $region72: #{tpu_custom_call.1} parent=11 // pred_fallthru
          _
        // Predicated region
        $region73: #{tpu_custom_call.1} parent=11 // pred_check
          %p623 = pneg %p465
        $region74: #{tpu_custom_call.1} parent=11 // pred_check_branch
          %625 = sbr.rel (%p623) target = $region76
        $region75: #{tpu_custom_call.1} parent=11 // pred_region
          _
        $region76: #{tpu_custom_call.1} parent=11 // pred_fallthru
          _
      $region12: #{tpu_custom_call.1} parent=5 // pred_fallthru
        _
      %p626 = scmp.lt.s32.totalorder %s35, 4
      // Predicated region
      $region77: #{tpu_custom_call.1} parent=5 // pred_check
        %p627 = pneg %p626
      $region78: #{tpu_custom_call.1} parent=5 // pred_check_branch
        %629 = sbr.rel (%p627) target = $region80
      $region79: #{tpu_custom_call.1} parent=5 // pred_region
        // Predicated region
        $region81: #{tpu_custom_call.1} parent=79 // pred_check
          %p630 = pneg %p69
        $region82: #{tpu_custom_call.1} parent=79 // pred_check_branch
          %632 = sbr.rel (%p630) target = $region84
        $region83: #{tpu_custom_call.1} parent=79 // pred_region
          %p633 = scmp.lt.s32.totalorder %s42, 1
          %s634 = scalar_select %p633, %s42, 1
          %p635 = scmp.lt.s32.totalorder %s43, 1
          %s636 = scalar_select %p635, %s43, 1
          %s637 = smul.addr %s634, 2
          %s638 = sadd.s32 %s636, %s637
          %s639 = smul.addr %s638, 8
          %s640 = scalar_lea.vmem %s0, %s639
        $region84: #{tpu_custom_call.1} parent=79 // pred_fallthru
          _
        // Predicated region
        $region85: #{tpu_custom_call.1} parent=79 // pred_check
          %p641 = pneg %p95
        $region86: #{tpu_custom_call.1} parent=79 // pred_check_branch
          %643 = sbr.rel (%p641) target = $region88
        $region87: #{tpu_custom_call.1} parent=79 // pred_region
          %p644 = scmp.lt.s32.totalorder %s42, 1
          %s645 = scalar_select %p644, %s42, 1
          %s646 = smul.addr %s645, 2
          %s647 = smul.addr %s646, 4
          %s648 = scalar_lea.vmem %s1, %s647
        $region88: #{tpu_custom_call.1} parent=79 // pred_fallthru
          _
        // Predicated region
        $region89: #{tpu_custom_call.1} parent=79 // pred_check
          %p649 = pneg %p123
        $region90: #{tpu_custom_call.1} parent=79 // pred_check_branch
          %651 = sbr.rel (%p649) target = $region92
        $region91: #{tpu_custom_call.1} parent=79 // pred_region
          %s652 = sand.u32 %s113, 1
          %s653 = scalar_lea.sflag [#allocation7], %s652
          %s654 = sand.u32 %s113, 1
          %s655 = smul.addr %s654, 4
          %s656 = scalar_lea.vmem [#allocation6], %s655
          %s658 = ssub.s32 64, 64
          %659 = vsyncadd %s653, %s658
          %s660 = smul.addr %s42, 2
          %s661 = sadd.s32 %s43, %s660
          %s662 = smul.addr %s661, 64
          %s663 = scalar_lea.hbm %s2, %s662
          %s665 = sshll.u32 %s656, 4
          %s666 = int_to_ptr.vmem [resolvable:$true] %s665
          %668 = dma.hbm_to_vmem [thread:$0]  %s663, 64, %s666, %s653
        $region92: #{tpu_custom_call.1} parent=79 // pred_fallthru
          _
      $region80: #{tpu_custom_call.1} parent=5 // pred_fallthru
        _
      %p669 = scmp.le.s32.totalorder 1, %s35
      %p670 = scmp.lt.s32.totalorder %s35, 5
      %p671 = pnand %p669, %p670
      %p672 = pneg %p671
      // Predicated region
      $region93: #{tpu_custom_call.1} parent=5 // pred_check
        _
      $region94: #{tpu_custom_call.1} parent=5 // pred_check_branch
        %674 = sbr.rel (%p671) target = $region96
      $region95: #{tpu_custom_call.1} parent=5 // pred_region
        %s675 = ssub.s32 %s35, 1
        %s676 = sand.u32 %s116, 1
        %s677 = scalar_lea.sflag [#allocation7], %s676
        %s678 = sand.u32 %s116, 1
        %s679 = smul.addr %s678, 4
        %s680 = scalar_lea.vmem [#allocation6], %s679
        // Predicated region
        $region97: #{tpu_custom_call.1} parent=95 // pred_check
          %p681 = pneg %p129
        $region98: #{tpu_custom_call.1} parent=95 // pred_check_branch
          %683 = sbr.rel (%p681) target = $region100
        $region99: #{tpu_custom_call.1} parent=95 // pred_region
          %684 = dma.done %s677, 64
        $region100: #{tpu_custom_call.1} parent=95 // pred_fallthru
          _
        // Predicated region
        $region101: #{tpu_custom_call.1} parent=95 // pred_check
          %p685 = pneg %p150
        $region102: #{tpu_custom_call.1} parent=95 // pred_check_branch
          %687 = sbr.rel (%p685) target = $region104
        $region103: #{tpu_custom_call.1} parent=95 // pred_region
          %688 = dma.done [#allocation10], 256
        $region104: #{tpu_custom_call.1} parent=95 // pred_fallthru
          _
        // Predicated region
        $region105: #{tpu_custom_call.1} parent=95 // pred_check
          %p689 = pneg %p192
        $region106: #{tpu_custom_call.1} parent=95 // pred_check_branch
          %691 = sbr.rel (%p689) target = $region108
        $region107: #{tpu_custom_call.1} parent=95 // pred_region
          %692 = dma.done [#allocation10], 256
        $region108: #{tpu_custom_call.1} parent=95 // pred_fallthru
          _
        // Predicated region
        $region109: #{tpu_custom_call.1} parent=95 // pred_check
          %p693 = pneg %p213
        $region110: #{tpu_custom_call.1} parent=95 // pred_check_branch
          %695 = sbr.rel (%p693) target = $region112
        $region111: #{tpu_custom_call.1} parent=95 // pred_region
          %696 = dma.done [#allocation13], 16
        $region112: #{tpu_custom_call.1} parent=95 // pred_fallthru
          _
        // Predicated region
        $region113: #{tpu_custom_call.1} parent=95 // pred_check
          %p697 = pneg %p234
        $region114: #{tpu_custom_call.1} parent=95 // pred_check_branch
          %699 = sbr.rel (%p697) target = $region116
        $region115: #{tpu_custom_call.1} parent=95 // pred_region
          %700 = dma.done [#allocation13], 256
        $region116: #{tpu_custom_call.1} parent=95 // pred_fallthru
          _
        // Predicated region
        $region117: #{tpu_custom_call.1} parent=95 // pred_check
          %p701 = pneg %p255
        $region118: #{tpu_custom_call.1} parent=95 // pred_check_branch
          %703 = sbr.rel (%p701) target = $region120
        $region119: #{tpu_custom_call.1} parent=95 // pred_region
          %704 = dma.done [#allocation16], 16
        $region120: #{tpu_custom_call.1} parent=95 // pred_fallthru
          _
        // Predicated region
        $region121: #{tpu_custom_call.1} parent=95 // pred_check
          %p705 = pneg %p297
        $region122: #{tpu_custom_call.1} parent=95 // pred_check_branch
          %707 = sbr.rel (%p705) target = $region124
        $region123: #{tpu_custom_call.1} parent=95 // pred_region
          %708 = dma.done [#allocation16], 16
        $region124: #{tpu_custom_call.1} parent=95 // pred_fallthru
          _
        // Predicated region
        $region125: #{tpu_custom_call.1} parent=95 // pred_check
          %p709 = pneg %p318
        $region126: #{tpu_custom_call.1} parent=95 // pred_check_branch
          %711 = sbr.rel (%p709) target = $region128
        $region127: #{tpu_custom_call.1} parent=95 // pred_region
          %712 = dma.done [#allocation19], 16
        $region128: #{tpu_custom_call.1} parent=95 // pred_fallthru
          _
        // Predicated region
        $region129: #{tpu_custom_call.1} parent=95 // pred_check
          %p713 = pneg %p339
        $region130: #{tpu_custom_call.1} parent=95 // pred_check_branch
          %715 = sbr.rel (%p713) target = $region132
        $region131: #{tpu_custom_call.1} parent=95 // pred_region
          %716 = dma.done [#allocation19], 16
        $region132: #{tpu_custom_call.1} parent=95 // pred_fallthru
          _
        %p717 = scmp.lt.s32.totalorder %s44, 1
        %s718 = scalar_select %p717, %s44, 1
        %p719 = scmp.lt.s32.totalorder %s45, 1
        %s720 = scalar_select %p719, %s45, 1
        %s721 = smul.addr %s718, 2
        %s722 = sadd.s32 %s720, %s721
        %s723 = smul.addr %s722, 8
        %s724 = scalar_lea.vmem %s0, %s723
        %p725 = pneg %p75
        %p726 = pneg %p72
        %p727 = scmp.lt.s32.totalorder %s44, 1
        %s728 = scalar_select %p727, %s44, 1
        %s729 = smul.addr %s728, 2
        %s730 = smul.addr %s729, 4
        %s731 = scalar_lea.vmem %s1, %s730
        %p732 = pneg %p101
        %p733 = pneg %p98
        %s734 = sand.u32 %s116, 1
        %s735 = scalar_lea.sflag [#allocation7], %s734
        %s736 = sand.u32 %s116, 1
        %s737 = smul.addr %s736, 4
        %s738 = scalar_lea.vmem [#allocation6], %s737
        %p739 = pneg %p129
        %p740 = pneg %p126
        %p741 = pneg %p150
        %p742 = pneg %p147
        %p743 = pneg %p171
        %p744 = pneg %p168
        %p745 = pneg %p192
        %p746 = pneg %p189
        %p747 = pneg %p213
        %p748 = pneg %p210
        %p749 = pneg %p234
        %p750 = pneg %p231
        %p751 = pneg %p255
        %p752 = pneg %p252
        %p753 = pneg %p276
        %p754 = pneg %p273
        %p755 = pneg %p297
        %p756 = pneg %p294
        %p757 = pneg %p318
        %p758 = pneg %p315
        %p759 = pneg %p339
        %p760 = pneg %p336
        %p761 = pneg %p360
        %p762 = pneg %p357
        %p763 = pneg %p381
        %p764 = pneg %p378
        %p765 = pneg %p402
        %p766 = pneg %p399
        %p767 = pneg %p423
        %p768 = pneg %p420
        %p769 = pneg %p444
        %p770 = pneg %p441
        %p771 = pneg %p465
        %p772 = pneg %p462
        %p773 = pneg %p493
        %p774 = pneg %p490
        %s775 = sand.u32 %s480, 1
        %s776 = scalar_lea.sflag [#allocation8], %s775
        %s777 = sand.u32 %s480, 1
        %s778 = smul.addr %s777, 8
        %s779 = scalar_lea.vmem [#allocation21], %s778
        %p780 = scmp.lt.s32.totalorder %s44, 1
        %s781 = scalar_select %p780, %s44, 1
        %p782 = scmp.lt.s32.totalorder %s45, 1
        %s783 = scalar_select %p782, %s45, 1
        %s784 = smul.addr %s781, 2
        %s785 = sadd.s32 %s783, %s784
        %s786 = smul.addr %s785, 8
        %s787 = scalar_lea.vmem %s0, %s786
        %p788 = scmp.lt.s32.totalorder %s44, 1
        %s789 = scalar_select %p788, %s44, 1
        %s790 = smul.addr %s789, 2
        %s791 = smul.addr %s790, 4
        %s792 = scalar_lea.vmem %s1, %s791
        %p794 = scmp.eq.s32.totalorder %s45, 0
        // Predicated region
        $region133: #{tpu_custom_call.1} parent=95 // pred_check
          %p795 = pneg %p794
        $region134: #{tpu_custom_call.1} parent=95 // pred_check_branch
          %797 = sbr.rel (%p795) target = $region136
        $region135: #{tpu_custom_call.1} parent=95 // pred_region
          %v798 = vld [vmem:[%s792] sm:$0xf]
          %v799 = vld [vmem:[%s792 + $0x4] sm:$0xf]
          %v800 = vld [vmem:[#allocation11] sm:$0xf]
          %v801 = vld [vmem:[#allocation11 + $0x4] sm:$0xf]
          %v802 = vld [vmem:[#allocation11 + $0x8] sm:$0xf]
          %v803 = vld [vmem:[#allocation11 + $0xc] sm:$0xf]
          %v804 = vld [vmem:[#allocation12] sm:$0x1]
          %v806 = vlaneseq
          %v807 = vshrl.u32 %v806, 7
          %v808 = vsub.s32 0, %v807
          %v809 = vrot.slane %v804, %v808
          %v813 = vunpack.c.l.b16 %v798
          %v814 = vunpack.c.l.b16 %v799
          %v815 = vpack.c.b16 %v814, %v813
          %v820 = vunpack.c.l.b16 %v800
          %v821 = vunpack.c.l.b16 %v801
          %v822 = vunpack.c.l.b16 %v802
          %v823 = vunpack.c.l.b16 %v803
          %v824 = vpack.c.b16 %v821, %v820
          %v825 = vpack.c.b16 %v823, %v822
          %vm828 = vcmask 261120
          %v830 = vsel %vm828, %v815, 0
          %832 = vmatprep.subr.bf16.mxu0 0
          %833 = vmatpush1.bf16.msra.mxu0 %v824
          %834 = vmatprep.subr.bf16.mxu0 0
          %835 = vmatpush1.bf16.msra.mxu0 %v825
          %836 = vmatprep.subr.bf16.mxu0 0
          %837 = vmatpush1.bf16.msra.mxu0 0
          %838 = vmatprep.subr.bf16.mxu0 0
          %839 = vmatpush1.bf16.msra.mxu0 0
          %840 = vmatprep.subr.bf16.mxu0 0
          %841 = vmatpush1.bf16.msra.mxu0 0
          %842 = vmatprep.subr.bf16.mxu0 0
          %843 = vmatpush1.bf16.msra.mxu0 0
          %844 = vmatprep.subr.bf16.mxu0 0
          %845 = vmatpush1.bf16.msra.mxu0 0
          %846 = vmatprep.subr.bf16.mxu0 0
          %847 = vmatpush1.bf16.msra.mxu0 0
          %848 = vmatprep.subr.bf16.mxu0 0
          %849 = vmatpush1.bf16.msra.mxu0 0
          %850 = vmatprep.subr.bf16.mxu0 0
          %851 = vmatpush1.bf16.msra.mxu0 0
          %852 = vmatprep.subr.bf16.mxu0 0
          %853 = vmatpush1.bf16.msra.mxu0 0
          %854 = vmatprep.subr.bf16.mxu0 0
          %855 = vmatpush1.bf16.msra.mxu0 0
          %856 = vmatprep.subr.bf16.mxu0 0
          %857 = vmatpush1.bf16.msra.mxu0 0
          %858 = vmatprep.subr.bf16.mxu0 0
          %859 = vmatpush1.bf16.msra.mxu0 0
          %860 = vmatprep.subr.bf16.mxu0 0
          %861 = vmatpush1.bf16.msra.mxu0 0
          %862 = vmatprep.subr.bf16.mxu0 0
          %863 = vmatpush1.bf16.msra.mxu0 0
          %864 = vmatprep.mubr.bf16.mxu0 0
          %865 = vmatmul.mubr.bf16.gmra.mrb[0].mxu0 %v830
          %v866 = vpop.f32.mrb[0].mxu0
          %v867 = vadd.f32 %v809, %v866
          %v868 = vpop.f32.mrb[0].mxu0
          %v869 = vpop.f32.mrb[0].mxu0
          %v870 = vadd.f32 %v809, %v869
          %v871 = vpop.f32.mrb[0].mxu0
          %872 = vdwg.mxu0
          %v873 = vld [vmem:[#allocation14] sm:$0xf]
          %v874 = vld [vmem:[#allocation14 + $0x4] sm:$0xf]
          %v875 = vld [vmem:[#allocation14 + $0x8] sm:$0xf]
          %v876 = vld [vmem:[#allocation14 + $0xc] sm:$0xf]
          %v877 = vld [vmem:[#allocation15] sm:$0x1]
          %v879 = vlaneseq
          %v880 = vshrl.u32 %v879, 7
          %v881 = vsub.s32 0, %v880
          %v882 = vrot.slane %v877, %v881
          %v888 = vunpack.c.l.b16 %v873
          %v889 = vunpack.c.l.b16 %v874
          %v890 = vunpack.c.l.b16 %v875
          %v891 = vunpack.c.l.b16 %v876
          %v892 = vpack.c.b16 %v889, %v888
          %v893 = vpack.c.b16 %v891, %v890
          %896 = vmatprep.subr.bf16.mxu0 0
          %897 = vmatpush1.bf16.msra.mxu0 %v892
          %898 = vmatprep.subr.bf16.mxu0 0
          %899 = vmatpush1.bf16.msra.mxu0 %v893
          %900 = vmatprep.subr.bf16.mxu0 0
          %901 = vmatpush1.bf16.msra.mxu0 0
          %902 = vmatprep.subr.bf16.mxu0 0
          %903 = vmatpush1.bf16.msra.mxu0 0
          %904 = vmatprep.subr.bf16.mxu0 0
          %905 = vmatpush1.bf16.msra.mxu0 0
          %906 = vmatprep.subr.bf16.mxu0 0
          %907 = vmatpush1.bf16.msra.mxu0 0
          %908 = vmatprep.subr.bf16.mxu0 0
          %909 = vmatpush1.bf16.msra.mxu0 0
          %910 = vmatprep.subr.bf16.mxu0 0
          %911 = vmatpush1.bf16.msra.mxu0 0
          %912 = vmatprep.subr.bf16.mxu0 0
          %913 = vmatpush1.bf16.msra.mxu0 0
          %914 = vmatprep.subr.bf16.mxu0 0
          %915 = vmatpush1.bf16.msra.mxu0 0
          %916 = vmatprep.subr.bf16.mxu0 0
          %917 = vmatpush1.bf16.msra.mxu0 0
          %918 = vmatprep.subr.bf16.mxu0 0
          %919 = vmatpush1.bf16.msra.mxu0 0
          %920 = vmatprep.subr.bf16.mxu0 0
          %921 = vmatpush1.bf16.msra.mxu0 0
          %922 = vmatprep.subr.bf16.mxu0 0
          %923 = vmatpush1.bf16.msra.mxu0 0
          %924 = vmatprep.subr.bf16.mxu0 0
          %925 = vmatpush1.bf16.msra.mxu0 0
          %926 = vmatprep.subr.bf16.mxu0 0
          %927 = vmatpush1.bf16.msra.mxu0 0
          %928 = vmatprep.mubr.bf16.mxu0 0
          %929 = vmatmul.mubr.bf16.gmra.mrb[0].mxu0 %v830
          %v930 = vpop.f32.mrb[0].mxu0
          %v931 = vadd.f32 %v882, %v930
          %v932 = vpop.f32.mrb[0].mxu0
          %v933 = vpop.f32.mrb[0].mxu0
          %v934 = vadd.f32 %v882, %v933
          %v935 = vpop.f32.mrb[0].mxu0
          %936 = vdwg.mxu0
          %v937 = vpack.c.bf16 %v870, %v867
          %vm938 = vcmask 64512
          %939 = vst.msk [vmem:[#allocation3] sm:$0xff] %vm938, %v937
          %v940 = vpack.c.bf16 %v934, %v931
          %941 = vst.msk [vmem:[#allocation4] sm:$0xff] %vm938, %v940
          %943 = vrot.lane.b32.xlu0 %v937, 120
          %v944 = vpop.permute.xlu0 %943
          %s946 = scalar_lea.vmem [#allocation3], 8
          %947 = vst.msk [vmem:[%s946] sm:$0xff] %vm938, %v944
          %949 = vrot.lane.b32.xlu0 %v940, 120
          %v950 = vpop.permute.xlu0 %949
          %s952 = scalar_lea.vmem [#allocation4], 8
          %953 = vst.msk [vmem:[%s952] sm:$0xff] %vm938, %v950
          %954 = vrot.lane.b32.xlu0 %v937, 112
          %v955 = vpop.permute.xlu0 %954
          %s957 = scalar_lea.vmem [#allocation3], 16
          %958 = vst.msk [vmem:[%s957] sm:$0xff] %vm938, %v955
          %959 = vrot.lane.b32.xlu0 %v940, 112
          %v960 = vpop.permute.xlu0 %959
          %s962 = scalar_lea.vmem [#allocation4], 16
          %963 = vst.msk [vmem:[%s962] sm:$0xff] %vm938, %v960
          %964 = vrot.lane.b32.xlu0 %v937, 104
          %v965 = vpop.permute.xlu0 %964
          %s967 = scalar_lea.vmem [#allocation3], 24
          %968 = vst.msk [vmem:[%s967] sm:$0xff] %vm938, %v965
          %969 = vrot.lane.b32.xlu0 %v940, 104
          %v970 = vpop.permute.xlu0 %969
          %s972 = scalar_lea.vmem [#allocation4], 24
          %973 = vst.msk [vmem:[%s972] sm:$0xff] %vm938, %v970
        $region136: #{tpu_custom_call.1} parent=95 // pred_fallthru
          _
        %v974 = vld [vmem:[%s787] sm:$0xff]
        %v975 = vpack.c.bf16 %v974, %v974
        %v976 = vld [vmem:[#allocation9] sm:$0xf]
        %v977 = vld [vmem:[#allocation9 + $0x4] sm:$0xf]
        %v978 = vld [vmem:[#allocation9 + $0x8] sm:$0xf]
        %v979 = vld [vmem:[#allocation9 + $0xc] sm:$0xf]
        %v980 = vld [vmem:[%s4] sm:$0x1]
        %v982 = vlaneseq
        %v983 = vshrl.u32 %v982, 7
        %v984 = vsub.s32 0, %v983
        %v985 = vrot.slane %v980, %v984
        %v991 = vunpack.c.l.b16 %v976
        %v992 = vunpack.c.l.b16 %v977
        %v993 = vunpack.c.l.b16 %v978
        %v994 = vunpack.c.l.b16 %v979
        %v995 = vpack.c.b16 %v992, %v991
        %v996 = vpack.c.b16 %v994, %v993
        %vm999 = vcmask 261120
        %v1001 = vsel %vm999, %v975, 0
        %1003 = vmatprep.subr.bf16.mxu0 0
        %1004 = vmatpush1.bf16.msra.mxu0 %v995
        %1005 = vmatprep.subr.bf16.mxu0 0
        %1006 = vmatpush1.bf16.msra.mxu0 %v996
        %1007 = vmatprep.subr.bf16.mxu0 0
        %1008 = vmatpush1.bf16.msra.mxu0 0
        %1009 = vmatprep.subr.bf16.mxu0 0
        %1010 = vmatpush1.bf16.msra.mxu0 0
        %1011 = vmatprep.subr.bf16.mxu0 0
        %1012 = vmatpush1.bf16.msra.mxu0 0
        %1013 = vmatprep.subr.bf16.mxu0 0
        %1014 = vmatpush1.bf16.msra.mxu0 0
        %1015 = vmatprep.subr.bf16.mxu0 0
        %1016 = vmatpush1.bf16.msra.mxu0 0
        %1017 = vmatprep.subr.bf16.mxu0 0
        %1018 = vmatpush1.bf16.msra.mxu0 0
        %1019 = vmatprep.subr.bf16.mxu0 0
        %1020 = vmatpush1.bf16.msra.mxu0 0
        %1021 = vmatprep.subr.bf16.mxu0 0
        %1022 = vmatpush1.bf16.msra.mxu0 0
        %1023 = vmatprep.subr.bf16.mxu0 0
        %1024 = vmatpush1.bf16.msra.mxu0 0
        %1025 = vmatprep.subr.bf16.mxu0 0
        %1026 = vmatpush1.bf16.msra.mxu0 0
        %1027 = vmatprep.subr.bf16.mxu0 0
        %1028 = vmatpush1.bf16.msra.mxu0 0
        %1029 = vmatprep.subr.bf16.mxu0 0
        %1030 = vmatpush1.bf16.msra.mxu0 0
        %1031 = vmatprep.subr.bf16.mxu0 0
        %1032 = vmatpush1.bf16.msra.mxu0 0
        %1033 = vmatprep.subr.bf16.mxu0 0
        %1034 = vmatpush1.bf16.msra.mxu0 0
        %1035 = vmatprep.mubr.bf16.mxu0 0
        %1036 = vmatmul.mubr.bf16.gmra.mrb[0].mxu0 %v1001
        %v1037 = vpop.f32.mrb[0].mxu0
        %v1038 = vadd.f32 %v985, %v1037
        %v1039 = vpop.f32.mrb[0].mxu0
        %v1040 = vpop.f32.mrb[0].mxu0
        %v1041 = vpop.f32.mrb[0].mxu0
        %1042 = vdwg.mxu0
        %v1043 = vmul.f32 %v1038, 0.35355338
        %v1044 = vpack.c.bf16 %v1043, %v1043
        %vm1045 = vcmask 60416
        %1046 = vst.msk [vmem:[#allocation2] sm:$0xf] %vm1045, %v1044
        %v1048 = vunpack.c.l.b16 %v1044
        %v1049 = vpack.c.b16 %v1048, %v1048
        %1050 = vrot.lane.b32.xlu0 %v1049, 120
        %v1051 = vpop.permute.xlu0 %1050
        %s1053 = scalar_lea.vmem [#allocation2], 4
        %1054 = vst.msk [vmem:[%s1053] sm:$0xf] %vm1045, %v1051
        %1055 = vrot.lane.b32.xlu0 %v1049, 112
        %v1056 = vpop.permute.xlu0 %1055
        %s1058 = scalar_lea.vmem [#allocation2], 8
        %1059 = vst.msk [vmem:[%s1058] sm:$0xf] %vm1045, %v1056
        %1060 = vrot.lane.b32.xlu0 %v1049, 104
        %v1061 = vpop.permute.xlu0 %1060
        %s1063 = scalar_lea.vmem [#allocation2], 12
        %1064 = vst.msk [vmem:[%s1063] sm:$0xf] %vm1045, %v1061
        %v1065 = vld [vmem:[#allocation2] sm:$0xf]
        %v1066 = vld [vmem:[#allocation2 + $0x4] sm:$0xf]
        %v1067 = vld [vmem:[#allocation2 + $0x8] sm:$0xf]
        %v1068 = vld [vmem:[#allocation2 + $0xc] sm:$0xf]
        %v1069 = vld [vmem:[#allocation3] sm:$0xff]
        %v1070 = vld [vmem:[#allocation3 + $0x8] sm:$0xff]
        %v1071 = vld [vmem:[#allocation3 + $0x10] sm:$0xff]
        %v1072 = vld [vmem:[#allocation3 + $0x18] sm:$0xff]
        %v1073 = vld [vmem:[%s680] sm:$0xf]
        %v1074 = vunpack.c.l.bf16 %v1073
        %vm1075 = vcmask 64512
        %v1077 = vsel %vm1075, %v1065, 0
        %v1080 = vsel %vm1075, %v1069, 0
        %1082 = vmatprep.subr.bf16.mxu0 0
        %1083 = vmatpush1.bf16.xpose.msra.mxu0 %v1080
        %1084 = vmatprep.subr.bf16.mxu0 0
        %1085 = vmatpush1.bf16.xpose.msra.mxu0 0
        %1086 = vmatprep.subr.bf16.mxu0 0
        %1087 = vmatpush1.bf16.xpose.msra.mxu0 0
        %1088 = vmatprep.subr.bf16.mxu0 0
        %1089 = vmatpush1.bf16.xpose.msra.mxu0 0
        %1090 = vmatprep.subr.bf16.mxu0 0
        %1091 = vmatpush1.bf16.xpose.msra.mxu0 0
        %1092 = vmatprep.subr.bf16.mxu0 0
        %1093 = vmatpush1.bf16.xpose.msra.mxu0 0
        %1094 = vmatprep.subr.bf16.mxu0 0
        %1095 = vmatpush1.bf16.xpose.msra.mxu0 0
        %1096 = vmatprep.subr.bf16.mxu0 0
        %1097 = vmatpush1.bf16.xpose.msra.mxu0 0
        %1098 = vmatprep.subr.bf16.mxu0 0
        %1099 = vmatpush1.bf16.xpose.msra.mxu0 0
        %1100 = vmatprep.subr.bf16.mxu0 0
        %1101 = vmatpush1.bf16.xpose.msra.mxu0 0
        %1102 = vmatprep.subr.bf16.mxu0 0
        %1103 = vmatpush1.bf16.xpose.msra.mxu0 0
        %1104 = vmatprep.subr.bf16.mxu0 0
        %1105 = vmatpush1.bf16.xpose.msra.mxu0 0
        %1106 = vmatprep.subr.bf16.mxu0 0
        %1107 = vmatpush1.bf16.xpose.msra.mxu0 0
        %1108 = vmatprep.subr.bf16.mxu0 0
        %1109 = vmatpush1.bf16.xpose.msra.mxu0 0
        %1110 = vmatprep.subr.bf16.mxu0 0
        %1111 = vmatpush1.bf16.xpose.msra.mxu0 0
        %1112 = vmatprep.subr.bf16.mxu0 0
        %1113 = vmatpush1.bf16.xpose.msra.mxu0 0
        %1114 = vmatprep.mubr.bf16.mxu0 0
        %1115 = vmatmul.mubr.bf16.gmra.mrb[0].mxu0 %v1077
        %v1116 = vpop.f32.mrb[0].mxu0
        %v1117 = vadd.f32 %v1074, %v1116
        %v1118 = vpop.f32.mrb[0].mxu0
        %v1119 = vpop.f32.mrb[0].mxu0
        %v1120 = vpop.f32.mrb[0].mxu0
        %1121 = vdwg.mxu0
        %v1123 = vsel %vm1075, %v1066, 0
        %v1126 = vsel %vm1075, %v1070, 0
        %1128 = vmatprep.subr.bf16.mxu0 0
        %1129 = vmatpush1.bf16.xpose.msra.mxu0 %v1126
        %1130 = vmatprep.subr.bf16.mxu0 0
        %1131 = vmatpush1.bf16.xpose.msra.mxu0 0
        %1132 = vmatprep.subr.bf16.mxu0 0
        %1133 = vmatpush1.bf16.xpose.msra.mxu0 0
        %1134 = vmatprep.subr.bf16.mxu0 0
        %1135 = vmatpush1.bf16.xpose.msra.mxu0 0
        %1136 = vmatprep.subr.bf16.mxu0 0
        %1137 = vmatpush1.bf16.xpose.msra.mxu0 0
        %1138 = vmatprep.subr.bf16.mxu0 0
        %1139 = vmatpush1.bf16.xpose.msra.mxu0 0
        %1140 = vmatprep.subr.bf16.mxu0 0
        %1141 = vmatpush1.bf16.xpose.msra.mxu0 0
        %1142 = vmatprep.subr.bf16.mxu0 0
        %1143 = vmatpush1.bf16.xpose.msra.mxu0 0
        %1144 = vmatprep.subr.bf16.mxu0 0
        %1145 = vmatpush1.bf16.xpose.msra.mxu0 0
        %1146 = vmatprep.subr.bf16.mxu0 0
        %1147 = vmatpush1.bf16.xpose.msra.mxu0 0
        %1148 = vmatprep.subr.bf16.mxu0 0
        %1149 = vmatpush1.bf16.xpose.msra.mxu0 0
        %1150 = vmatprep.subr.bf16.mxu0 0
        %1151 = vmatpush1.bf16.xpose.msra.mxu0 0
        %1152 = vmatprep.subr.bf16.mxu0 0
        %1153 = vmatpush1.bf16.xpose.msra.mxu0 0
        %1154 = vmatprep.subr.bf16.mxu0 0
        %1155 = vmatpush1.bf16.xpose.msra.mxu0 0
        %1156 = vmatprep.subr.bf16.mxu0 0
        %1157 = vmatpush1.bf16.xpose.msra.mxu0 0
        %1158 = vmatprep.subr.bf16.mxu0 0
        %1159 = vmatpush1.bf16.xpose.msra.mxu0 0
        %1160 = vmatprep.mubr.bf16.mxu0 0
        %1161 = vmatmul.mubr.bf16.gmra.mrb[0].mxu0 %v1123
        %v1162 = vpop.f32.mrb[0].mxu0
        %v1163 = vadd.f32 %v1074, %v1162
        %v1164 = vpop.f32.mrb[0].mxu0
        %v1165 = vpop.f32.mrb[0].mxu0
        %v1166 = vpop.f32.mrb[0].mxu0
        %1167 = vdwg.mxu0
        %v1169 = vsel %vm1075, %v1067, 0
        %v1172 = vsel %vm1075, %v1071, 0
        %1174 = vmatprep.subr.bf16.mxu0 0
        %1175 = vmatpush1.bf16.xpose.msra.mxu0 %v1172
        %1176 = vmatprep.subr.bf16.mxu0 0
        %1177 = vmatpush1.bf16.xpose.msra.mxu0 0
        %1178 = vmatprep.subr.bf16.mxu0 0
        %1179 = vmatpush1.bf16.xpose.msra.mxu0 0
        %1180 = vmatprep.subr.bf16.mxu0 0
        %1181 = vmatpush1.bf16.xpose.msra.mxu0 0
        %1182 = vmatprep.subr.bf16.mxu0 0
        %1183 = vmatpush1.bf16.xpose.msra.mxu0 0
        %1184 = vmatprep.subr.bf16.mxu0 0
        %1185 = vmatpush1.bf16.xpose.msra.mxu0 0
        %1186 = vmatprep.subr.bf16.mxu0 0
        %1187 = vmatpush1.bf16.xpose.msra.mxu0 0
        %1188 = vmatprep.subr.bf16.mxu0 0
        %1189 = vmatpush1.bf16.xpose.msra.mxu0 0
        %1190 = vmatprep.subr.bf16.mxu0 0
        %1191 = vmatpush1.bf16.xpose.msra.mxu0 0
        %1192 = vmatprep.subr.bf16.mxu0 0
        %1193 = vmatpush1.bf16.xpose.msra.mxu0 0
        %1194 = vmatprep.subr.bf16.mxu0 0
        %1195 = vmatpush1.bf16.xpose.msra.mxu0 0
        %1196 = vmatprep.subr.bf16.mxu0 0
        %1197 = vmatpush1.bf16.xpose.msra.mxu0 0
        %1198 = vmatprep.subr.bf16.mxu0 0
        %1199 = vmatpush1.bf16.xpose.msra.mxu0 0
        %1200 = vmatprep.subr.bf16.mxu0 0
        %1201 = vmatpush1.bf16.xpose.msra.mxu0 0
        %1202 = vmatprep.subr.bf16.mxu0 0
        %1203 = vmatpush1.bf16.xpose.msra.mxu0 0
        %1204 = vmatprep.subr.bf16.mxu0 0
        %1205 = vmatpush1.bf16.xpose.msra.mxu0 0
        %1206 = vmatprep.mubr.bf16.mxu0 0
        %1207 = vmatmul.mubr.bf16.gmra.mrb[0].mxu0 %v1169
        %v1208 = vpop.f32.mrb[0].mxu0
        %v1209 = vadd.f32 %v1074, %v1208
        %v1210 = vpop.f32.mrb[0].mxu0
        %v1211 = vpop.f32.mrb[0].mxu0
        %v1212 = vpop.f32.mrb[0].mxu0
        %1213 = vdwg.mxu0
        %v1215 = vsel %vm1075, %v1068, 0
        %v1218 = vsel %vm1075, %v1072, 0
        %1220 = vmatprep.subr.bf16.mxu0 0
        %1221 = vmatpush1.bf16.xpose.msra.mxu0 %v1218
        %1222 = vmatprep.subr.bf16.mxu0 0
        %1223 = vmatpush1.bf16.xpose.msra.mxu0 0
        %1224 = vmatprep.subr.bf16.mxu0 0
        %1225 = vmatpush1.bf16.xpose.msra.mxu0 0
        %1226 = vmatprep.subr.bf16.mxu0 0
        %1227 = vmatpush1.bf16.xpose.msra.mxu0 0
        %1228 = vmatprep.subr.bf16.mxu0 0
        %1229 = vmatpush1.bf16.xpose.msra.mxu0 0
        %1230 = vmatprep.subr.bf16.mxu0 0
        %1231 = vmatpush1.bf16.xpose.msra.mxu0 0
        %1232 = vmatprep.subr.bf16.mxu0 0
        %1233 = vmatpush1.bf16.xpose.msra.mxu0 0
        %1234 = vmatprep.subr.bf16.mxu0 0
        %1235 = vmatpush1.bf16.xpose.msra.mxu0 0
        %1236 = vmatprep.subr.bf16.mxu0 0
        %1237 = vmatpush1.bf16.xpose.msra.mxu0 0
        %1238 = vmatprep.subr.bf16.mxu0 0
        %1239 = vmatpush1.bf16.xpose.msra.mxu0 0
        %1240 = vmatprep.subr.bf16.mxu0 0
        %1241 = vmatpush1.bf16.xpose.msra.mxu0 0
        %1242 = vmatprep.subr.bf16.mxu0 0
        %1243 = vmatpush1.bf16.xpose.msra.mxu0 0
        %1244 = vmatprep.subr.bf16.mxu0 0
        %1245 = vmatpush1.bf16.xpose.msra.mxu0 0
        %1246 = vmatprep.subr.bf16.mxu0 0
        %1247 = vmatpush1.bf16.xpose.msra.mxu0 0
        %1248 = vmatprep.subr.bf16.mxu0 0
        %1249 = vmatpush1.bf16.xpose.msra.mxu0 0
        %1250 = vmatprep.subr.bf16.mxu0 0
        %1251 = vmatpush1.bf16.xpose.msra.mxu0 0
        %1252 = vmatprep.mubr.bf16.mxu0 0
        %1253 = vmatmul.mubr.bf16.gmra.mrb[0].mxu0 %v1215
        %v1254 = vpop.f32.mrb[0].mxu0
        %v1255 = vadd.f32 %v1074, %v1254
        %v1256 = vpop.f32.mrb[0].mxu0
        %v1257 = vpop.f32.mrb[0].mxu0
        %v1258 = vpop.f32.mrb[0].mxu0
        %1259 = vdwg.mxu0
        %vm1260 = vcmask 130048
        %v1261 = vsel %vm1260, %v1117, -inf
        %1262 = vmax.xlane.f32.xlu0 %v1261
        %v1263 = vpop.xlane.xlu0 %1262
        %v1264 = vsel %vm1260, %v1163, -inf
        %1265 = vmax.xlane.f32.xlu0 %v1264
        %v1266 = vpop.xlane.xlu0 %1265
        %v1267 = vsel %vm1260, %v1209, -inf
        %1268 = vmax.xlane.f32.xlu0 %v1267
        %v1269 = vpop.xlane.xlu0 %1268
        %v1270 = vsel %vm1260, %v1255, -inf
        %1271 = vmax.xlane.f32.xlu0 %v1270
        %v1272 = vpop.xlane.xlu0 %1271
        %v1273 = vsub.f32 %v1117, %v1263
        %v1274 = vsub.f32 %v1163, %v1266
        %v1275 = vsub.f32 %v1209, %v1269
        %v1276 = vsub.f32 %v1255, %v1272
        %v1277 = vmul.f32 %v1273, 1.442695
        %v1278 = vpow.pop %v1277
        %v1279 = vmul.f32 %v1274, 1.442695
        %v1280 = vpow.pop %v1279
        %v1281 = vmul.f32 %v1275, 1.442695
        %v1282 = vpow.pop %v1281
        %v1283 = vmul.f32 %v1276, 1.442695
        %v1284 = vpow.pop %v1283
        %v1285 = vsel %vm1260, %v1278, 0.0
        %1286 = vadd.xlane.f32.xlu0 %v1285
        %v1287 = vpop.xlane.xlu0 %1286
        %v1288 = vsel %vm1260, %v1280, 0.0
        %1289 = vadd.xlane.f32.xlu0 %v1288
        %v1290 = vpop.xlane.xlu0 %1289
        %v1291 = vsel %vm1260, %v1282, 0.0
        %1292 = vadd.xlane.f32.xlu0 %v1291
        %v1293 = vpop.xlane.xlu0 %1292
        %v1294 = vsel %vm1260, %v1284, 0.0
        %1295 = vadd.xlane.f32.xlu0 %v1294
        %v1296 = vpop.xlane.xlu0 %1295
        %v1297 = vpack.c.bf16 %v1278, %v1278
        %v1298 = vpack.c.bf16 %v1280, %v1280
        %v1299 = vpack.c.bf16 %v1282, %v1282
        %v1300 = vpack.c.bf16 %v1284, %v1284
        %v1301 = vld [vmem:[#allocation4] sm:$0xff]
        %v1302 = vld [vmem:[#allocation4 + $0x8] sm:$0xff]
        %v1303 = vld [vmem:[#allocation4 + $0x10] sm:$0xff]
        %v1304 = vld [vmem:[#allocation4 + $0x18] sm:$0xff]
        %v1306 = vsel %vm1260, %v1297, 0
        %1308 = vmatprep.subr.bf16.mxu0 0
        %1309 = vmatpush1.bf16.msra.mxu0 %v1301
        %1310 = vmatprep.subr.bf16.mxu0 0
        %1311 = vmatpush1.bf16.msra.mxu0 0
        %1312 = vmatprep.subr.bf16.mxu0 0
        %1313 = vmatpush1.bf16.msra.mxu0 0
        %1314 = vmatprep.subr.bf16.mxu0 0
        %1315 = vmatpush1.bf16.msra.mxu0 0
        %1316 = vmatprep.subr.bf16.mxu0 0
        %1317 = vmatpush1.bf16.msra.mxu0 0
        %1318 = vmatprep.subr.bf16.mxu0 0
        %1319 = vmatpush1.bf16.msra.mxu0 0
        %1320 = vmatprep.subr.bf16.mxu0 0
        %1321 = vmatpush1.bf16.msra.mxu0 0
        %1322 = vmatprep.subr.bf16.mxu0 0
        %1323 = vmatpush1.bf16.msra.mxu0 0
        %1324 = vmatprep.subr.bf16.mxu0 0
        %1325 = vmatpush1.bf16.msra.mxu0 0
        %1326 = vmatprep.subr.bf16.mxu0 0
        %1327 = vmatpush1.bf16.msra.mxu0 0
        %1328 = vmatprep.subr.bf16.mxu0 0
        %1329 = vmatpush1.bf16.msra.mxu0 0
        %1330 = vmatprep.subr.bf16.mxu0 0
        %1331 = vmatpush1.bf16.msra.mxu0 0
        %1332 = vmatprep.subr.bf16.mxu0 0
        %1333 = vmatpush1.bf16.msra.mxu0 0
        %1334 = vmatprep.subr.bf16.mxu0 0
        %1335 = vmatpush1.bf16.msra.mxu0 0
        %1336 = vmatprep.subr.bf16.mxu0 0
        %1337 = vmatpush1.bf16.msra.mxu0 0
        %1338 = vmatprep.subr.bf16.mxu0 0
        %1339 = vmatpush1.bf16.msra.mxu0 0
        %1340 = vmatprep.mubr.bf16.mxu0 0
        %1341 = vmatmul.mubr.bf16.gmra.mrb[0].mxu0 %v1306
        %v1342 = vpop.f32.mrb[0].mxu0
        %v1343 = vadd.f32 0.0, %v1342
        %v1344 = vpop.f32.mrb[0].mxu0
        %v1345 = vpop.f32.mrb[0].mxu0
        %v1346 = vpop.f32.mrb[0].mxu0
        %1347 = vdwg.mxu0
        %v1349 = vsel %vm1260, %v1298, 0
        %1351 = vmatprep.subr.bf16.mxu0 0
        %1352 = vmatpush1.bf16.msra.mxu0 %v1302
        %1353 = vmatprep.subr.bf16.mxu0 0
        %1354 = vmatpush1.bf16.msra.mxu0 0
        %1355 = vmatprep.subr.bf16.mxu0 0
        %1356 = vmatpush1.bf16.msra.mxu0 0
        %1357 = vmatprep.subr.bf16.mxu0 0
        %1358 = vmatpush1.bf16.msra.mxu0 0
        %1359 = vmatprep.subr.bf16.mxu0 0
        %1360 = vmatpush1.bf16.msra.mxu0 0
        %1361 = vmatprep.subr.bf16.mxu0 0
        %1362 = vmatpush1.bf16.msra.mxu0 0
        %1363 = vmatprep.subr.bf16.mxu0 0
        %1364 = vmatpush1.bf16.msra.mxu0 0
        %1365 = vmatprep.subr.bf16.mxu0 0
        %1366 = vmatpush1.bf16.msra.mxu0 0
        %1367 = vmatprep.subr.bf16.mxu0 0
        %1368 = vmatpush1.bf16.msra.mxu0 0
        %1369 = vmatprep.subr.bf16.mxu0 0
        %1370 = vmatpush1.bf16.msra.mxu0 0
        %1371 = vmatprep.subr.bf16.mxu0 0
        %1372 = vmatpush1.bf16.msra.mxu0 0
        %1373 = vmatprep.subr.bf16.mxu0 0
        %1374 = vmatpush1.bf16.msra.mxu0 0
        %1375 = vmatprep.subr.bf16.mxu0 0
        %1376 = vmatpush1.bf16.msra.mxu0 0
        %1377 = vmatprep.subr.bf16.mxu0 0
        %1378 = vmatpush1.bf16.msra.mxu0 0
        %1379 = vmatprep.subr.bf16.mxu0 0
        %1380 = vmatpush1.bf16.msra.mxu0 0
        %1381 = vmatprep.subr.bf16.mxu0 0
        %1382 = vmatpush1.bf16.msra.mxu0 0
        %1383 = vmatprep.mubr.bf16.mxu0 0
        %1384 = vmatmul.mubr.bf16.gmra.mrb[0].mxu0 %v1349
        %v1385 = vpop.f32.mrb[0].mxu0
        %v1386 = vadd.f32 0.0, %v1385
        %v1387 = vpop.f32.mrb[0].mxu0
        %v1388 = vpop.f32.mrb[0].mxu0
        %v1389 = vpop.f32.mrb[0].mxu0
        %1390 = vdwg.mxu0
        %v1392 = vsel %vm1260, %v1299, 0
        %1394 = vmatprep.subr.bf16.mxu0 0
        %1395 = vmatpush1.bf16.msra.mxu0 %v1303
        %1396 = vmatprep.subr.bf16.mxu0 0
        %1397 = vmatpush1.bf16.msra.mxu0 0
        %1398 = vmatprep.subr.bf16.mxu0 0
        %1399 = vmatpush1.bf16.msra.mxu0 0
        %1400 = vmatprep.subr.bf16.mxu0 0
        %1401 = vmatpush1.bf16.msra.mxu0 0
        %1402 = vmatprep.subr.bf16.mxu0 0
        %1403 = vmatpush1.bf16.msra.mxu0 0
        %1404 = vmatprep.subr.bf16.mxu0 0
        %1405 = vmatpush1.bf16.msra.mxu0 0
        %1406 = vmatprep.subr.bf16.mxu0 0
        %1407 = vmatpush1.bf16.msra.mxu0 0
        %1408 = vmatprep.subr.bf16.mxu0 0
        %1409 = vmatpush1.bf16.msra.mxu0 0
        %1410 = vmatprep.subr.bf16.mxu0 0
        %1411 = vmatpush1.bf16.msra.mxu0 0
        %1412 = vmatprep.subr.bf16.mxu0 0
        %1413 = vmatpush1.bf16.msra.mxu0 0
        %1414 = vmatprep.subr.bf16.mxu0 0
        %1415 = vmatpush1.bf16.msra.mxu0 0
        %1416 = vmatprep.subr.bf16.mxu0 0
        %1417 = vmatpush1.bf16.msra.mxu0 0
        %1418 = vmatprep.subr.bf16.mxu0 0
        %1419 = vmatpush1.bf16.msra.mxu0 0
        %1420 = vmatprep.subr.bf16.mxu0 0
        %1421 = vmatpush1.bf16.msra.mxu0 0
        %1422 = vmatprep.subr.bf16.mxu0 0
        %1423 = vmatpush1.bf16.msra.mxu0 0
        %1424 = vmatprep.subr.bf16.mxu0 0
        %1425 = vmatpush1.bf16.msra.mxu0 0
        %1426 = vmatprep.mubr.bf16.mxu0 0
        %1427 = vmatmul.mubr.bf16.gmra.mrb[0].mxu0 %v1392
        %v1428 = vpop.f32.mrb[0].mxu0
        %v1429 = vadd.f32 0.0, %v1428
        %v1430 = vpop.f32.mrb[0].mxu0
        %v1431 = vpop.f32.mrb[0].mxu0
        %v1432 = vpop.f32.mrb[0].mxu0
        %1433 = vdwg.mxu0
        %v1435 = vsel %vm1260, %v1300, 0
        %1437 = vmatprep.subr.bf16.mxu0 0
        %1438 = vmatpush1.bf16.msra.mxu0 %v1304
        %1439 = vmatprep.subr.bf16.mxu0 0
        %1440 = vmatpush1.bf16.msra.mxu0 0
        %1441 = vmatprep.subr.bf16.mxu0 0
        %1442 = vmatpush1.bf16.msra.mxu0 0
        %1443 = vmatprep.subr.bf16.mxu0 0
        %1444 = vmatpush1.bf16.msra.mxu0 0
        %1445 = vmatprep.subr.bf16.mxu0 0
        %1446 = vmatpush1.bf16.msra.mxu0 0
        %1447 = vmatprep.subr.bf16.mxu0 0
        %1448 = vmatpush1.bf16.msra.mxu0 0
        %1449 = vmatprep.subr.bf16.mxu0 0
        %1450 = vmatpush1.bf16.msra.mxu0 0
        %1451 = vmatprep.subr.bf16.mxu0 0
        %1452 = vmatpush1.bf16.msra.mxu0 0
        %1453 = vmatprep.subr.bf16.mxu0 0
        %1454 = vmatpush1.bf16.msra.mxu0 0
        %1455 = vmatprep.subr.bf16.mxu0 0
        %1456 = vmatpush1.bf16.msra.mxu0 0
        %1457 = vmatprep.subr.bf16.mxu0 0
        %1458 = vmatpush1.bf16.msra.mxu0 0
        %1459 = vmatprep.subr.bf16.mxu0 0
        %1460 = vmatpush1.bf16.msra.mxu0 0
        %1461 = vmatprep.subr.bf16.mxu0 0
        %1462 = vmatpush1.bf16.msra.mxu0 0
        %1463 = vmatprep.subr.bf16.mxu0 0
        %1464 = vmatpush1.bf16.msra.mxu0 0
        %1465 = vmatprep.subr.bf16.mxu0 0
        %1466 = vmatpush1.bf16.msra.mxu0 0
        %1467 = vmatprep.subr.bf16.mxu0 0
        %1468 = vmatpush1.bf16.msra.mxu0 0
        %1469 = vmatprep.mubr.bf16.mxu0 0
        %1470 = vmatmul.mubr.bf16.gmra.mrb[0].mxu0 %v1435
        %v1471 = vpop.f32.mrb[0].mxu0
        %v1472 = vadd.f32 0.0, %v1471
        %v1473 = vpop.f32.mrb[0].mxu0
        %v1474 = vpop.f32.mrb[0].mxu0
        %v1475 = vpop.f32.mrb[0].mxu0
        %1476 = vdwg.mxu0
        %v1477 = vrcp.pop %v1287
        %v1478 = vrcp.pop %v1290
        %v1479 = vrcp.pop %v1293
        %v1480 = vrcp.pop %v1296
        %v1481 = vmul.f32 %v1343, %v1477
        %v1482 = vmul.f32 %v1386, %v1478
        %v1483 = vmul.f32 %v1429, %v1479
        %v1484 = vmul.f32 %v1472, %v1480
        %v1485 = vpack.c.bf16 %v1481, %v1481
        %1486 = vst.msk [vmem:[#allocation5] sm:$0xf] %vm1045, %v1485
        %v1487 = vpack.c.bf16 %v1482, %v1482
        %v1489 = vunpack.c.l.b16 %v1487
        %v1490 = vpack.c.b16 %v1489, %v1489
        %1491 = vrot.lane.b32.xlu0 %v1490, 8
        %v1492 = vpop.permute.xlu0 %1491
        %vm1494 = vcmask 126016
        %1495 = vst.msk [vmem:[#allocation5] sm:$0xf] %vm1494, %v1492
        %v1496 = vpack.c.bf16 %v1483, %v1483
        %v1498 = vunpack.c.l.b16 %v1496
        %v1499 = vpack.c.b16 %v1498, %v1498
        %1500 = vrot.lane.b32.xlu0 %v1499, 16
        %v1501 = vpop.permute.xlu0 %1500
        %vm1503 = vcmask 191616
        %1504 = vst.msk [vmem:[#allocation5] sm:$0xf] %vm1503, %v1501
        %v1505 = vpack.c.bf16 %v1484, %v1484
        %v1507 = vunpack.c.l.b16 %v1505
        %v1508 = vpack.c.b16 %v1507, %v1507
        %1509 = vrot.lane.b32.xlu0 %v1508, 24
        %v1510 = vpop.permute.xlu0 %1509
        %vm1512 = vcmask 257216
        %1513 = vst.msk [vmem:[#allocation5] sm:$0xf] %vm1512, %v1510
        %v1514 = vld [vmem:[#allocation5] sm:$0xf]
        %v1515 = vld [vmem:[%s9] sm:$0xf]
        %v1516 = vld [vmem:[%s9 + $0x4] sm:$0xf]
        %v1517 = vld [vmem:[%s9 + $0x8] sm:$0xf]
        %v1518 = vld [vmem:[%s9 + $0xc] sm:$0xf]
        %v1519 = vld [vmem:[#allocation17] sm:$0x1]
        %v1521 = vlaneseq
        %v1522 = vshrl.u32 %v1521, 7
        %v1523 = vsub.s32 0, %v1522
        %v1524 = vrot.slane %v1519, %v1523
        %v1530 = vunpack.c.l.b16 %v1515
        %v1531 = vunpack.c.l.b16 %v1516
        %v1532 = vunpack.c.l.b16 %v1517
        %v1533 = vunpack.c.l.b16 %v1518
        %v1534 = vpack.c.b16 %v1531, %v1530
        %v1535 = vpack.c.b16 %v1533, %v1532
        %v1539 = vsel %vm999, %v1514, 0
        %1541 = vmatprep.subr.bf16.mxu0 0
        %1542 = vmatpush1.bf16.msra.mxu0 %v1534
        %1543 = vmatprep.subr.bf16.mxu0 0
        %1544 = vmatpush1.bf16.msra.mxu0 %v1535
        %1545 = vmatprep.subr.bf16.mxu0 0
        %1546 = vmatpush1.bf16.msra.mxu0 0
        %1547 = vmatprep.subr.bf16.mxu0 0
        %1548 = vmatpush1.bf16.msra.mxu0 0
        %1549 = vmatprep.subr.bf16.mxu0 0
        %1550 = vmatpush1.bf16.msra.mxu0 0
        %1551 = vmatprep.subr.bf16.mxu0 0
        %1552 = vmatpush1.bf16.msra.mxu0 0
        %1553 = vmatprep.subr.bf16.mxu0 0
        %1554 = vmatpush1.bf16.msra.mxu0 0
        %1555 = vmatprep.subr.bf16.mxu0 0
        %1556 = vmatpush1.bf16.msra.mxu0 0
        %1557 = vmatprep.subr.bf16.mxu0 0
        %1558 = vmatpush1.bf16.msra.mxu0 0
        %1559 = vmatprep.subr.bf16.mxu0 0
        %1560 = vmatpush1.bf16.msra.mxu0 0
        %1561 = vmatprep.subr.bf16.mxu0 0
        %1562 = vmatpush1.bf16.msra.mxu0 0
        %1563 = vmatprep.subr.bf16.mxu0 0
        %1564 = vmatpush1.bf16.msra.mxu0 0
        %1565 = vmatprep.subr.bf16.mxu0 0
        %1566 = vmatpush1.bf16.msra.mxu0 0
        %1567 = vmatprep.subr.bf16.mxu0 0
        %1568 = vmatpush1.bf16.msra.mxu0 0
        %1569 = vmatprep.subr.bf16.mxu0 0
        %1570 = vmatpush1.bf16.msra.mxu0 0
        %1571 = vmatprep.subr.bf16.mxu0 0
        %1572 = vmatpush1.bf16.msra.mxu0 0
        %1573 = vmatprep.mubr.bf16.mxu0 0
        %1574 = vmatmul.mubr.bf16.gmra.mrb[0].mxu0 %v1539
        %v1575 = vpop.f32.mrb[0].mxu0
        %v1576 = vadd.f32 %v1524, %v1575
        %v1577 = vpop.f32.mrb[0].mxu0
        %v1578 = vpop.f32.mrb[0].mxu0
        %v1579 = vpop.f32.mrb[0].mxu0
        %1580 = vdwg.mxu0
        %v1581 = vadd.f32 %v974, %v1576
        %v1582 = vsel %vm999, %v1581, 0.0
        %1583 = vadd.xlane.f32.xlu0 %v1582
        %v1584 = vpop.xlane.xlu0 %1583
        %v1585 = vrcp.pop 32.0
        %v1586 = vmul.f32 %v1584, %v1585
        %v1587 = vsub.f32 %v1581, %v1586
        %v1588 = vmul.f32 %v1587, %v1587
        %v1589 = vsel %vm999, %v1588, 0.0
        %1590 = vadd.xlane.f32.xlu0 %v1589
        %v1591 = vpop.xlane.xlu0 %1590
        %v1592 = vmul.f32 %v1591, %v1585
        %v1593 = vadd.f32 %v1592, 1e-05
        %v1594 = vrsqrt.pop %v1593
        %v1595 = vmul.f32 %v1587, %v1594
        %v1596 = vld [vmem:[#allocation18] sm:$0x1]
        %v1598 = vlaneseq
        %v1599 = vshrl.u32 %v1598, 7
        %v1600 = vsub.s32 0, %v1599
        %v1601 = vrot.slane %v1596, %v1600
        %v1603 = vmul.f32 %v1595, %v1601
        %v1604 = vld [vmem:[#allocation20] sm:$0x1]
        %v1606 = vlaneseq
        %v1607 = vshrl.u32 %v1606, 7
        %v1608 = vsub.s32 0, %v1607
        %v1609 = vrot.slane %v1604, %v1608
        %v1611 = vadd.f32 %v1603, %v1609
        %v1612 = vpack.c.bf16 %v1611, %v1611
        %v1613 = vld [vmem:[%s13] sm:$0xf]
        %v1614 = vld [vmem:[%s13 + $0x4] sm:$0xf]
        %v1615 = vld [vmem:[%s13 + $0x8] sm:$0xf]
        %v1616 = vld [vmem:[%s13 + $0xc] sm:$0xf]
        %v1617 = vld [vmem:[%s14] sm:$0x1]
        %v1619 = vlaneseq
        %v1620 = vshrl.u32 %v1619, 7
        %v1621 = vsub.s32 0, %v1620
        %v1622 = vrot.slane %v1617, %v1621
        %v1628 = vunpack.c.l.b16 %v1613
        %v1629 = vunpack.c.l.b16 %v1614
        %v1630 = vunpack.c.l.b16 %v1615
        %v1631 = vunpack.c.l.b16 %v1616
        %v1632 = vpack.c.b16 %v1629, %v1628
        %v1633 = vpack.c.b16 %v1631, %v1630
        %v1637 = vsel %vm999, %v1612, 0
        %1639 = vmatprep.subr.bf16.mxu0 0
        %1640 = vmatpush1.bf16.msra.mxu0 %v1632
        %1641 = vmatprep.subr.bf16.mxu0 0
        %1642 = vmatpush1.bf16.msra.mxu0 %v1633
        %1643 = vmatprep.subr.bf16.mxu0 0
        %1644 = vmatpush1.bf16.msra.mxu0 0
        %1645 = vmatprep.subr.bf16.mxu0 0
        %1646 = vmatpush1.bf16.msra.mxu0 0
        %1647 = vmatprep.subr.bf16.mxu0 0
        %1648 = vmatpush1.bf16.msra.mxu0 0
        %1649 = vmatprep.subr.bf16.mxu0 0
        %1650 = vmatpush1.bf16.msra.mxu0 0
        %1651 = vmatprep.subr.bf16.mxu0 0
        %1652 = vmatpush1.bf16.msra.mxu0 0
        %1653 = vmatprep.subr.bf16.mxu0 0
        %1654 = vmatpush1.bf16.msra.mxu0 0
        %1655 = vmatprep.subr.bf16.mxu0 0
        %1656 = vmatpush1.bf16.msra.mxu0 0
        %1657 = vmatprep.subr.bf16.mxu0 0
        %1658 = vmatpush1.bf16.msra.mxu0 0
        %1659 = vmatprep.subr.bf16.mxu0 0
        %1660 = vmatpush1.bf16.msra.mxu0 0
        %1661 = vmatprep.subr.bf16.mxu0 0
        %1662 = vmatpush1.bf16.msra.mxu0 0
        %1663 = vmatprep.subr.bf16.mxu0 0
        %1664 = vmatpush1.bf16.msra.mxu0 0
        %1665 = vmatprep.subr.bf16.mxu0 0
        %1666 = vmatpush1.bf16.msra.mxu0 0
        %1667 = vmatprep.subr.bf16.mxu0 0
        %1668 = vmatpush1.bf16.msra.mxu0 0
        %1669 = vmatprep.subr.bf16.mxu0 0
        %1670 = vmatpush1.bf16.msra.mxu0 0
        %1671 = vmatprep.mubr.bf16.mxu0 0
        %1672 = vmatmul.mubr.bf16.gmra.mrb[0].mxu0 %v1637
        %v1673 = vpop.f32.mrb[0].mxu0
        %v1674 = vadd.f32 %v1622, %v1673
        %v1675 = vpop.f32.mrb[0].mxu0
        %v1676 = vpop.f32.mrb[0].mxu0
        %v1677 = vpop.f32.mrb[0].mxu0
        %1678 = vdwg.mxu0
        %v1679 = vmax.f32 %v1674, 0.0
        %v1680 = vpack.c.bf16 %v1679, %v1679
        %v1681 = vld [vmem:[%s15] sm:$0xf]
        %v1682 = vld [vmem:[%s15 + $0x4] sm:$0xf]
        %v1683 = vld [vmem:[%s15 + $0x8] sm:$0xf]
        %v1684 = vld [vmem:[%s15 + $0xc] sm:$0xf]
        %v1685 = vld [vmem:[%s15 + $0x10] sm:$0xf]
        %v1686 = vld [vmem:[%s15 + $0x14] sm:$0xf]
        %v1687 = vld [vmem:[%s15 + $0x18] sm:$0xf]
        %v1688 = vld [vmem:[%s15 + $0x1c] sm:$0xf]
        %v1689 = vld [vmem:[%s16] sm:$0x1]
        %v1691 = vlaneseq
        %v1692 = vshrl.u32 %v1691, 7
        %v1693 = vsub.s32 0, %v1692
        %v1694 = vrot.slane %v1689, %v1693
        %v1704 = vunpack.c.l.b16 %v1681
        %v1705 = vunpack.c.l.b16 %v1682
        %v1706 = vunpack.c.l.b16 %v1683
        %v1707 = vunpack.c.l.b16 %v1684
        %v1708 = vunpack.c.l.b16 %v1685
        %v1709 = vunpack.c.l.b16 %v1686
        %v1710 = vunpack.c.l.b16 %v1687
        %v1711 = vunpack.c.l.b16 %v1688
        %v1712 = vpack.c.b16 %v1705, %v1704
        %v1713 = vpack.c.b16 %v1707, %v1706
        %v1714 = vpack.c.b16 %v1709, %v1708
        %v1715 = vpack.c.b16 %v1711, %v1710
        %vm1720 = vcmask 523264
        %v1722 = vsel %vm1720, %v1680, 0
        %1724 = vmatprep.subr.bf16.mxu0 0
        %1725 = vmatpush1.bf16.msra.mxu0 %v1712
        %1726 = vmatprep.subr.bf16.mxu0 0
        %1727 = vmatpush1.bf16.msra.mxu0 %v1713
        %1728 = vmatprep.subr.bf16.mxu0 0
        %1729 = vmatpush1.bf16.msra.mxu0 %v1714
        %1730 = vmatprep.subr.bf16.mxu0 0
        %1731 = vmatpush1.bf16.msra.mxu0 %v1715
        %1732 = vmatprep.subr.bf16.mxu0 0
        %1733 = vmatpush1.bf16.msra.mxu0 0
        %1734 = vmatprep.subr.bf16.mxu0 0
        %1735 = vmatpush1.bf16.msra.mxu0 0
        %1736 = vmatprep.subr.bf16.mxu0 0
        %1737 = vmatpush1.bf16.msra.mxu0 0
        %1738 = vmatprep.subr.bf16.mxu0 0
        %1739 = vmatpush1.bf16.msra.mxu0 0
        %1740 = vmatprep.subr.bf16.mxu0 0
        %1741 = vmatpush1.bf16.msra.mxu0 0
        %1742 = vmatprep.subr.bf16.mxu0 0
        %1743 = vmatpush1.bf16.msra.mxu0 0
        %1744 = vmatprep.subr.bf16.mxu0 0
        %1745 = vmatpush1.bf16.msra.mxu0 0
        %1746 = vmatprep.subr.bf16.mxu0 0
        %1747 = vmatpush1.bf16.msra.mxu0 0
        %1748 = vmatprep.subr.bf16.mxu0 0
        %1749 = vmatpush1.bf16.msra.mxu0 0
        %1750 = vmatprep.subr.bf16.mxu0 0
        %1751 = vmatpush1.bf16.msra.mxu0 0
        %1752 = vmatprep.subr.bf16.mxu0 0
        %1753 = vmatpush1.bf16.msra.mxu0 0
        %1754 = vmatprep.subr.bf16.mxu0 0
        %1755 = vmatpush1.bf16.msra.mxu0 0
        %1756 = vmatprep.mubr.bf16.mxu0 0
        %1757 = vmatmul.mubr.bf16.gmra.mrb[0].mxu0 %v1722
        %v1758 = vpop.f32.mrb[0].mxu0
        %v1759 = vadd.f32 %v1694, %v1758
        %v1760 = vpop.f32.mrb[0].mxu0
        %v1761 = vpop.f32.mrb[0].mxu0
        %v1762 = vpop.f32.mrb[0].mxu0
        %1763 = vdwg.mxu0
        %v1764 = vadd.f32 %v1611, %v1759
        %v1765 = vsel %vm999, %v1764, 0.0
        %1766 = vadd.xlane.f32.xlu0 %v1765
        %v1767 = vpop.xlane.xlu0 %1766
        %v1768 = vmul.f32 %v1767, %v1585
        %v1769 = vsub.f32 %v1764, %v1768
        %v1770 = vmul.f32 %v1769, %v1769
        %v1771 = vsel %vm999, %v1770, 0.0
        %1772 = vadd.xlane.f32.xlu0 %v1771
        %v1773 = vpop.xlane.xlu0 %1772
        %v1774 = vmul.f32 %v1773, %v1585
        %v1775 = vadd.f32 %v1774, 1e-05
        %v1776 = vrsqrt.pop %v1775
        %v1777 = vmul.f32 %v1769, %v1776
        %v1778 = vld [vmem:[%s17] sm:$0x1]
        %v1780 = vlaneseq
        %v1781 = vshrl.u32 %v1780, 7
        %v1782 = vsub.s32 0, %v1781
        %v1783 = vrot.slane %v1778, %v1782
        %v1785 = vmul.f32 %v1777, %v1783
        %v1786 = vld [vmem:[%s18] sm:$0x1]
        %v1788 = vlaneseq
        %v1789 = vshrl.u32 %v1788, 7
        %v1790 = vsub.s32 0, %v1789
        %v1791 = vrot.slane %v1786, %v1790
        %v1793 = vadd.f32 %v1785, %v1791
        %1794 = vst.msk [vmem:[%s779] sm:$0xff] %vm999, %v1793
        %s1795 = sand.u32 %s480, 1
        %s1796 = scalar_lea.sflag [#allocation8], %s1795
        %s1797 = sand.u32 %s480, 1
        %s1798 = smul.addr %s1797, 8
        %s1799 = scalar_lea.vmem [#allocation21], %s1798
        // Predicated region
        $region137: #{tpu_custom_call.1} parent=95 // pred_check
          %p1800 = pneg %p490
        $region138: #{tpu_custom_call.1} parent=95 // pred_check_branch
          %1802 = sbr.rel (%p1800) target = $region140
        $region139: #{tpu_custom_call.1} parent=95 // pred_region
          %s1804 = ssub.s32 128, 128
          %1805 = vsyncadd %s1796, %s1804
          %s1806 = smul.addr %s44, 2
          %s1807 = sadd.s32 %s45, %s1806
          %s1808 = smul.addr %s1807, 128
          %s1809 = scalar_lea.hbm %s19, %s1808
          %s1811 = sshll.u32 %s1799, 4
          %s1812 = int_to_ptr.vmem [resolvable:$true] %s1811
          %1814 = dma.vmem_to_hbm [thread:$0]  %s1812, 128, %s1809, %s1796
        $region140: #{tpu_custom_call.1} parent=95 // pred_fallthru
          _
      $region96: #{tpu_custom_call.1} parent=5 // pred_fallthru
        _
      %p1815 = scmp.le.s32.totalorder 2, %s35
      // Predicated region
      $region141: #{tpu_custom_call.1} parent=5 // pred_check
        %p1816 = pneg %p1815
      $region142: #{tpu_custom_call.1} parent=5 // pred_check_branch
        %1818 = sbr.rel (%p1816) target = $region144
      $region143: #{tpu_custom_call.1} parent=5 // pred_region
        %s1819 = ssub.s32 %s35, 2
        // Predicated region
        $region145: #{tpu_custom_call.1} parent=143 // pred_check
          %p1820 = pneg %p496
        $region146: #{tpu_custom_call.1} parent=143 // pred_check_branch
          %1822 = sbr.rel (%p1820) target = $region148
        $region147: #{tpu_custom_call.1} parent=143 // pred_region
          %s1823 = sand.u32 %s481, 1
          %s1824 = scalar_lea.sflag [#allocation8], %s1823
          %s1825 = sand.u32 %s481, 1
          %s1826 = smul.addr %s1825, 8
          %s1827 = scalar_lea.vmem [#allocation21], %s1826
          %1828 = dma.done %s1824, 128
        $region148: #{tpu_custom_call.1} parent=143 // pred_fallthru
          _
      $region144: #{tpu_custom_call.1} parent=5 // pred_fallthru
        _
    $region6: #{tpu_custom_call.1} parent=1 // loop_footer
      %s39 = sadd.s32 1, %s35
    $region7: #{tpu_custom_call.1} parent=1 // loop_footer_branch
      %34 = sbr.rel target = $region3
    $region8: #{tpu_custom_call.1} parent=1 // loop_exit
      _
    %1829 = vsyncpa [#allocation7], 1
    %s1830 = scalar_lea.sflag [#allocation7], 1
    %1831 = vsyncpa %s1830, 1
    %1832 = vsyncpa [#allocation10], 1
    %1833 = vsyncpa [#allocation13], 1
    %1834 = vsyncpa [#allocation16], 1
    %1835 = vsyncpa [#allocation19], 1
    %1836 = vsyncpa [#allocation8], 1
    %s1837 = scalar_lea.sflag [#allocation8], 1
    %1838 = vsyncpa %s1837, 1

</llo_original>
